<compile_context>
chip_gen: v6e
topology: v6e:2x2x1
jax: 0.10.0
libtpu: 0.0.40
codegen_flags: <defaults>
</compile_context>

<pallas_src>
import functools
import math

import jax
import jax.numpy as jnp
from jax.experimental import pallas as pl

# ---------------- mini synthetic BERT config ----------------
VOCAB = 100
TYPE_VOCAB = 2
HIDDEN = 32
HEADS = 4
HEAD_DIM = HIDDEN // HEADS
INTERMEDIATE = 64
LAYERS = 2
SEQ = 8
BATCH = 2
NUM_LABELS = 3
LN_EPS = 1e-12

# Embedding-table packing: rows [0:100) word, [100:102) token-type,
# [102:104) zero pad (keeps the position block 8-row aligned), [104:112) pos.
TYPE_OFF = VOCAB
POS_OFF = 104
EMB_ROWS = POS_OFF + SEQ


def _gelu(x):
    # TODO(synk): HF BERT default is exact erf-GELU; tanh approximation used here.
    c = math.sqrt(2.0 / math.pi)
    return 0.5 * x * (1.0 + jnp.tanh(c * (x + 0.044715 * x * x * x)))


# ---------------- single fused Pallas kernel ----------------
def _bert_model_kernel(ids_ref, mask_ref, emb_ref, misc_ref,
                       wqkv_ref, bqkv_ref, wo_ref, lvec_ref,
                       w1_ref, w2_ref, headw_ref, out_ref, *, batch, seq):
    f32 = jnp.float32
    bf16 = jnp.bfloat16
    bs = batch * seq

    def layernorm(x, g, b):
        mean = jnp.mean(x, axis=-1, keepdims=True)
        xc = x - mean
        var = jnp.mean(xc * xc, axis=-1, keepdims=True)
        return xc * jax.lax.rsqrt(var + LN_EPS) * g + b

    def dense(x_bf16, w_bf16, bias_f32):
        # bf16 MXU operands (weights pre-cast at init), f32 accumulation + bias.
        return jnp.dot(x_bf16, w_bf16, preferred_element_type=f32) + bias_f32

    misc = misc_ref[...]            # (4, H): emb_ln_g, emb_ln_b, pool_b, cls_b

    # ---- embeddings: exact one-hot "gathers" done on the (otherwise idle) MXU ----
    ids = ids_ref[...]                                       # (B*S, 2) int32
    col = jax.lax.broadcasted_iota(jnp.int32, (bs, POS_OFF), 1)
    wt_oh = jnp.where(jnp.logical_or(col == ids[:, 0:1],
                                     col == TYPE_OFF + ids[:, 1:2]), 1.0, 0.0)
    emb = jnp.dot(wt_oh, emb_ref[0:POS_OFF, :], preferred_element_type=f32)

    # Position one-hot = per-sequence identity (pure iota, no gather / no mod).
    eye = jnp.where(jax.lax.broadcasted_iota(jnp.int32, (seq, seq), 0) ==
                    jax.lax.broadcasted_iota(jnp.int32, (seq, seq), 1), 1.0, 0.0)
    pos_oh = jnp.broadcast_to(eye[None], (batch, seq, seq)).reshape(bs, seq)
    emb = emb + jnp.dot(pos_oh, emb_ref[POS_OFF:POS_OFF + seq, :],
                        preferred_element_type=f32)

    h = layernorm(emb, misc[0:1, :], misc[1:2, :])           # (B*S, H) f32

    # Additive attention mask (0 attended / -10000 padded), hoisted out of the loop.
    maskf = mask_ref[...].astype(f32)                        # (B, S)
    mask_add = (1.0 - maskf)[:, None, :] * (-10000.0)        # (B, 1, S)

    for l in range(LAYERS):                                  # static unroll
        hb = h.astype(bf16)                   # one cast reused by all head matmuls
        attn = None
        for hd in range(HEADS):                              # static unroll
            qi = (l * 3 + 0) * HEADS + hd
            ki = (l * 3 + 1) * HEADS + hd
            vi = (l * 3 + 2) * HEADS + hd
            # Pre-split per-head weights: whole-block leading-dim indexing only,
            # no 8-wide lane slicing of activations.  1/sqrt(Dh) folded into Wq.
            q = dense(hb, wqkv_ref[qi], bqkv_ref[qi]).reshape(batch, seq, HEAD_DIM)
            k = dense(hb, wqkv_ref[ki], bqkv_ref[ki]).reshape(batch, seq, HEAD_DIM)
            v = dense(hb, wqkv_ref[vi], bqkv_ref[vi]).reshape(batch, seq, HEAD_DIM)

            s = jnp.einsum("bqd,bkd->bqk", q.astype(bf16), k.astype(bf16),
                           preferred_element_type=f32)
            s = s + mask_add
            s = s - jnp.max(s, axis=-1, keepdims=True)
            p = jnp.exp(s)
            p = p * pl.reciprocal(jnp.sum(p, axis=-1, keepdims=True), approx=True)
            c = jnp.einsum("bqk,bkd->bqd", p.astype(bf16), v.astype(bf16),
                           preferred_element_type=f32)       # (B, S, Dh)

            # concat(ctx_heads) @ Wo  ==  sum_h ctx_h @ Wo_h   (no lane concat)
            o = jnp.dot(c.reshape(bs, HEAD_DIM).astype(bf16),
                        wo_ref[l * HEADS + hd], preferred_element_type=f32)
            attn = o if attn is None else attn + o

        lv = lvec_ref[l]                    # (7, 64): bo, ln1_g, ln1_b, b1, b2, ln2_g, ln2_b
        attn = attn + lv[0:1, 0:HIDDEN]
        h = layernorm(attn + h, lv[1:2, 0:HIDDEN], lv[2:3, 0:HIDDEN])

        ff = _gelu(dense(h.astype(bf16), w1_ref[l], lv[3:4, :]))
        ff = dense(ff.astype(bf16), w2_ref[l], lv[4:5, 0:HIDDEN])
        h = layernorm(ff + h, lv[5:6, 0:HIDDEN], lv[6:7, 0:HIDDEN])

    # BERT pooler: [CLS] token (first row of each sequence) -> dense + tanh.
    cls = h.reshape(batch, seq, HIDDEN)[:, 0, :]             # (B, H)
    pooled = jnp.tanh(dense(cls.astype(bf16), headw_ref[0], misc[2:3, :]))

    # nn.Dropout is identity at inference time (deterministic forward).
    logits = dense(pooled.astype(bf16), headw_ref[1], misc[3:4, :])   # (B, H), padded cols
    out_ref[...] = 1.0 / (1.0 + jnp.exp(-logits[:, 0:NUM_LABELS]))    # sigmoid


# ---------------- deterministic parameter init (packed / bf16 pre-cast) ----------------
def init_params(key):
    keys = iter(jax.random.split(key, 16))
    std = 0.02

    def norm(shape):
        return (std * jax.random.normal(next(keys), shape)).astype(jnp.float32)

    # Per-head Q/K/V weights, pre-split: leading dim = (layer, which{q,k,v}, head).
    # Attention scale 1/sqrt(Dh) folded into Wq (its bias is zero here).
    wqkv = norm((LAYERS, 3, HEADS, HIDDEN, HEAD_DIM))
    wqkv = wqkv.at[:, 0].multiply(1.0 / math.sqrt(HEAD_DIM))
    wqkv_h = wqkv.reshape(LAYERS * 3 * HEADS, HIDDEN, HEAD_DIM).astype(jnp.bfloat16)
    bqkv_h = jnp.zeros((LAYERS * 3 * HEADS, 1, HEAD_DIM), jnp.float32)

    wo_h = norm((LAYERS * HEADS, HEAD_DIM, HIDDEN)).astype(jnp.bfloat16)
    w1 = norm((LAYERS, HIDDEN, INTERMEDIATE)).astype(jnp.bfloat16)
    w2 = norm((LAYERS, INTERMEDIATE, HIDDEN)).astype(jnp.bfloat16)

    # Packed per-layer vectors (rows: bo, ln1_g, ln1_b, b1, b2, ln2_g, ln2_b).
    lvec = jnp.zeros((LAYERS, 7, INTERMEDIATE), jnp.float32)
    lvec = lvec.at[:, 1, :HIDDEN].set(1.0)   # ln1 gamma
    lvec = lvec.at[:, 5, :HIDDEN].set(1.0)   # ln2 gamma

    # Single packed embedding table (word | type | pad | position).
    emb_table = jnp.zeros((EMB_ROWS, HIDDEN), jnp.float32)
    emb_table = emb_table.at[:VOCAB].set(norm((VOCAB, HIDDEN)))
    emb_table = emb_table.at[TYPE_OFF:TYPE_OFF + TYPE_VOCAB].set(norm((TYPE_VOCAB, HIDDEN)))
    emb_table = emb_table.at[POS_OFF:POS_OFF + SEQ].set(norm((SEQ, HIDDEN)))

    # misc rows: emb_ln_g, emb_ln_b, pool_b, cls_b (padded to HIDDEN lanes).
    misc = jnp.zeros((4, HIDDEN), jnp.float32).at[0].set(1.0)

    # Pooler + classifier weights stacked (classifier zero-padded to HIDDEN cols).
    cls_w = jnp.zeros((HIDDEN, HIDDEN), jnp.float32)
    cls_w = cls_w.at[:, :NUM_LABELS].set(norm((HIDDEN, NUM_LABELS)))
    head_w = jnp.stack([norm((HIDDEN, HIDDEN)), cls_w]).astype(jnp.bfloat16)

    return {
        "emb_table": emb_table, "misc": misc,
        "wqkv_h": wqkv_h, "bqkv_h": bqkv_h, "wo_h": wo_h,
        "lvec": lvec, "w1": w1, "w2": w2, "head_w": head_w,
    }


# ---------------- forward (mirrors BaseModel.forward) ----------------
@jax.jit
def forward(params, input_ids, attention_mask, token_type_ids):
    B, S = input_ids.shape
    bs = B * S

    # Only remaining host-side glue: pack the two id tensors into one tiny int32
    # operand; gathers / mask arithmetic happen inside the kernel.
    ids_packed = jnp.stack([input_ids.reshape(-1).astype(jnp.int32),
                            token_type_ids.reshape(-1).astype(jnp.int32)], axis=-1)

    args = (ids_packed, attention_mask.astype(jnp.int32),
            params["emb_table"], params["misc"],
            params["wqkv_h"], params["bqkv_h"], params["wo_h"], params["lvec"],
            params["w1"], params["w2"], params["head_w"])

    per_layer_flops = (2 * bs * HIDDEN * 3 * HIDDEN
                       + 2 * 2 * B * HEADS * S * S * HEAD_DIM
                       + 2 * bs * HIDDEN * HIDDEN
                       + 2 * 2 * bs * HIDDEN * INTERMEDIATE)
    flops = (2 * bs * (POS_OFF + S) * HIDDEN + LAYERS * per_layer_flops
             + 2 * B * HIDDEN * HIDDEN + 2 * B * HIDDEN * NUM_LABELS)
    transcendentals = (LAYERS * (B * HEADS * S * S + bs * INTERMEDIATE)
                       + B * (HIDDEN + NUM_LABELS))
    bytes_accessed = (sum(int(a.size) * jnp.dtype(a.dtype).itemsize for a in args)
                      + B * NUM_LABELS * 4)

    kernel = functools.partial(_bert_model_kernel, batch=B, seq=S)
    # NOTE: gridless — the whole problem is one VMEM-resident tile.  For a
    # non-toy batch on v7x, shard over grid=(B_blocks,) with
    # dimension_semantics=("parallel",) so the second TensorCore is used.
    return pl.pallas_call(
        kernel,
        out_shape=jax.ShapeDtypeStruct((B, NUM_LABELS), jnp.float32),
        cost_estimate=pl.CostEstimate(flops=flops,
                                      transcendentals=transcendentals,
                                      bytes_accessed=bytes_accessed),
    )(*args)


if __name__ == "__main__":
    key = jax.random.PRNGKey(0)
    pkey, ikey = jax.random.split(key)
    params = init_params(pkey)

    input_ids = jax.random.randint(ikey, (BATCH, SEQ), 0, VOCAB, dtype=jnp.int32)
    attention_mask = jnp.ones((BATCH, SEQ), dtype=jnp.int32).at[1, SEQ - 2:].set(0)
    token_type_ids = jnp.zeros((BATCH, SEQ), dtype=jnp.int32)

    out = forward(params, input_ids, attention_mask, token_type_ids)
    out = jax.block_until_ready(out)
    assert out.shape == (BATCH, NUM_LABELS)
    assert bool(jnp.all((out >= 0.0) & (out <= 1.0)))
    print("KERNEL_OK")
</pallas_src>

<mosaic_0001>
module attributes {stable_mosaic.version = 11 : i64} {
  func.func @_bert_model_kernel(%arg0: memref<16x2xi32, #tpu.memory_space<vmem>>, %arg1: memref<2x8xi32, #tpu.memory_space<vmem>>, %arg2: memref<112x32xf32, #tpu.memory_space<vmem>>, %arg3: memref<4x32xf32, #tpu.memory_space<vmem>>, %arg4: memref<24x32x8xbf16, #tpu.memory_space<vmem>>, %arg5: memref<24x1x8xf32, #tpu.memory_space<vmem>>, %arg6: memref<8x8x32xbf16, #tpu.memory_space<vmem>>, %arg7: memref<2x7x64xf32, #tpu.memory_space<vmem>>, %arg8: memref<2x32x64xbf16, #tpu.memory_space<vmem>>, %arg9: memref<2x64x32xbf16, #tpu.memory_space<vmem>>, %arg10: memref<2x32x32xbf16, #tpu.memory_space<vmem>>, %arg11: memref<2x3xf32, #tpu.memory_space<vmem>>) attributes {dimension_semantics = [], scalar_prefetch = 0 : i64, scratch_operands = 0 : i64, tpu.core_type = #tpu.core_type<tc>} {
    %c0 = arith.constant 0 : index
    %c0_0 = arith.constant 0 : index
    %0 = vector.load %arg3[%c0, %c0_0] : memref<4x32xf32, #tpu.memory_space<vmem>>, vector<4x32xf32>
    %c0_1 = arith.constant 0 : index
    %c0_2 = arith.constant 0 : index
    %1 = vector.load %arg0[%c0_1, %c0_2] : memref<16x2xi32, #tpu.memory_space<vmem>>, vector<16x2xi32>
    %2 = tpu.iota {dimensions = array<i32: 1>} : vector<16x104xi32>
    %3 = vector.extract_strided_slice %1 {offsets = [0, 0], sizes = [16, 1], strides = [1, 1]} : vector<16x2xi32> to vector<16x1xi32>
    %4 = vector.broadcast %3 : vector<16x1xi32> to vector<16x104xi32>
    %5 = arith.cmpi eq, %2, %4 : vector<16x104xi32>
    %6 = vector.extract_strided_slice %1 {offsets = [0, 1], sizes = [16, 1], strides = [1, 1]} : vector<16x2xi32> to vector<16x1xi32>
    %c100_i32 = arith.constant 100 : i32
    %7 = vector.broadcast %c100_i32 : i32 to vector<16x1xi32>
    %8 = arith.addi %7, %6 : vector<16x1xi32>
    %9 = vector.broadcast %8 : vector<16x1xi32> to vector<16x104xi32>
    %10 = arith.cmpi eq, %2, %9 : vector<16x104xi32>
    %11 = arith.ori %5, %10 : vector<16x104xi1>
    %cst = arith.constant 1.000000e+00 : f32
    %cst_3 = arith.constant 0.000000e+00 : f32
    %12 = vector.broadcast %cst : f32 to vector<16x104xf32>
    %13 = vector.broadcast %cst_3 : f32 to vector<16x104xf32>
    %14 = arith.select %11, %12, %13 : vector<16x104xi1>, vector<16x104xf32>
    %c0_4 = arith.constant 0 : index
    %c0_5 = arith.constant 0 : index
    %15 = vector.load %arg2[%c0_4, %c0_5] : memref<112x32xf32, #tpu.memory_space<vmem>>, vector<104x32xf32>
    %cst_6 = arith.constant dense<0.000000e+00> : vector<16x32xf32>
    %16 = tpu.matmul %14, %15, %cst_6 {dimension_numbers = #tpu.dot_dimension_numbers<[1], [0], [0], [1], [0, 0, 1, 1], [], []>} : vector<16x104xf32>, vector<104x32xf32>, vector<16x32xf32> -> vector<16x32xf32>
    %17 = tpu.iota {dimensions = array<i32: 0>} : vector<8x8xi32>
    %18 = tpu.iota {dimensions = array<i32: 1>} : vector<8x8xi32>
    %19 = arith.cmpi eq, %17, %18 : vector<8x8xi32>
    %cst_7 = arith.constant 1.000000e+00 : f32
    %cst_8 = arith.constant 0.000000e+00 : f32
    %20 = vector.broadcast %cst_7 : f32 to vector<8x8xf32>
    %21 = vector.broadcast %cst_8 : f32 to vector<8x8xf32>
    %22 = arith.select %19, %20, %21 : vector<8x8xi1>, vector<8x8xf32>
    %23 = vector.shape_cast %22 : vector<8x8xf32> to vector<1x8x8xf32>
    %24 = vector.shape_cast %23 : vector<1x8x8xf32> to vector<1x8x8xf32>
    %25 = vector.broadcast %24 : vector<1x8x8xf32> to vector<2x8x8xf32>
    %26 = vector.shape_cast %25 : vector<2x8x8xf32> to vector<16x8xf32>
    %c104 = arith.constant 104 : index
    %c0_9 = arith.constant 0 : index
    %27 = vector.load %arg2[%c104, %c0_9] : memref<112x32xf32, #tpu.memory_space<vmem>>, vector<8x32xf32>
    %cst_10 = arith.constant dense<0.000000e+00> : vector<16x32xf32>
    %28 = tpu.matmul %26, %27, %cst_10 {dimension_numbers = #tpu.dot_dimension_numbers<[1], [0], [0], [1], [0, 0, 1, 1], [], []>} : vector<16x8xf32>, vector<8x32xf32>, vector<16x32xf32> -> vector<16x32xf32>
    %29 = arith.addf %16, %28 : vector<16x32xf32>
    %30 = vector.extract_strided_slice %0 {offsets = [0, 0], sizes = [1, 32], strides = [1, 1]} : vector<4x32xf32> to vector<1x32xf32>
    %31 = vector.extract_strided_slice %0 {offsets = [1, 0], sizes = [1, 32], strides = [1, 1]} : vector<4x32xf32> to vector<1x32xf32>
    %cst_11 = arith.constant dense<0.000000e+00> : vector<16xf32>
    %32 = vector.multi_reduction <add>, %29, %cst_11 [1] : vector<16x32xf32> to vector<16xf32>
    %33 = vector.shape_cast %32 : vector<16xf32> to vector<16x1xf32>
    %cst_12 = arith.constant 3.200000e+01 : f32
    %34 = vector.broadcast %cst_12 : f32 to vector<16x1xf32>
    %35 = arith.divf %33, %34 : vector<16x1xf32>
    %36 = vector.broadcast %35 : vector<16x1xf32> to vector<16x32xf32>
    %37 = arith.subf %29, %36 : vector<16x32xf32>
    %38 = arith.mulf %37, %37 : vector<16x32xf32>
    %cst_13 = arith.constant dense<0.000000e+00> : vector<16xf32>
    %39 = vector.multi_reduction <add>, %38, %cst_13 [1] : vector<16x32xf32> to vector<16xf32>
    %40 = vector.shape_cast %39 : vector<16xf32> to vector<16x1xf32>
    %cst_14 = arith.constant 3.200000e+01 : f32
    %41 = vector.broadcast %cst_14 : f32 to vector<16x1xf32>
    %42 = arith.divf %40, %41 : vector<16x1xf32>
    %cst_15 = arith.constant 9.99999996E-13 : f32
    %43 = vector.broadcast %cst_15 : f32 to vector<16x1xf32>
    %44 = arith.addf %42, %43 : vector<16x1xf32>
    %45 = math.rsqrt %44 : vector<16x1xf32>
    %46 = vector.broadcast %45 : vector<16x1xf32> to vector<16x32xf32>
    %47 = arith.mulf %37, %46 : vector<16x32xf32>
    %48 = vector.broadcast %30 : vector<1x32xf32> to vector<16x32xf32>
    %49 = arith.mulf %47, %48 : vector<16x32xf32>
    %50 = vector.broadcast %31 : vector<1x32xf32> to vector<16x32xf32>
    %51 = arith.addf %49, %50 : vector<16x32xf32>
    %c0_16 = arith.constant 0 : index
    %c0_17 = arith.constant 0 : index
    %52 = vector.load %arg1[%c0_16, %c0_17] : memref<2x8xi32, #tpu.memory_space<vmem>>, vector<2x8xi32>
    %53 = arith.sitofp %52 : vector<2x8xi32> to vector<2x8xf32>
    %cst_18 = arith.constant 1.000000e+00 : f32
    %54 = vector.broadcast %cst_18 : f32 to vector<2x8xf32>
    %55 = arith.subf %54, %53 : vector<2x8xf32>
    %56 = vector.shape_cast %55 : vector<2x8xf32> to vector<2x1x8xf32>
    %cst_19 = arith.constant -1.000000e+04 : f32
    %57 = vector.broadcast %cst_19 : f32 to vector<2x1x8xf32>
    %58 = arith.mulf %56, %57 : vector<2x1x8xf32>
    %59 = arith.truncf %51 : vector<16x32xf32> to vector<16x32xbf16>
    %c0_20 = arith.constant 0 : index
    %c0_21 = arith.constant 0 : index
    %c0_22 = arith.constant 0 : index
    %60 = vector.load %arg4[%c0_20, %c0_21, %c0_22] : memref<24x32x8xbf16, #tpu.memory_space<vmem>>, vector<1x32x8xbf16>
    %61 = vector.shape_cast %60 : vector<1x32x8xbf16> to vector<32x8xbf16>
    %c0_23 = arith.constant 0 : index
    %c0_24 = arith.constant 0 : index
    %c0_25 = arith.constant 0 : index
    %62 = vector.load %arg5[%c0_23, %c0_24, %c0_25] : memref<24x1x8xf32, #tpu.memory_space<vmem>>, vector<1x1x8xf32>
    %63 = vector.shape_cast %62 : vector<1x1x8xf32> to vector<1x8xf32>
    %cst_26 = arith.constant dense<0.000000e+00> : vector<16x8xf32>
    %64 = tpu.matmul %59, %61, %cst_26 {dimension_numbers = #tpu.dot_dimension_numbers<[1], [0], [0], [1], [0, 0, 1, 1], [], []>} : vector<16x32xbf16>, vector<32x8xbf16>, vector<16x8xf32> -> vector<16x8xf32>
    %65 = vector.broadcast %63 : vector<1x8xf32> to vector<16x8xf32>
    %66 = arith.addf %64, %65 : vector<16x8xf32>
    %67 = vector.shape_cast %66 : vector<16x8xf32> to vector<2x8x8xf32>
    %c4 = arith.constant 4 : index
    %c0_27 = arith.constant 0 : index
    %c0_28 = arith.constant 0 : index
    %68 = vector.load %arg4[%c4, %c0_27, %c0_28] : memref<24x32x8xbf16, #tpu.memory_space<vmem>>, vector<1x32x8xbf16>
    %69 = vector.shape_cast %68 : vector<1x32x8xbf16> to vector<32x8xbf16>
    %c4_29 = arith.constant 4 : index
    %c0_30 = arith.constant 0 : index
    %c0_31 = arith.constant 0 : index
    %70 = vector.load %arg5[%c4_29, %c0_30, %c0_31] : memref<24x1x8xf32, #tpu.memory_space<vmem>>, vector<1x1x8xf32>
    %71 = vector.shape_cast %70 : vector<1x1x8xf32> to vector<1x8xf32>
    %cst_32 = arith.constant dense<0.000000e+00> : vector<16x8xf32>
    %72 = tpu.matmul %59, %69, %cst_32 {dimension_numbers = #tpu.dot_dimension_numbers<[1], [0], [0], [1], [0, 0, 1, 1], [], []>} : vector<16x32xbf16>, vector<32x8xbf16>, vector<16x8xf32> -> vector<16x8xf32>
    %73 = vector.broadcast %71 : vector<1x8xf32> to vector<16x8xf32>
    %74 = arith.addf %72, %73 : vector<16x8xf32>
    %75 = vector.shape_cast %74 : vector<16x8xf32> to vector<2x8x8xf32>
    %c8 = arith.constant 8 : index
    %c0_33 = arith.constant 0 : index
    %c0_34 = arith.constant 0 : index
    %76 = vector.load %arg4[%c8, %c0_33, %c0_34] : memref<24x32x8xbf16, #tpu.memory_space<vmem>>, vector<1x32x8xbf16>
    %77 = vector.shape_cast %76 : vector<1x32x8xbf16> to vector<32x8xbf16>
    %c8_35 = arith.constant 8 : index
    %c0_36 = arith.constant 0 : index
    %c0_37 = arith.constant 0 : index
    %78 = vector.load %arg5[%c8_35, %c0_36, %c0_37] : memref<24x1x8xf32, #tpu.memory_space<vmem>>, vector<1x1x8xf32>
    %79 = vector.shape_cast %78 : vector<1x1x8xf32> to vector<1x8xf32>
    %cst_38 = arith.constant dense<0.000000e+00> : vector<16x8xf32>
    %80 = tpu.matmul %59, %77, %cst_38 {dimension_numbers = #tpu.dot_dimension_numbers<[1], [0], [0], [1], [0, 0, 1, 1], [], []>} : vector<16x32xbf16>, vector<32x8xbf16>, vector<16x8xf32> -> vector<16x8xf32>
    %81 = vector.broadcast %79 : vector<1x8xf32> to vector<16x8xf32>
    %82 = arith.addf %80, %81 : vector<16x8xf32>
    %83 = vector.shape_cast %82 : vector<16x8xf32> to vector<2x8x8xf32>
    %84 = arith.truncf %67 : vector<2x8x8xf32> to vector<2x8x8xbf16>
    %85 = arith.truncf %75 : vector<2x8x8xf32> to vector<2x8x8xbf16>
    "tpu.trace_start"() <{level = 10 : i32, message = "bqd,bkd->bqk"}> : () -> ()
    %cst_39 = arith.constant dense<0.000000e+00> : vector<2x8x8xf32>
    %86 = tpu.matmul %84, %85, %cst_39 {dimension_numbers = #tpu.dot_dimension_numbers<[2], [2], [1], [1], [0, 0, 0, 1, 1, 1], [0], [0]>} : vector<2x8x8xbf16>, vector<2x8x8xbf16>, vector<2x8x8xf32> -> vector<2x8x8xf32>
    "tpu.trace_stop"() : () -> ()
    %87 = vector.broadcast %58 : vector<2x1x8xf32> to vector<2x8x8xf32>
    %88 = arith.addf %86, %87 : vector<2x8x8xf32>
    %cst_40 = arith.constant dense<0xFF800000> : vector<2x8xf32>
    %89 = vector.multi_reduction <maximumf>, %88, %cst_40 [2] : vector<2x8x8xf32> to vector<2x8xf32>
    %90 = vector.shape_cast %89 : vector<2x8xf32> to vector<2x8x1xf32>
    %91 = vector.broadcast %90 : vector<2x8x1xf32> to vector<2x8x8xf32>
    %92 = arith.subf %88, %91 : vector<2x8x8xf32>
    %93 = math.exp %92 : vector<2x8x8xf32>
    %cst_41 = arith.constant dense<0.000000e+00> : vector<2x8xf32>
    %94 = vector.multi_reduction <add>, %93, %cst_41 [2] : vector<2x8x8xf32> to vector<2x8xf32>
    %95 = vector.shape_cast %94 : vector<2x8xf32> to vector<2x8x1xf32>
    %96 = tpu.reciprocal %95 {approx = true} : vector<2x8x1xf32> -> vector<2x8x1xf32>
    %97 = vector.broadcast %96 : vector<2x8x1xf32> to vector<2x8x8xf32>
    %98 = arith.mulf %93, %97 : vector<2x8x8xf32>
    %99 = arith.truncf %98 : vector<2x8x8xf32> to vector<2x8x8xbf16>
    %100 = arith.truncf %83 : vector<2x8x8xf32> to vector<2x8x8xbf16>
    "tpu.trace_start"() <{level = 10 : i32, message = "bqk,bkd->bqd"}> : () -> ()
    %cst_42 = arith.constant dense<0.000000e+00> : vector<2x8x8xf32>
    %101 = tpu.matmul %99, %100, %cst_42 {dimension_numbers = #tpu.dot_dimension_numbers<[2], [1], [1], [2], [0, 0, 0, 1, 1, 2], [0], [0]>} : vector<2x8x8xbf16>, vector<2x8x8xbf16>, vector<2x8x8xf32> -> vector<2x8x8xf32>
    "tpu.trace_stop"() : () -> ()
    %102 = vector.shape_cast %101 : vector<2x8x8xf32> to vector<16x8xf32>
    %103 = arith.truncf %102 : vector<16x8xf32> to vector<16x8xbf16>
    %c0_43 = arith.constant 0 : index
    %c0_44 = arith.constant 0 : index
    %c0_45 = arith.constant 0 : index
    %104 = vector.load %arg6[%c0_43, %c0_44, %c0_45] : memref<8x8x32xbf16, #tpu.memory_space<vmem>>, vector<1x8x32xbf16>
    %105 = vector.shape_cast %104 : vector<1x8x32xbf16> to vector<8x32xbf16>
    %cst_46 = arith.constant dense<0.000000e+00> : vector<16x32xf32>
    %106 = tpu.matmul %103, %105, %cst_46 {dimension_numbers = #tpu.dot_dimension_numbers<[1], [0], [0], [1], [0, 0, 1, 1], [], []>} : vector<16x8xbf16>, vector<8x32xbf16>, vector<16x32xf32> -> vector<16x32xf32>
    %c1 = arith.constant 1 : index
    %c0_47 = arith.constant 0 : index
    %c0_48 = arith.constant 0 : index
    %107 = vector.load %arg4[%c1, %c0_47, %c0_48] : memref<24x32x8xbf16, #tpu.memory_space<vmem>>, vector<1x32x8xbf16>
    %108 = vector.shape_cast %107 : vector<1x32x8xbf16> to vector<32x8xbf16>
    %c1_49 = arith.constant 1 : index
    %c0_50 = arith.constant 0 : index
    %c0_51 = arith.constant 0 : index
    %109 = vector.load %arg5[%c1_49, %c0_50, %c0_51] : memref<24x1x8xf32, #tpu.memory_space<vmem>>, vector<1x1x8xf32>
    %110 = vector.shape_cast %109 : vector<1x1x8xf32> to vector<1x8xf32>
    %cst_52 = arith.constant dense<0.000000e+00> : vector<16x8xf32>
    %111 = tpu.matmul %59, %108, %cst_52 {dimension_numbers = #tpu.dot_dimension_numbers<[1], [0], [0], [1], [0, 0, 1, 1], [], []>} : vector<16x32xbf16>, vector<32x8xbf16>, vector<16x8xf32> -> vector<16x8xf32>
    %112 = vector.broadcast %110 : vector<1x8xf32> to vector<16x8xf32>
    %113 = arith.addf %111, %112 : vector<16x8xf32>
    %114 = vector.shape_cast %113 : vector<16x8xf32> to vector<2x8x8xf32>
    %c5 = arith.constant 5 : index
    %c0_53 = arith.constant 0 : index
    %c0_54 = arith.constant 0 : index
    %115 = vector.load %arg4[%c5, %c0_53, %c0_54] : memref<24x32x8xbf16, #tpu.memory_space<vmem>>, vector<1x32x8xbf16>
    %116 = vector.shape_cast %115 : vector<1x32x8xbf16> to vector<32x8xbf16>
    %c5_55 = arith.constant 5 : index
    %c0_56 = arith.constant 0 : index
    %c0_57 = arith.constant 0 : index
    %117 = vector.load %arg5[%c5_55, %c0_56, %c0_57] : memref<24x1x8xf32, #tpu.memory_space<vmem>>, vector<1x1x8xf32>
    %118 = vector.shape_cast %117 : vector<1x1x8xf32> to vector<1x8xf32>
    %cst_58 = arith.constant dense<0.000000e+00> : vector<16x8xf32>
    %119 = tpu.matmul %59, %116, %cst_58 {dimension_numbers = #tpu.dot_dimension_numbers<[1], [0], [0], [1], [0, 0, 1, 1], [], []>} : vector<16x32xbf16>, vector<32x8xbf16>, vector<16x8xf32> -> vector<16x8xf32>
    %120 = vector.broadcast %118 : vector<1x8xf32> to vector<16x8xf32>
    %121 = arith.addf %119, %120 : vector<16x8xf32>
    %122 = vector.shape_cast %121 : vector<16x8xf32> to vector<2x8x8xf32>
    %c9 = arith.constant 9 : index
    %c0_59 = arith.constant 0 : index
    %c0_60 = arith.constant 0 : index
    %123 = vector.load %arg4[%c9, %c0_59, %c0_60] : memref<24x32x8xbf16, #tpu.memory_space<vmem>>, vector<1x32x8xbf16>
    %124 = vector.shape_cast %123 : vector<1x32x8xbf16> to vector<32x8xbf16>
    %c9_61 = arith.constant 9 : index
    %c0_62 = arith.constant 0 : index
    %c0_63 = arith.constant 0 : index
    %125 = vector.load %arg5[%c9_61, %c0_62, %c0_63] : memref<24x1x8xf32, #tpu.memory_space<vmem>>, vector<1x1x8xf32>
    %126 = vector.shape_cast %125 : vector<1x1x8xf32> to vector<1x8xf32>
    %cst_64 = arith.constant dense<0.000000e+00> : vector<16x8xf32>
    %127 = tpu.matmul %59, %124, %cst_64 {dimension_numbers = #tpu.dot_dimension_numbers<[1], [0], [0], [1], [0, 0, 1, 1], [], []>} : vector<16x32xbf16>, vector<32x8xbf16>, vector<16x8xf32> -> vector<16x8xf32>
    %128 = vector.broadcast %126 : vector<1x8xf32> to vector<16x8xf32>
    %129 = arith.addf %127, %128 : vector<16x8xf32>
    %130 = vector.shape_cast %129 : vector<16x8xf32> to vector<2x8x8xf32>
    %131 = arith.truncf %114 : vector<2x8x8xf32> to vector<2x8x8xbf16>
    %132 = arith.truncf %122 : vector<2x8x8xf32> to vector<2x8x8xbf16>
    "tpu.trace_start"() <{level = 10 : i32, message = "bqd,bkd->bqk"}> : () -> ()
    %cst_65 = arith.constant dense<0.000000e+00> : vector<2x8x8xf32>
    %133 = tpu.matmul %131, %132, %cst_65 {dimension_numbers = #tpu.dot_dimension_numbers<[2], [2], [1], [1], [0, 0, 0, 1, 1, 1], [0], [0]>} : vector<2x8x8xbf16>, vector<2x8x8xbf16>, vector<2x8x8xf32> -> vector<2x8x8xf32>
    "tpu.trace_stop"() : () -> ()
    %134 = vector.broadcast %58 : vector<2x1x8xf32> to vector<2x8x8xf32>
    %135 = arith.addf %133, %134 : vector<2x8x8xf32>
    %cst_66 = arith.constant dense<0xFF800000> : vector<2x8xf32>
    %136 = vector.multi_reduction <maximumf>, %135, %cst_66 [2] : vector<2x8x8xf32> to vector<2x8xf32>
    %137 = vector.shape_cast %136 : vector<2x8xf32> to vector<2x8x1xf32>
    %138 = vector.broadcast %137 : vector<2x8x1xf32> to vector<2x8x8xf32>
    %139 = arith.subf %135, %138 : vector<2x8x8xf32>
    %140 = math.exp %139 : vector<2x8x8xf32>
    %cst_67 = arith.constant dense<0.000000e+00> : vector<2x8xf32>
    %141 = vector.multi_reduction <add>, %140, %cst_67 [2] : vector<2x8x8xf32> to vector<2x8xf32>
    %142 = vector.shape_cast %141 : vector<2x8xf32> to vector<2x8x1xf32>
    %143 = tpu.reciprocal %142 {approx = true} : vector<2x8x1xf32> -> vector<2x8x1xf32>
    %144 = vector.broadcast %143 : vector<2x8x1xf32> to vector<2x8x8xf32>
    %145 = arith.mulf %140, %144 : vector<2x8x8xf32>
    %146 = arith.truncf %145 : vector<2x8x8xf32> to vector<2x8x8xbf16>
    %147 = arith.truncf %130 : vector<2x8x8xf32> to vector<2x8x8xbf16>
    "tpu.trace_start"() <{level = 10 : i32, message = "bqk,bkd->bqd"}> : () -> ()
    %cst_68 = arith.constant dense<0.000000e+00> : vector<2x8x8xf32>
    %148 = tpu.matmul %146, %147, %cst_68 {dimension_numbers = #tpu.dot_dimension_numbers<[2], [1], [1], [2], [0, 0, 0, 1, 1, 2], [0], [0]>} : vector<2x8x8xbf16>, vector<2x8x8xbf16>, vector<2x8x8xf32> -> vector<2x8x8xf32>
    "tpu.trace_stop"() : () -> ()
    %149 = vector.shape_cast %148 : vector<2x8x8xf32> to vector<16x8xf32>
    %150 = arith.truncf %149 : vector<16x8xf32> to vector<16x8xbf16>
    %c1_69 = arith.constant 1 : index
    %c0_70 = arith.constant 0 : index
    %c0_71 = arith.constant 0 : index
    %151 = vector.load %arg6[%c1_69, %c0_70, %c0_71] : memref<8x8x32xbf16, #tpu.memory_space<vmem>>, vector<1x8x32xbf16>
    %152 = vector.shape_cast %151 : vector<1x8x32xbf16> to vector<8x32xbf16>
    %cst_72 = arith.constant dense<0.000000e+00> : vector<16x32xf32>
    %153 = tpu.matmul %150, %152, %cst_72 {dimension_numbers = #tpu.dot_dimension_numbers<[1], [0], [0], [1], [0, 0, 1, 1], [], []>} : vector<16x8xbf16>, vector<8x32xbf16>, vector<16x32xf32> -> vector<16x32xf32>
    %154 = arith.addf %106, %153 : vector<16x32xf32>
    %c2 = arith.constant 2 : index
    %c0_73 = arith.constant 0 : index
    %c0_74 = arith.constant 0 : index
    %155 = vector.load %arg4[%c2, %c0_73, %c0_74] : memref<24x32x8xbf16, #tpu.memory_space<vmem>>, vector<1x32x8xbf16>
    %156 = vector.shape_cast %155 : vector<1x32x8xbf16> to vector<32x8xbf16>
    %c2_75 = arith.constant 2 : index
    %c0_76 = arith.constant 0 : index
    %c0_77 = arith.constant 0 : index
    %157 = vector.load %arg5[%c2_75, %c0_76, %c0_77] : memref<24x1x8xf32, #tpu.memory_space<vmem>>, vector<1x1x8xf32>
    %158 = vector.shape_cast %157 : vector<1x1x8xf32> to vector<1x8xf32>
    %cst_78 = arith.constant dense<0.000000e+00> : vector<16x8xf32>
    %159 = tpu.matmul %59, %156, %cst_78 {dimension_numbers = #tpu.dot_dimension_numbers<[1], [0], [0], [1], [0, 0, 1, 1], [], []>} : vector<16x32xbf16>, vector<32x8xbf16>, vector<16x8xf32> -> vector<16x8xf32>
    %160 = vector.broadcast %158 : vector<1x8xf32> to vector<16x8xf32>
    %161 = arith.addf %159, %160 : vector<16x8xf32>
    %162 = vector.shape_cast %161 : vector<16x8xf32> to vector<2x8x8xf32>
    %c6 = arith.constant 6 : index
    %c0_79 = arith.constant 0 : index
    %c0_80 = arith.constant 0 : index
    %163 = vector.load %arg4[%c6, %c0_79, %c0_80] : memref<24x32x8xbf16, #tpu.memory_space<vmem>>, vector<1x32x8xbf16>
    %164 = vector.shape_cast %163 : vector<1x32x8xbf16> to vector<32x8xbf16>
    %c6_81 = arith.constant 6 : index
    %c0_82 = arith.constant 0 : index
    %c0_83 = arith.constant 0 : index
    %165 = vector.load %arg5[%c6_81, %c0_82, %c0_83] : memref<24x1x8xf32, #tpu.memory_space<vmem>>, vector<1x1x8xf32>
    %166 = vector.shape_cast %165 : vector<1x1x8xf32> to vector<1x8xf32>
    %cst_84 = arith.constant dense<0.000000e+00> : vector<16x8xf32>
    %167 = tpu.matmul %59, %164, %cst_84 {dimension_numbers = #tpu.dot_dimension_numbers<[1], [0], [0], [1], [0, 0, 1, 1], [], []>} : vector<16x32xbf16>, vector<32x8xbf16>, vector<16x8xf32> -> vector<16x8xf32>
    %168 = vector.broadcast %166 : vector<1x8xf32> to vector<16x8xf32>
    %169 = arith.addf %167, %168 : vector<16x8xf32>
    %170 = vector.shape_cast %169 : vector<16x8xf32> to vector<2x8x8xf32>
    %c10 = arith.constant 10 : index
    %c0_85 = arith.constant 0 : index
    %c0_86 = arith.constant 0 : index
    %171 = vector.load %arg4[%c10, %c0_85, %c0_86] : memref<24x32x8xbf16, #tpu.memory_space<vmem>>, vector<1x32x8xbf16>
    %172 = vector.shape_cast %171 : vector<1x32x8xbf16> to vector<32x8xbf16>
    %c10_87 = arith.constant 10 : index
    %c0_88 = arith.constant 0 : index
    %c0_89 = arith.constant 0 : index
    %173 = vector.load %arg5[%c10_87, %c0_88, %c0_89] : memref<24x1x8xf32, #tpu.memory_space<vmem>>, vector<1x1x8xf32>
    %174 = vector.shape_cast %173 : vector<1x1x8xf32> to vector<1x8xf32>
    %cst_90 = arith.constant dense<0.000000e+00> : vector<16x8xf32>
    %175 = tpu.matmul %59, %172, %cst_90 {dimension_numbers = #tpu.dot_dimension_numbers<[1], [0], [0], [1], [0, 0, 1, 1], [], []>} : vector<16x32xbf16>, vector<32x8xbf16>, vector<16x8xf32> -> vector<16x8xf32>
    %176 = vector.broadcast %174 : vector<1x8xf32> to vector<16x8xf32>
    %177 = arith.addf %175, %176 : vector<16x8xf32>
    %178 = vector.shape_cast %177 : vector<16x8xf32> to vector<2x8x8xf32>
    %179 = arith.truncf %162 : vector<2x8x8xf32> to vector<2x8x8xbf16>
    %180 = arith.truncf %170 : vector<2x8x8xf32> to vector<2x8x8xbf16>
    "tpu.trace_start"() <{level = 10 : i32, message = "bqd,bkd->bqk"}> : () -> ()
    %cst_91 = arith.constant dense<0.000000e+00> : vector<2x8x8xf32>
    %181 = tpu.matmul %179, %180, %cst_91 {dimension_numbers = #tpu.dot_dimension_numbers<[2], [2], [1], [1], [0, 0, 0, 1, 1, 1], [0], [0]>} : vector<2x8x8xbf16>, vector<2x8x8xbf16>, vector<2x8x8xf32> -> vector<2x8x8xf32>
    "tpu.trace_stop"() : () -> ()
    %182 = vector.broadcast %58 : vector<2x1x8xf32> to vector<2x8x8xf32>
    %183 = arith.addf %181, %182 : vector<2x8x8xf32>
    %cst_92 = arith.constant dense<0xFF800000> : vector<2x8xf32>
    %184 = vector.multi_reduction <maximumf>, %183, %cst_92 [2] : vector<2x8x8xf32> to vector<2x8xf32>
    %185 = vector.shape_cast %184 : vector<2x8xf32> to vector<2x8x1xf32>
    %186 = vector.broadcast %185 : vector<2x8x1xf32> to vector<2x8x8xf32>
    %187 = arith.subf %183, %186 : vector<2x8x8xf32>
    %188 = math.exp %187 : vector<2x8x8xf32>
    %cst_93 = arith.constant dense<0.000000e+00> : vector<2x8xf32>
    %189 = vector.multi_reduction <add>, %188, %cst_93 [2] : vector<2x8x8xf32> to vector<2x8xf32>
    %190 = vector.shape_cast %189 : vector<2x8xf32> to vector<2x8x1xf32>
    %191 = tpu.reciprocal %190 {approx = true} : vector<2x8x1xf32> -> vector<2x8x1xf32>
    %192 = vector.broadcast %191 : vector<2x8x1xf32> to vector<2x8x8xf32>
    %193 = arith.mulf %188, %192 : vector<2x8x8xf32>
    %194 = arith.truncf %193 : vector<2x8x8xf32> to vector<2x8x8xbf16>
    %195 = arith.truncf %178 : vector<2x8x8xf32> to vector<2x8x8xbf16>
    "tpu.trace_start"() <{level = 10 : i32, message = "bqk,bkd->bqd"}> : () -> ()
    %cst_94 = arith.constant dense<0.000000e+00> : vector<2x8x8xf32>
    %196 = tpu.matmul %194, %195, %cst_94 {dimension_numbers = #tpu.dot_dimension_numbers<[2], [1], [1], [2], [0, 0, 0, 1, 1, 2], [0], [0]>} : vector<2x8x8xbf16>, vector<2x8x8xbf16>, vector<2x8x8xf32> -> vector<2x8x8xf32>
    "tpu.trace_stop"() : () -> ()
    %197 = vector.shape_cast %196 : vector<2x8x8xf32> to vector<16x8xf32>
    %198 = arith.truncf %197 : vector<16x8xf32> to vector<16x8xbf16>
    %c2_95 = arith.constant 2 : index
    %c0_96 = arith.constant 0 : index
    %c0_97 = arith.constant 0 : index
    %199 = vector.load %arg6[%c2_95, %c0_96, %c0_97] : memref<8x8x32xbf16, #tpu.memory_space<vmem>>, vector<1x8x32xbf16>
    %200 = vector.shape_cast %199 : vector<1x8x32xbf16> to vector<8x32xbf16>
    %cst_98 = arith.constant dense<0.000000e+00> : vector<16x32xf32>
    %201 = tpu.matmul %198, %200, %cst_98 {dimension_numbers = #tpu.dot_dimension_numbers<[1], [0], [0], [1], [0, 0, 1, 1], [], []>} : vector<16x8xbf16>, vector<8x32xbf16>, vector<16x32xf32> -> vector<16x32xf32>
    %202 = arith.addf %154, %201 : vector<16x32xf32>
    %c3 = arith.constant 3 : index
    %c0_99 = arith.constant 0 : index
    %c0_100 = arith.constant 0 : index
    %203 = vector.load %arg4[%c3, %c0_99, %c0_100] : memref<24x32x8xbf16, #tpu.memory_space<vmem>>, vector<1x32x8xbf16>
    %204 = vector.shape_cast %203 : vector<1x32x8xbf16> to vector<32x8xbf16>
    %c3_101 = arith.constant 3 : index
    %c0_102 = arith.constant 0 : index
    %c0_103 = arith.constant 0 : index
    %205 = vector.load %arg5[%c3_101, %c0_102, %c0_103] : memref<24x1x8xf32, #tpu.memory_space<vmem>>, vector<1x1x8xf32>
    %206 = vector.shape_cast %205 : vector<1x1x8xf32> to vector<1x8xf32>
    %cst_104 = arith.constant dense<0.000000e+00> : vector<16x8xf32>
    %207 = tpu.matmul %59, %204, %cst_104 {dimension_numbers = #tpu.dot_dimension_numbers<[1], [0], [0], [1], [0, 0, 1, 1], [], []>} : vector<16x32xbf16>, vector<32x8xbf16>, vector<16x8xf32> -> vector<16x8xf32>
    %208 = vector.broadcast %206 : vector<1x8xf32> to vector<16x8xf32>
    %209 = arith.addf %207, %208 : vector<16x8xf32>
    %210 = vector.shape_cast %209 : vector<16x8xf32> to vector<2x8x8xf32>
    %c7 = arith.constant 7 : index
    %c0_105 = arith.constant 0 : index
    %c0_106 = arith.constant 0 : index
    %211 = vector.load %arg4[%c7, %c0_105, %c0_106] : memref<24x32x8xbf16, #tpu.memory_space<vmem>>, vector<1x32x8xbf16>
    %212 = vector.shape_cast %211 : vector<1x32x8xbf16> to vector<32x8xbf16>
    %c7_107 = arith.constant 7 : index
    %c0_108 = arith.constant 0 : index
    %c0_109 = arith.constant 0 : index
    %213 = vector.load %arg5[%c7_107, %c0_108, %c0_109] : memref<24x1x8xf32, #tpu.memory_space<vmem>>, vector<1x1x8xf32>
    %214 = vector.shape_cast %213 : vector<1x1x8xf32> to vector<1x8xf32>
    %cst_110 = arith.constant dense<0.000000e+00> : vector<16x8xf32>
    %215 = tpu.matmul %59, %212, %cst_110 {dimension_numbers = #tpu.dot_dimension_numbers<[1], [0], [0], [1], [0, 0, 1, 1], [], []>} : vector<16x32xbf16>, vector<32x8xbf16>, vector<16x8xf32> -> vector<16x8xf32>
    %216 = vector.broadcast %214 : vector<1x8xf32> to vector<16x8xf32>
    %217 = arith.addf %215, %216 : vector<16x8xf32>
    %218 = vector.shape_cast %217 : vector<16x8xf32> to vector<2x8x8xf32>
    %c11 = arith.constant 11 : index
    %c0_111 = arith.constant 0 : index
    %c0_112 = arith.constant 0 : index
    %219 = vector.load %arg4[%c11, %c0_111, %c0_112] : memref<24x32x8xbf16, #tpu.memory_space<vmem>>, vector<1x32x8xbf16>
    %220 = vector.shape_cast %219 : vector<1x32x8xbf16> to vector<32x8xbf16>
    %c11_113 = arith.constant 11 : index
    %c0_114 = arith.constant 0 : index
    %c0_115 = arith.constant 0 : index
    %221 = vector.load %arg5[%c11_113, %c0_114, %c0_115] : memref<24x1x8xf32, #tpu.memory_space<vmem>>, vector<1x1x8xf32>
    %222 = vector.shape_cast %221 : vector<1x1x8xf32> to vector<1x8xf32>
    %cst_116 = arith.constant dense<0.000000e+00> : vector<16x8xf32>
    %223 = tpu.matmul %59, %220, %cst_116 {dimension_numbers = #tpu.dot_dimension_numbers<[1], [0], [0], [1], [0, 0, 1, 1], [], []>} : vector<16x32xbf16>, vector<32x8xbf16>, vector<16x8xf32> -> vector<16x8xf32>
    %224 = vector.broadcast %222 : vector<1x8xf32> to vector<16x8xf32>
    %225 = arith.addf %223, %224 : vector<16x8xf32>
    %226 = vector.shape_cast %225 : vector<16x8xf32> to vector<2x8x8xf32>
    %227 = arith.truncf %210 : vector<2x8x8xf32> to vector<2x8x8xbf16>
    %228 = arith.truncf %218 : vector<2x8x8xf32> to vector<2x8x8xbf16>
    "tpu.trace_start"() <{level = 10 : i32, message = "bqd,bkd->bqk"}> : () -> ()
    %cst_117 = arith.constant dense<0.000000e+00> : vector<2x8x8xf32>
    %229 = tpu.matmul %227, %228, %cst_117 {dimension_numbers = #tpu.dot_dimension_numbers<[2], [2], [1], [1], [0, 0, 0, 1, 1, 1], [0], [0]>} : vector<2x8x8xbf16>, vector<2x8x8xbf16>, vector<2x8x8xf32> -> vector<2x8x8xf32>
    "tpu.trace_stop"() : () -> ()
    %230 = vector.broadcast %58 : vector<2x1x8xf32> to vector<2x8x8xf32>
    %231 = arith.addf %229, %230 : vector<2x8x8xf32>
    %cst_118 = arith.constant dense<0xFF800000> : vector<2x8xf32>
    %232 = vector.multi_reduction <maximumf>, %231, %cst_118 [2] : vector<2x8x8xf32> to vector<2x8xf32>
    %233 = vector.shape_cast %232 : vector<2x8xf32> to vector<2x8x1xf32>
    %234 = vector.broadcast %233 : vector<2x8x1xf32> to vector<2x8x8xf32>
    %235 = arith.subf %231, %234 : vector<2x8x8xf32>
    %236 = math.exp %235 : vector<2x8x8xf32>
    %cst_119 = arith.constant dense<0.000000e+00> : vector<2x8xf32>
    %237 = vector.multi_reduction <add>, %236, %cst_119 [2] : vector<2x8x8xf32> to vector<2x8xf32>
    %238 = vector.shape_cast %237 : vector<2x8xf32> to vector<2x8x1xf32>
    %239 = tpu.reciprocal %238 {approx = true} : vector<2x8x1xf32> -> vector<2x8x1xf32>
    %240 = vector.broadcast %239 : vector<2x8x1xf32> to vector<2x8x8xf32>
    %241 = arith.mulf %236, %240 : vector<2x8x8xf32>
    %242 = arith.truncf %241 : vector<2x8x8xf32> to vector<2x8x8xbf16>
    %243 = arith.truncf %226 : vector<2x8x8xf32> to vector<2x8x8xbf16>
    "tpu.trace_start"() <{level = 10 : i32, message = "bqk,bkd->bqd"}> : () -> ()
    %cst_120 = arith.constant dense<0.000000e+00> : vector<2x8x8xf32>
    %244 = tpu.matmul %242, %243, %cst_120 {dimension_numbers = #tpu.dot_dimension_numbers<[2], [1], [1], [2], [0, 0, 0, 1, 1, 2], [0], [0]>} : vector<2x8x8xbf16>, vector<2x8x8xbf16>, vector<2x8x8xf32> -> vector<2x8x8xf32>
    "tpu.trace_stop"() : () -> ()
    %245 = vector.shape_cast %244 : vector<2x8x8xf32> to vector<16x8xf32>
    %246 = arith.truncf %245 : vector<16x8xf32> to vector<16x8xbf16>
    %c3_121 = arith.constant 3 : index
    %c0_122 = arith.constant 0 : index
    %c0_123 = arith.constant 0 : index
    %247 = vector.load %arg6[%c3_121, %c0_122, %c0_123] : memref<8x8x32xbf16, #tpu.memory_space<vmem>>, vector<1x8x32xbf16>
    %248 = vector.shape_cast %247 : vector<1x8x32xbf16> to vector<8x32xbf16>
    %cst_124 = arith.constant dense<0.000000e+00> : vector<16x32xf32>
    %249 = tpu.matmul %246, %248, %cst_124 {dimension_numbers = #tpu.dot_dimension_numbers<[1], [0], [0], [1], [0, 0, 1, 1], [], []>} : vector<16x8xbf16>, vector<8x32xbf16>, vector<16x32xf32> -> vector<16x32xf32>
    %250 = arith.addf %202, %249 : vector<16x32xf32>
    %c0_125 = arith.constant 0 : index
    %c0_126 = arith.constant 0 : index
    %c0_127 = arith.constant 0 : index
    %251 = vector.load %arg7[%c0_125, %c0_126, %c0_127] : memref<2x7x64xf32, #tpu.memory_space<vmem>>, vector<1x7x64xf32>
    %252 = vector.shape_cast %251 : vector<1x7x64xf32> to vector<7x64xf32>
    %253 = vector.extract_strided_slice %252 {offsets = [0, 0], sizes = [1, 32], strides = [1, 1]} : vector<7x64xf32> to vector<1x32xf32>
    %254 = vector.broadcast %253 : vector<1x32xf32> to vector<16x32xf32>
    %255 = arith.addf %250, %254 : vector<16x32xf32>
    %256 = arith.addf %255, %51 : vector<16x32xf32>
    %257 = vector.extract_strided_slice %252 {offsets = [1, 0], sizes = [1, 32], strides = [1, 1]} : vector<7x64xf32> to vector<1x32xf32>
    %258 = vector.extract_strided_slice %252 {offsets = [2, 0], sizes = [1, 32], strides = [1, 1]} : vector<7x64xf32> to vector<1x32xf32>
    %cst_128 = arith.constant dense<0.000000e+00> : vector<16xf32>
    %259 = vector.multi_reduction <add>, %256, %cst_128 [1] : vector<16x32xf32> to vector<16xf32>
    %260 = vector.shape_cast %259 : vector<16xf32> to vector<16x1xf32>
    %cst_129 = arith.constant 3.200000e+01 : f32
    %261 = vector.broadcast %cst_129 : f32 to vector<16x1xf32>
    %262 = arith.divf %260, %261 : vector<16x1xf32>
    %263 = vector.broadcast %262 : vector<16x1xf32> to vector<16x32xf32>
    %264 = arith.subf %256, %263 : vector<16x32xf32>
    %265 = arith.mulf %264, %264 : vector<16x32xf32>
    %cst_130 = arith.constant dense<0.000000e+00> : vector<16xf32>
    %266 = vector.multi_reduction <add>, %265, %cst_130 [1] : vector<16x32xf32> to vector<16xf32>
    %267 = vector.shape_cast %266 : vector<16xf32> to vector<16x1xf32>
    %cst_131 = arith.constant 3.200000e+01 : f32
    %268 = vector.broadcast %cst_131 : f32 to vector<16x1xf32>
    %269 = arith.divf %267, %268 : vector<16x1xf32>
    %cst_132 = arith.constant 9.99999996E-13 : f32
    %270 = vector.broadcast %cst_132 : f32 to vector<16x1xf32>
    %271 = arith.addf %269, %270 : vector<16x1xf32>
    %272 = math.rsqrt %271 : vector<16x1xf32>
    %273 = vector.broadcast %272 : vector<16x1xf32> to vector<16x32xf32>
    %274 = arith.mulf %264, %273 : vector<16x32xf32>
    %275 = vector.broadcast %257 : vector<1x32xf32> to vector<16x32xf32>
    %276 = arith.mulf %274, %275 : vector<16x32xf32>
    %277 = vector.broadcast %258 : vector<1x32xf32> to vector<16x32xf32>
    %278 = arith.addf %276, %277 : vector<16x32xf32>
    %279 = arith.truncf %278 : vector<16x32xf32> to vector<16x32xbf16>
    %c0_133 = arith.constant 0 : index
    %c0_134 = arith.constant 0 : index
    %c0_135 = arith.constant 0 : index
    %280 = vector.load %arg8[%c0_133, %c0_134, %c0_135] : memref<2x32x64xbf16, #tpu.memory_space<vmem>>, vector<1x32x64xbf16>
    %281 = vector.shape_cast %280 : vector<1x32x64xbf16> to vector<32x64xbf16>
    %282 = vector.extract_strided_slice %252 {offsets = [3, 0], sizes = [1, 64], strides = [1, 1]} : vector<7x64xf32> to vector<1x64xf32>
    %cst_136 = arith.constant dense<0.000000e+00> : vector<16x64xf32>
    %283 = tpu.matmul %279, %281, %cst_136 {dimension_numbers = #tpu.dot_dimension_numbers<[1], [0], [0], [1], [0, 0, 1, 1], [], []>} : vector<16x32xbf16>, vector<32x64xbf16>, vector<16x64xf32> -> vector<16x64xf32>
    %284 = vector.broadcast %282 : vector<1x64xf32> to vector<16x64xf32>
    %285 = arith.addf %283, %284 : vector<16x64xf32>
    %cst_137 = arith.constant 5.000000e-01 : f32
    %286 = vector.broadcast %cst_137 : f32 to vector<16x64xf32>
    %287 = arith.mulf %286, %285 : vector<16x64xf32>
    %cst_138 = arith.constant 4.471500e-02 : f32
    %288 = vector.broadcast %cst_138 : f32 to vector<16x64xf32>
    %289 = arith.mulf %288, %285 : vector<16x64xf32>
    %290 = arith.mulf %289, %285 : vector<16x64xf32>
    %291 = arith.mulf %290, %285 : vector<16x64xf32>
    %292 = arith.addf %285, %291 : vector<16x64xf32>
    %cst_139 = arith.constant 0.797884583 : f32
    %293 = vector.broadcast %cst_139 : f32 to vector<16x64xf32>
    %294 = arith.mulf %293, %292 : vector<16x64xf32>
    %295 = math.tanh %294 : vector<16x64xf32>
    %cst_140 = arith.constant 1.000000e+00 : f32
    %296 = vector.broadcast %cst_140 : f32 to vector<16x64xf32>
    %297 = arith.addf %296, %295 : vector<16x64xf32>
    %298 = arith.mulf %287, %297 : vector<16x64xf32>
    %299 = arith.truncf %298 : vector<16x64xf32> to vector<16x64xbf16>
    %c0_141 = arith.constant 0 : index
    %c0_142 = arith.constant 0 : index
    %c0_143 = arith.constant 0 : index
    %300 = vector.load %arg9[%c0_141, %c0_142, %c0_143] : memref<2x64x32xbf16, #tpu.memory_space<vmem>>, vector<1x64x32xbf16>
    %301 = vector.shape_cast %300 : vector<1x64x32xbf16> to vector<64x32xbf16>
    %302 = vector.extract_strided_slice %252 {offsets = [4, 0], sizes = [1, 32], strides = [1, 1]} : vector<7x64xf32> to vector<1x32xf32>
    %cst_144 = arith.constant dense<0.000000e+00> : vector<16x32xf32>
    %303 = tpu.matmul %299, %301, %cst_144 {dimension_numbers = #tpu.dot_dimension_numbers<[1], [0], [0], [1], [0, 0, 1, 1], [], []>} : vector<16x64xbf16>, vector<64x32xbf16>, vector<16x32xf32> -> vector<16x32xf32>
    %304 = vector.broadcast %302 : vector<1x32xf32> to vector<16x32xf32>
    %305 = arith.addf %303, %304 : vector<16x32xf32>
    %306 = arith.addf %305, %278 : vector<16x32xf32>
    %307 = vector.extract_strided_slice %252 {offsets = [5, 0], sizes = [1, 32], strides = [1, 1]} : vector<7x64xf32> to vector<1x32xf32>
    %308 = vector.extract_strided_slice %252 {offsets = [6, 0], sizes = [1, 32], strides = [1, 1]} : vector<7x64xf32> to vector<1x32xf32>
    %cst_145 = arith.constant dense<0.000000e+00> : vector<16xf32>
    %309 = vector.multi_reduction <add>, %306, %cst_145 [1] : vector<16x32xf32> to vector<16xf32>
    %310 = vector.shape_cast %309 : vector<16xf32> to vector<16x1xf32>
    %cst_146 = arith.constant 3.200000e+01 : f32
    %311 = vector.broadcast %cst_146 : f32 to vector<16x1xf32>
    %312 = arith.divf %310, %311 : vector<16x1xf32>
    %313 = vector.broadcast %312 : vector<16x1xf32> to vector<16x32xf32>
    %314 = arith.subf %306, %313 : vector<16x32xf32>
    %315 = arith.mulf %314, %314 : vector<16x32xf32>
    %cst_147 = arith.constant dense<0.000000e+00> : vector<16xf32>
    %316 = vector.multi_reduction <add>, %315, %cst_147 [1] : vector<16x32xf32> to vector<16xf32>
    %317 = vector.shape_cast %316 : vector<16xf32> to vector<16x1xf32>
    %cst_148 = arith.constant 3.200000e+01 : f32
    %318 = vector.broadcast %cst_148 : f32 to vector<16x1xf32>
    %319 = arith.divf %317, %318 : vector<16x1xf32>
    %cst_149 = arith.constant 9.99999996E-13 : f32
    %320 = vector.broadcast %cst_149 : f32 to vector<16x1xf32>
    %321 = arith.addf %319, %320 : vector<16x1xf32>
    %322 = math.rsqrt %321 : vector<16x1xf32>
    %323 = vector.broadcast %322 : vector<16x1xf32> to vector<16x32xf32>
    %324 = arith.mulf %314, %323 : vector<16x32xf32>
    %325 = vector.broadcast %307 : vector<1x32xf32> to vector<16x32xf32>
    %326 = arith.mulf %324, %325 : vector<16x32xf32>
    %327 = vector.broadcast %308 : vector<1x32xf32> to vector<16x32xf32>
    %328 = arith.addf %326, %327 : vector<16x32xf32>
    %329 = arith.truncf %328 : vector<16x32xf32> to vector<16x32xbf16>
    %c12 = arith.constant 12 : index
    %c0_150 = arith.constant 0 : index
    %c0_151 = arith.constant 0 : index
    %330 = vector.load %arg4[%c12, %c0_150, %c0_151] : memref<24x32x8xbf16, #tpu.memory_space<vmem>>, vector<1x32x8xbf16>
    %331 = vector.shape_cast %330 : vector<1x32x8xbf16> to vector<32x8xbf16>
    %c12_152 = arith.constant 12 : index
    %c0_153 = arith.constant 0 : index
    %c0_154 = arith.constant 0 : index
    %332 = vector.load %arg5[%c12_152, %c0_153, %c0_154] : memref<24x1x8xf32, #tpu.memory_space<vmem>>, vector<1x1x8xf32>
    %333 = vector.shape_cast %332 : vector<1x1x8xf32> to vector<1x8xf32>
    %cst_155 = arith.constant dense<0.000000e+00> : vector<16x8xf32>
    %334 = tpu.matmul %329, %331, %cst_155 {dimension_numbers = #tpu.dot_dimension_numbers<[1], [0], [0], [1], [0, 0, 1, 1], [], []>} : vector<16x32xbf16>, vector<32x8xbf16>, vector<16x8xf32> -> vector<16x8xf32>
    %335 = vector.broadcast %333 : vector<1x8xf32> to vector<16x8xf32>
    %336 = arith.addf %334, %335 : vector<16x8xf32>
    %337 = vector.shape_cast %336 : vector<16x8xf32> to vector<2x8x8xf32>
    %c16 = arith.constant 16 : index
    %c0_156 = arith.constant 0 : index
    %c0_157 = arith.constant 0 : index
    %338 = vector.load %arg4[%c16, %c0_156, %c0_157] : memref<24x32x8xbf16, #tpu.memory_space<vmem>>, vector<1x32x8xbf16>
    %339 = vector.shape_cast %338 : vector<1x32x8xbf16> to vector<32x8xbf16>
    %c16_158 = arith.constant 16 : index
    %c0_159 = arith.constant 0 : index
    %c0_160 = arith.constant 0 : index
    %340 = vector.load %arg5[%c16_158, %c0_159, %c0_160] : memref<24x1x8xf32, #tpu.memory_space<vmem>>, vector<1x1x8xf32>
    %341 = vector.shape_cast %340 : vector<1x1x8xf32> to vector<1x8xf32>
    %cst_161 = arith.constant dense<0.000000e+00> : vector<16x8xf32>
    %342 = tpu.matmul %329, %339, %cst_161 {dimension_numbers = #tpu.dot_dimension_numbers<[1], [0], [0], [1], [0, 0, 1, 1], [], []>} : vector<16x32xbf16>, vector<32x8xbf16>, vector<16x8xf32> -> vector<16x8xf32>
    %343 = vector.broadcast %341 : vector<1x8xf32> to vector<16x8xf32>
    %344 = arith.addf %342, %343 : vector<16x8xf32>
    %345 = vector.shape_cast %344 : vector<16x8xf32> to vector<2x8x8xf32>
    %c20 = arith.constant 20 : index
    %c0_162 = arith.constant 0 : index
    %c0_163 = arith.constant 0 : index
    %346 = vector.load %arg4[%c20, %c0_162, %c0_163] : memref<24x32x8xbf16, #tpu.memory_space<vmem>>, vector<1x32x8xbf16>
    %347 = vector.shape_cast %346 : vector<1x32x8xbf16> to vector<32x8xbf16>
    %c20_164 = arith.constant 20 : index
    %c0_165 = arith.constant 0 : index
    %c0_166 = arith.constant 0 : index
    %348 = vector.load %arg5[%c20_164, %c0_165, %c0_166] : memref<24x1x8xf32, #tpu.memory_space<vmem>>, vector<1x1x8xf32>
    %349 = vector.shape_cast %348 : vector<1x1x8xf32> to vector<1x8xf32>
    %cst_167 = arith.constant dense<0.000000e+00> : vector<16x8xf32>
    %350 = tpu.matmul %329, %347, %cst_167 {dimension_numbers = #tpu.dot_dimension_numbers<[1], [0], [0], [1], [0, 0, 1, 1], [], []>} : vector<16x32xbf16>, vector<32x8xbf16>, vector<16x8xf32> -> vector<16x8xf32>
    %351 = vector.broadcast %349 : vector<1x8xf32> to vector<16x8xf32>
    %352 = arith.addf %350, %351 : vector<16x8xf32>
    %353 = vector.shape_cast %352 : vector<16x8xf32> to vector<2x8x8xf32>
    %354 = arith.truncf %337 : vector<2x8x8xf32> to vector<2x8x8xbf16>
    %355 = arith.truncf %345 : vector<2x8x8xf32> to vector<2x8x8xbf16>
    "tpu.trace_start"() <{level = 10 : i32, message = "bqd,bkd->bqk"}> : () -> ()
    %cst_168 = arith.constant dense<0.000000e+00> : vector<2x8x8xf32>
    %356 = tpu.matmul %354, %355, %cst_168 {dimension_numbers = #tpu.dot_dimension_numbers<[2], [2], [1], [1], [0, 0, 0, 1, 1, 1], [0], [0]>} : vector<2x8x8xbf16>, vector<2x8x8xbf16>, vector<2x8x8xf32> -> vector<2x8x8xf32>
    "tpu.trace_stop"() : () -> ()
    %357 = vector.broadcast %58 : vector<2x1x8xf32> to vector<2x8x8xf32>
    %358 = arith.addf %356, %357 : vector<2x8x8xf32>
    %cst_169 = arith.constant dense<0xFF800000> : vector<2x8xf32>
    %359 = vector.multi_reduction <maximumf>, %358, %cst_169 [2] : vector<2x8x8xf32> to vector<2x8xf32>
    %360 = vector.shape_cast %359 : vector<2x8xf32> to vector<2x8x1xf32>
    %361 = vector.broadcast %360 : vector<2x8x1xf32> to vector<2x8x8xf32>
    %362 = arith.subf %358, %361 : vector<2x8x8xf32>
    %363 = math.exp %362 : vector<2x8x8xf32>
    %cst_170 = arith.constant dense<0.000000e+00> : vector<2x8xf32>
    %364 = vector.multi_reduction <add>, %363, %cst_170 [2] : vector<2x8x8xf32> to vector<2x8xf32>
    %365 = vector.shape_cast %364 : vector<2x8xf32> to vector<2x8x1xf32>
    %366 = tpu.reciprocal %365 {approx = true} : vector<2x8x1xf32> -> vector<2x8x1xf32>
    %367 = vector.broadcast %366 : vector<2x8x1xf32> to vector<2x8x8xf32>
    %368 = arith.mulf %363, %367 : vector<2x8x8xf32>
    %369 = arith.truncf %368 : vector<2x8x8xf32> to vector<2x8x8xbf16>
    %370 = arith.truncf %353 : vector<2x8x8xf32> to vector<2x8x8xbf16>
    "tpu.trace_start"() <{level = 10 : i32, message = "bqk,bkd->bqd"}> : () -> ()
    %cst_171 = arith.constant dense<0.000000e+00> : vector<2x8x8xf32>
    %371 = tpu.matmul %369, %370, %cst_171 {dimension_numbers = #tpu.dot_dimension_numbers<[2], [1], [1], [2], [0, 0, 0, 1, 1, 2], [0], [0]>} : vector<2x8x8xbf16>, vector<2x8x8xbf16>, vector<2x8x8xf32> -> vector<2x8x8xf32>
    "tpu.trace_stop"() : () -> ()
    %372 = vector.shape_cast %371 : vector<2x8x8xf32> to vector<16x8xf32>
    %373 = arith.truncf %372 : vector<16x8xf32> to vector<16x8xbf16>
    %c4_172 = arith.constant 4 : index
    %c0_173 = arith.constant 0 : index
    %c0_174 = arith.constant 0 : index
    %374 = vector.load %arg6[%c4_172, %c0_173, %c0_174] : memref<8x8x32xbf16, #tpu.memory_space<vmem>>, vector<1x8x32xbf16>
    %375 = vector.shape_cast %374 : vector<1x8x32xbf16> to vector<8x32xbf16>
    %cst_175 = arith.constant dense<0.000000e+00> : vector<16x32xf32>
    %376 = tpu.matmul %373, %375, %cst_175 {dimension_numbers = #tpu.dot_dimension_numbers<[1], [0], [0], [1], [0, 0, 1, 1], [], []>} : vector<16x8xbf16>, vector<8x32xbf16>, vector<16x32xf32> -> vector<16x32xf32>
    %c13 = arith.constant 13 : index
    %c0_176 = arith.constant 0 : index
    %c0_177 = arith.constant 0 : index
    %377 = vector.load %arg4[%c13, %c0_176, %c0_177] : memref<24x32x8xbf16, #tpu.memory_space<vmem>>, vector<1x32x8xbf16>
    %378 = vector.shape_cast %377 : vector<1x32x8xbf16> to vector<32x8xbf16>
    %c13_178 = arith.constant 13 : index
    %c0_179 = arith.constant 0 : index
    %c0_180 = arith.constant 0 : index
    %379 = vector.load %arg5[%c13_178, %c0_179, %c0_180] : memref<24x1x8xf32, #tpu.memory_space<vmem>>, vector<1x1x8xf32>
    %380 = vector.shape_cast %379 : vector<1x1x8xf32> to vector<1x8xf32>
    %cst_181 = arith.constant dense<0.000000e+00> : vector<16x8xf32>
    %381 = tpu.matmul %329, %378, %cst_181 {dimension_numbers = #tpu.dot_dimension_numbers<[1], [0], [0], [1], [0, 0, 1, 1], [], []>} : vector<16x32xbf16>, vector<32x8xbf16>, vector<16x8xf32> -> vector<16x8xf32>
    %382 = vector.broadcast %380 : vector<1x8xf32> to vector<16x8xf32>
    %383 = arith.addf %381, %382 : vector<16x8xf32>
    %384 = vector.shape_cast %383 : vector<16x8xf32> to vector<2x8x8xf32>
    %c17 = arith.constant 17 : index
    %c0_182 = arith.constant 0 : index
    %c0_183 = arith.constant 0 : index
    %385 = vector.load %arg4[%c17, %c0_182, %c0_183] : memref<24x32x8xbf16, #tpu.memory_space<vmem>>, vector<1x32x8xbf16>
    %386 = vector.shape_cast %385 : vector<1x32x8xbf16> to vector<32x8xbf16>
    %c17_184 = arith.constant 17 : index
    %c0_185 = arith.constant 0 : index
    %c0_186 = arith.constant 0 : index
    %387 = vector.load %arg5[%c17_184, %c0_185, %c0_186] : memref<24x1x8xf32, #tpu.memory_space<vmem>>, vector<1x1x8xf32>
    %388 = vector.shape_cast %387 : vector<1x1x8xf32> to vector<1x8xf32>
    %cst_187 = arith.constant dense<0.000000e+00> : vector<16x8xf32>
    %389 = tpu.matmul %329, %386, %cst_187 {dimension_numbers = #tpu.dot_dimension_numbers<[1], [0], [0], [1], [0, 0, 1, 1], [], []>} : vector<16x32xbf16>, vector<32x8xbf16>, vector<16x8xf32> -> vector<16x8xf32>
    %390 = vector.broadcast %388 : vector<1x8xf32> to vector<16x8xf32>
    %391 = arith.addf %389, %390 : vector<16x8xf32>
    %392 = vector.shape_cast %391 : vector<16x8xf32> to vector<2x8x8xf32>
    %c21 = arith.constant 21 : index
    %c0_188 = arith.constant 0 : index
    %c0_189 = arith.constant 0 : index
    %393 = vector.load %arg4[%c21, %c0_188, %c0_189] : memref<24x32x8xbf16, #tpu.memory_space<vmem>>, vector<1x32x8xbf16>
    %394 = vector.shape_cast %393 : vector<1x32x8xbf16> to vector<32x8xbf16>
    %c21_190 = arith.constant 21 : index
    %c0_191 = arith.constant 0 : index
    %c0_192 = arith.constant 0 : index
    %395 = vector.load %arg5[%c21_190, %c0_191, %c0_192] : memref<24x1x8xf32, #tpu.memory_space<vmem>>, vector<1x1x8xf32>
    %396 = vector.shape_cast %395 : vector<1x1x8xf32> to vector<1x8xf32>
    %cst_193 = arith.constant dense<0.000000e+00> : vector<16x8xf32>
    %397 = tpu.matmul %329, %394, %cst_193 {dimension_numbers = #tpu.dot_dimension_numbers<[1], [0], [0], [1], [0, 0, 1, 1], [], []>} : vector<16x32xbf16>, vector<32x8xbf16>, vector<16x8xf32> -> vector<16x8xf32>
    %398 = vector.broadcast %396 : vector<1x8xf32> to vector<16x8xf32>
    %399 = arith.addf %397, %398 : vector<16x8xf32>
    %400 = vector.shape_cast %399 : vector<16x8xf32> to vector<2x8x8xf32>
    %401 = arith.truncf %384 : vector<2x8x8xf32> to vector<2x8x8xbf16>
    %402 = arith.truncf %392 : vector<2x8x8xf32> to vector<2x8x8xbf16>
    "tpu.trace_start"() <{level = 10 : i32, message = "bqd,bkd->bqk"}> : () -> ()
    %cst_194 = arith.constant dense<0.000000e+00> : vector<2x8x8xf32>
    %403 = tpu.matmul %401, %402, %cst_194 {dimension_numbers = #tpu.dot_dimension_numbers<[2], [2], [1], [1], [0, 0, 0, 1, 1, 1], [0], [0]>} : vector<2x8x8xbf16>, vector<2x8x8xbf16>, vector<2x8x8xf32> -> vector<2x8x8xf32>
    "tpu.trace_stop"() : () -> ()
    %404 = vector.broadcast %58 : vector<2x1x8xf32> to vector<2x8x8xf32>
    %405 = arith.addf %403, %404 : vector<2x8x8xf32>
    %cst_195 = arith.constant dense<0xFF800000> : vector<2x8xf32>
    %406 = vector.multi_reduction <maximumf>, %405, %cst_195 [2] : vector<2x8x8xf32> to vector<2x8xf32>
    %407 = vector.shape_cast %406 : vector<2x8xf32> to vector<2x8x1xf32>
    %408 = vector.broadcast %407 : vector<2x8x1xf32> to vector<2x8x8xf32>
    %409 = arith.subf %405, %408 : vector<2x8x8xf32>
    %410 = math.exp %409 : vector<2x8x8xf32>
    %cst_196 = arith.constant dense<0.000000e+00> : vector<2x8xf32>
    %411 = vector.multi_reduction <add>, %410, %cst_196 [2] : vector<2x8x8xf32> to vector<2x8xf32>
    %412 = vector.shape_cast %411 : vector<2x8xf32> to vector<2x8x1xf32>
    %413 = tpu.reciprocal %412 {approx = true} : vector<2x8x1xf32> -> vector<2x8x1xf32>
    %414 = vector.broadcast %413 : vector<2x8x1xf32> to vector<2x8x8xf32>
    %415 = arith.mulf %410, %414 : vector<2x8x8xf32>
    %416 = arith.truncf %415 : vector<2x8x8xf32> to vector<2x8x8xbf16>
    %417 = arith.truncf %400 : vector<2x8x8xf32> to vector<2x8x8xbf16>
    "tpu.trace_start"() <{level = 10 : i32, message = "bqk,bkd->bqd"}> : () -> ()
    %cst_197 = arith.constant dense<0.000000e+00> : vector<2x8x8xf32>
    %418 = tpu.matmul %416, %417, %cst_197 {dimension_numbers = #tpu.dot_dimension_numbers<[2], [1], [1], [2], [0, 0, 0, 1, 1, 2], [0], [0]>} : vector<2x8x8xbf16>, vector<2x8x8xbf16>, vector<2x8x8xf32> -> vector<2x8x8xf32>
    "tpu.trace_stop"() : () -> ()
    %419 = vector.shape_cast %418 : vector<2x8x8xf32> to vector<16x8xf32>
    %420 = arith.truncf %419 : vector<16x8xf32> to vector<16x8xbf16>
    %c5_198 = arith.constant 5 : index
    %c0_199 = arith.constant 0 : index
    %c0_200 = arith.constant 0 : index
    %421 = vector.load %arg6[%c5_198, %c0_199, %c0_200] : memref<8x8x32xbf16, #tpu.memory_space<vmem>>, vector<1x8x32xbf16>
    %422 = vector.shape_cast %421 : vector<1x8x32xbf16> to vector<8x32xbf16>
    %cst_201 = arith.constant dense<0.000000e+00> : vector<16x32xf32>
    %423 = tpu.matmul %420, %422, %cst_201 {dimension_numbers = #tpu.dot_dimension_numbers<[1], [0], [0], [1], [0, 0, 1, 1], [], []>} : vector<16x8xbf16>, vector<8x32xbf16>, vector<16x32xf32> -> vector<16x32xf32>
    %424 = arith.addf %376, %423 : vector<16x32xf32>
    %c14 = arith.constant 14 : index
    %c0_202 = arith.constant 0 : index
    %c0_203 = arith.constant 0 : index
    %425 = vector.load %arg4[%c14, %c0_202, %c0_203] : memref<24x32x8xbf16, #tpu.memory_space<vmem>>, vector<1x32x8xbf16>
    %426 = vector.shape_cast %425 : vector<1x32x8xbf16> to vector<32x8xbf16>
    %c14_204 = arith.constant 14 : index
    %c0_205 = arith.constant 0 : index
    %c0_206 = arith.constant 0 : index
    %427 = vector.load %arg5[%c14_204, %c0_205, %c0_206] : memref<24x1x8xf32, #tpu.memory_space<vmem>>, vector<1x1x8xf32>
    %428 = vector.shape_cast %427 : vector<1x1x8xf32> to vector<1x8xf32>
    %cst_207 = arith.constant dense<0.000000e+00> : vector<16x8xf32>
    %429 = tpu.matmul %329, %426, %cst_207 {dimension_numbers = #tpu.dot_dimension_numbers<[1], [0], [0], [1], [0, 0, 1, 1], [], []>} : vector<16x32xbf16>, vector<32x8xbf16>, vector<16x8xf32> -> vector<16x8xf32>
    %430 = vector.broadcast %428 : vector<1x8xf32> to vector<16x8xf32>
    %431 = arith.addf %429, %430 : vector<16x8xf32>
    %432 = vector.shape_cast %431 : vector<16x8xf32> to vector<2x8x8xf32>
    %c18 = arith.constant 18 : index
    %c0_208 = arith.constant 0 : index
    %c0_209 = arith.constant 0 : index
    %433 = vector.load %arg4[%c18, %c0_208, %c0_209] : memref<24x32x8xbf16, #tpu.memory_space<vmem>>, vector<1x32x8xbf16>
    %434 = vector.shape_cast %433 : vector<1x32x8xbf16> to vector<32x8xbf16>
    %c18_210 = arith.constant 18 : index
    %c0_211 = arith.constant 0 : index
    %c0_212 = arith.constant 0 : index
    %435 = vector.load %arg5[%c18_210, %c0_211, %c0_212] : memref<24x1x8xf32, #tpu.memory_space<vmem>>, vector<1x1x8xf32>
    %436 = vector.shape_cast %435 : vector<1x1x8xf32> to vector<1x8xf32>
    %cst_213 = arith.constant dense<0.000000e+00> : vector<16x8xf32>
    %437 = tpu.matmul %329, %434, %cst_213 {dimension_numbers = #tpu.dot_dimension_numbers<[1], [0], [0], [1], [0, 0, 1, 1], [], []>} : vector<16x32xbf16>, vector<32x8xbf16>, vector<16x8xf32> -> vector<16x8xf32>
    %438 = vector.broadcast %436 : vector<1x8xf32> to vector<16x8xf32>
    %439 = arith.addf %437, %438 : vector<16x8xf32>
    %440 = vector.shape_cast %439 : vector<16x8xf32> to vector<2x8x8xf32>
    %c22 = arith.constant 22 : index
    %c0_214 = arith.constant 0 : index
    %c0_215 = arith.constant 0 : index
    %441 = vector.load %arg4[%c22, %c0_214, %c0_215] : memref<24x32x8xbf16, #tpu.memory_space<vmem>>, vector<1x32x8xbf16>
    %442 = vector.shape_cast %441 : vector<1x32x8xbf16> to vector<32x8xbf16>
    %c22_216 = arith.constant 22 : index
    %c0_217 = arith.constant 0 : index
    %c0_218 = arith.constant 0 : index
    %443 = vector.load %arg5[%c22_216, %c0_217, %c0_218] : memref<24x1x8xf32, #tpu.memory_space<vmem>>, vector<1x1x8xf32>
    %444 = vector.shape_cast %443 : vector<1x1x8xf32> to vector<1x8xf32>
    %cst_219 = arith.constant dense<0.000000e+00> : vector<16x8xf32>
    %445 = tpu.matmul %329, %442, %cst_219 {dimension_numbers = #tpu.dot_dimension_numbers<[1], [0], [0], [1], [0, 0, 1, 1], [], []>} : vector<16x32xbf16>, vector<32x8xbf16>, vector<16x8xf32> -> vector<16x8xf32>
    %446 = vector.broadcast %444 : vector<1x8xf32> to vector<16x8xf32>
    %447 = arith.addf %445, %446 : vector<16x8xf32>
    %448 = vector.shape_cast %447 : vector<16x8xf32> to vector<2x8x8xf32>
    %449 = arith.truncf %432 : vector<2x8x8xf32> to vector<2x8x8xbf16>
    %450 = arith.truncf %440 : vector<2x8x8xf32> to vector<2x8x8xbf16>
    "tpu.trace_start"() <{level = 10 : i32, message = "bqd,bkd->bqk"}> : () -> ()
    %cst_220 = arith.constant dense<0.000000e+00> : vector<2x8x8xf32>
    %451 = tpu.matmul %449, %450, %cst_220 {dimension_numbers = #tpu.dot_dimension_numbers<[2], [2], [1], [1], [0, 0, 0, 1, 1, 1], [0], [0]>} : vector<2x8x8xbf16>, vector<2x8x8xbf16>, vector<2x8x8xf32> -> vector<2x8x8xf32>
    "tpu.trace_stop"() : () -> ()
    %452 = vector.broadcast %58 : vector<2x1x8xf32> to vector<2x8x8xf32>
    %453 = arith.addf %451, %452 : vector<2x8x8xf32>
    %cst_221 = arith.constant dense<0xFF800000> : vector<2x8xf32>
    %454 = vector.multi_reduction <maximumf>, %453, %cst_221 [2] : vector<2x8x8xf32> to vector<2x8xf32>
    %455 = vector.shape_cast %454 : vector<2x8xf32> to vector<2x8x1xf32>
    %456 = vector.broadcast %455 : vector<2x8x1xf32> to vector<2x8x8xf32>
    %457 = arith.subf %453, %456 : vector<2x8x8xf32>
    %458 = math.exp %457 : vector<2x8x8xf32>
    %cst_222 = arith.constant dense<0.000000e+00> : vector<2x8xf32>
    %459 = vector.multi_reduction <add>, %458, %cst_222 [2] : vector<2x8x8xf32> to vector<2x8xf32>
    %460 = vector.shape_cast %459 : vector<2x8xf32> to vector<2x8x1xf32>
    %461 = tpu.reciprocal %460 {approx = true} : vector<2x8x1xf32> -> vector<2x8x1xf32>
    %462 = vector.broadcast %461 : vector<2x8x1xf32> to vector<2x8x8xf32>
    %463 = arith.mulf %458, %462 : vector<2x8x8xf32>
    %464 = arith.truncf %463 : vector<2x8x8xf32> to vector<2x8x8xbf16>
    %465 = arith.truncf %448 : vector<2x8x8xf32> to vector<2x8x8xbf16>
    "tpu.trace_start"() <{level = 10 : i32, message = "bqk,bkd->bqd"}> : () -> ()
    %cst_223 = arith.constant dense<0.000000e+00> : vector<2x8x8xf32>
    %466 = tpu.matmul %464, %465, %cst_223 {dimension_numbers = #tpu.dot_dimension_numbers<[2], [1], [1], [2], [0, 0, 0, 1, 1, 2], [0], [0]>} : vector<2x8x8xbf16>, vector<2x8x8xbf16>, vector<2x8x8xf32> -> vector<2x8x8xf32>
    "tpu.trace_stop"() : () -> ()
    %467 = vector.shape_cast %466 : vector<2x8x8xf32> to vector<16x8xf32>
    %468 = arith.truncf %467 : vector<16x8xf32> to vector<16x8xbf16>
    %c6_224 = arith.constant 6 : index
    %c0_225 = arith.constant 0 : index
    %c0_226 = arith.constant 0 : index
    %469 = vector.load %arg6[%c6_224, %c0_225, %c0_226] : memref<8x8x32xbf16, #tpu.memory_space<vmem>>, vector<1x8x32xbf16>
    %470 = vector.shape_cast %469 : vector<1x8x32xbf16> to vector<8x32xbf16>
    %cst_227 = arith.constant dense<0.000000e+00> : vector<16x32xf32>
    %471 = tpu.matmul %468, %470, %cst_227 {dimension_numbers = #tpu.dot_dimension_numbers<[1], [0], [0], [1], [0, 0, 1, 1], [], []>} : vector<16x8xbf16>, vector<8x32xbf16>, vector<16x32xf32> -> vector<16x32xf32>
    %472 = arith.addf %424, %471 : vector<16x32xf32>
    %c15 = arith.constant 15 : index
    %c0_228 = arith.constant 0 : index
    %c0_229 = arith.constant 0 : index
    %473 = vector.load %arg4[%c15, %c0_228, %c0_229] : memref<24x32x8xbf16, #tpu.memory_space<vmem>>, vector<1x32x8xbf16>
    %474 = vector.shape_cast %473 : vector<1x32x8xbf16> to vector<32x8xbf16>
    %c15_230 = arith.constant 15 : index
    %c0_231 = arith.constant 0 : index
    %c0_232 = arith.constant 0 : index
    %475 = vector.load %arg5[%c15_230, %c0_231, %c0_232] : memref<24x1x8xf32, #tpu.memory_space<vmem>>, vector<1x1x8xf32>
    %476 = vector.shape_cast %475 : vector<1x1x8xf32> to vector<1x8xf32>
    %cst_233 = arith.constant dense<0.000000e+00> : vector<16x8xf32>
    %477 = tpu.matmul %329, %474, %cst_233 {dimension_numbers = #tpu.dot_dimension_numbers<[1], [0], [0], [1], [0, 0, 1, 1], [], []>} : vector<16x32xbf16>, vector<32x8xbf16>, vector<16x8xf32> -> vector<16x8xf32>
    %478 = vector.broadcast %476 : vector<1x8xf32> to vector<16x8xf32>
    %479 = arith.addf %477, %478 : vector<16x8xf32>
    %480 = vector.shape_cast %479 : vector<16x8xf32> to vector<2x8x8xf32>
    %c19 = arith.constant 19 : index
    %c0_234 = arith.constant 0 : index
    %c0_235 = arith.constant 0 : index
    %481 = vector.load %arg4[%c19, %c0_234, %c0_235] : memref<24x32x8xbf16, #tpu.memory_space<vmem>>, vector<1x32x8xbf16>
    %482 = vector.shape_cast %481 : vector<1x32x8xbf16> to vector<32x8xbf16>
    %c19_236 = arith.constant 19 : index
    %c0_237 = arith.constant 0 : index
    %c0_238 = arith.constant 0 : index
    %483 = vector.load %arg5[%c19_236, %c0_237, %c0_238] : memref<24x1x8xf32, #tpu.memory_space<vmem>>, vector<1x1x8xf32>
    %484 = vector.shape_cast %483 : vector<1x1x8xf32> to vector<1x8xf32>
    %cst_239 = arith.constant dense<0.000000e+00> : vector<16x8xf32>
    %485 = tpu.matmul %329, %482, %cst_239 {dimension_numbers = #tpu.dot_dimension_numbers<[1], [0], [0], [1], [0, 0, 1, 1], [], []>} : vector<16x32xbf16>, vector<32x8xbf16>, vector<16x8xf32> -> vector<16x8xf32>
    %486 = vector.broadcast %484 : vector<1x8xf32> to vector<16x8xf32>
    %487 = arith.addf %485, %486 : vector<16x8xf32>
    %488 = vector.shape_cast %487 : vector<16x8xf32> to vector<2x8x8xf32>
    %c23 = arith.constant 23 : index
    %c0_240 = arith.constant 0 : index
    %c0_241 = arith.constant 0 : index
    %489 = vector.load %arg4[%c23, %c0_240, %c0_241] : memref<24x32x8xbf16, #tpu.memory_space<vmem>>, vector<1x32x8xbf16>
    %490 = vector.shape_cast %489 : vector<1x32x8xbf16> to vector<32x8xbf16>
    %c23_242 = arith.constant 23 : index
    %c0_243 = arith.constant 0 : index
    %c0_244 = arith.constant 0 : index
    %491 = vector.load %arg5[%c23_242, %c0_243, %c0_244] : memref<24x1x8xf32, #tpu.memory_space<vmem>>, vector<1x1x8xf32>
    %492 = vector.shape_cast %491 : vector<1x1x8xf32> to vector<1x8xf32>
    %cst_245 = arith.constant dense<0.000000e+00> : vector<16x8xf32>
    %493 = tpu.matmul %329, %490, %cst_245 {dimension_numbers = #tpu.dot_dimension_numbers<[1], [0], [0], [1], [0, 0, 1, 1], [], []>} : vector<16x32xbf16>, vector<32x8xbf16>, vector<16x8xf32> -> vector<16x8xf32>
    %494 = vector.broadcast %492 : vector<1x8xf32> to vector<16x8xf32>
    %495 = arith.addf %493, %494 : vector<16x8xf32>
    %496 = vector.shape_cast %495 : vector<16x8xf32> to vector<2x8x8xf32>
    %497 = arith.truncf %480 : vector<2x8x8xf32> to vector<2x8x8xbf16>
    %498 = arith.truncf %488 : vector<2x8x8xf32> to vector<2x8x8xbf16>
    "tpu.trace_start"() <{level = 10 : i32, message = "bqd,bkd->bqk"}> : () -> ()
    %cst_246 = arith.constant dense<0.000000e+00> : vector<2x8x8xf32>
    %499 = tpu.matmul %497, %498, %cst_246 {dimension_numbers = #tpu.dot_dimension_numbers<[2], [2], [1], [1], [0, 0, 0, 1, 1, 1], [0], [0]>} : vector<2x8x8xbf16>, vector<2x8x8xbf16>, vector<2x8x8xf32> -> vector<2x8x8xf32>
    "tpu.trace_stop"() : () -> ()
    %500 = vector.broadcast %58 : vector<2x1x8xf32> to vector<2x8x8xf32>
    %501 = arith.addf %499, %500 : vector<2x8x8xf32>
    %cst_247 = arith.constant dense<0xFF800000> : vector<2x8xf32>
    %502 = vector.multi_reduction <maximumf>, %501, %cst_247 [2] : vector<2x8x8xf32> to vector<2x8xf32>
    %503 = vector.shape_cast %502 : vector<2x8xf32> to vector<2x8x1xf32>
    %504 = vector.broadcast %503 : vector<2x8x1xf32> to vector<2x8x8xf32>
    %505 = arith.subf %501, %504 : vector<2x8x8xf32>
    %506 = math.exp %505 : vector<2x8x8xf32>
    %cst_248 = arith.constant dense<0.000000e+00> : vector<2x8xf32>
    %507 = vector.multi_reduction <add>, %506, %cst_248 [2] : vector<2x8x8xf32> to vector<2x8xf32>
    %508 = vector.shape_cast %507 : vector<2x8xf32> to vector<2x8x1xf32>
    %509 = tpu.reciprocal %508 {approx = true} : vector<2x8x1xf32> -> vector<2x8x1xf32>
    %510 = vector.broadcast %509 : vector<2x8x1xf32> to vector<2x8x8xf32>
    %511 = arith.mulf %506, %510 : vector<2x8x8xf32>
    %512 = arith.truncf %511 : vector<2x8x8xf32> to vector<2x8x8xbf16>
    %513 = arith.truncf %496 : vector<2x8x8xf32> to vector<2x8x8xbf16>
    "tpu.trace_start"() <{level = 10 : i32, message = "bqk,bkd->bqd"}> : () -> ()
    %cst_249 = arith.constant dense<0.000000e+00> : vector<2x8x8xf32>
    %514 = tpu.matmul %512, %513, %cst_249 {dimension_numbers = #tpu.dot_dimension_numbers<[2], [1], [1], [2], [0, 0, 0, 1, 1, 2], [0], [0]>} : vector<2x8x8xbf16>, vector<2x8x8xbf16>, vector<2x8x8xf32> -> vector<2x8x8xf32>
    "tpu.trace_stop"() : () -> ()
    %515 = vector.shape_cast %514 : vector<2x8x8xf32> to vector<16x8xf32>
    %516 = arith.truncf %515 : vector<16x8xf32> to vector<16x8xbf16>
    %c7_250 = arith.constant 7 : index
    %c0_251 = arith.constant 0 : index
    %c0_252 = arith.constant 0 : index
    %517 = vector.load %arg6[%c7_250, %c0_251, %c0_252] : memref<8x8x32xbf16, #tpu.memory_space<vmem>>, vector<1x8x32xbf16>
    %518 = vector.shape_cast %517 : vector<1x8x32xbf16> to vector<8x32xbf16>
    %cst_253 = arith.constant dense<0.000000e+00> : vector<16x32xf32>
    %519 = tpu.matmul %516, %518, %cst_253 {dimension_numbers = #tpu.dot_dimension_numbers<[1], [0], [0], [1], [0, 0, 1, 1], [], []>} : vector<16x8xbf16>, vector<8x32xbf16>, vector<16x32xf32> -> vector<16x32xf32>
    %520 = arith.addf %472, %519 : vector<16x32xf32>
    %c1_254 = arith.constant 1 : index
    %c0_255 = arith.constant 0 : index
    %c0_256 = arith.constant 0 : index
    %521 = vector.load %arg7[%c1_254, %c0_255, %c0_256] : memref<2x7x64xf32, #tpu.memory_space<vmem>>, vector<1x7x64xf32>
    %522 = vector.shape_cast %521 : vector<1x7x64xf32> to vector<7x64xf32>
    %523 = vector.extract_strided_slice %522 {offsets = [0, 0], sizes = [1, 32], strides = [1, 1]} : vector<7x64xf32> to vector<1x32xf32>
    %524 = vector.broadcast %523 : vector<1x32xf32> to vector<16x32xf32>
    %525 = arith.addf %520, %524 : vector<16x32xf32>
    %526 = arith.addf %525, %328 : vector<16x32xf32>
    %527 = vector.extract_strided_slice %522 {offsets = [1, 0], sizes = [1, 32], strides = [1, 1]} : vector<7x64xf32> to vector<1x32xf32>
    %528 = vector.extract_strided_slice %522 {offsets = [2, 0], sizes = [1, 32], strides = [1, 1]} : vector<7x64xf32> to vector<1x32xf32>
    %cst_257 = arith.constant dense<0.000000e+00> : vector<16xf32>
    %529 = vector.multi_reduction <add>, %526, %cst_257 [1] : vector<16x32xf32> to vector<16xf32>
    %530 = vector.shape_cast %529 : vector<16xf32> to vector<16x1xf32>
    %cst_258 = arith.constant 3.200000e+01 : f32
    %531 = vector.broadcast %cst_258 : f32 to vector<16x1xf32>
    %532 = arith.divf %530, %531 : vector<16x1xf32>
    %533 = vector.broadcast %532 : vector<16x1xf32> to vector<16x32xf32>
    %534 = arith.subf %526, %533 : vector<16x32xf32>
    %535 = arith.mulf %534, %534 : vector<16x32xf32>
    %cst_259 = arith.constant dense<0.000000e+00> : vector<16xf32>
    %536 = vector.multi_reduction <add>, %535, %cst_259 [1] : vector<16x32xf32> to vector<16xf32>
    %537 = vector.shape_cast %536 : vector<16xf32> to vector<16x1xf32>
    %cst_260 = arith.constant 3.200000e+01 : f32
    %538 = vector.broadcast %cst_260 : f32 to vector<16x1xf32>
    %539 = arith.divf %537, %538 : vector<16x1xf32>
    %cst_261 = arith.constant 9.99999996E-13 : f32
    %540 = vector.broadcast %cst_261 : f32 to vector<16x1xf32>
    %541 = arith.addf %539, %540 : vector<16x1xf32>
    %542 = math.rsqrt %541 : vector<16x1xf32>
    %543 = vector.broadcast %542 : vector<16x1xf32> to vector<16x32xf32>
    %544 = arith.mulf %534, %543 : vector<16x32xf32>
    %545 = vector.broadcast %527 : vector<1x32xf32> to vector<16x32xf32>
    %546 = arith.mulf %544, %545 : vector<16x32xf32>
    %547 = vector.broadcast %528 : vector<1x32xf32> to vector<16x32xf32>
    %548 = arith.addf %546, %547 : vector<16x32xf32>
    %549 = arith.truncf %548 : vector<16x32xf32> to vector<16x32xbf16>
    %c1_262 = arith.constant 1 : index
    %c0_263 = arith.constant 0 : index
    %c0_264 = arith.constant 0 : index
    %550 = vector.load %arg8[%c1_262, %c0_263, %c0_264] : memref<2x32x64xbf16, #tpu.memory_space<vmem>>, vector<1x32x64xbf16>
    %551 = vector.shape_cast %550 : vector<1x32x64xbf16> to vector<32x64xbf16>
    %552 = vector.extract_strided_slice %522 {offsets = [3, 0], sizes = [1, 64], strides = [1, 1]} : vector<7x64xf32> to vector<1x64xf32>
    %cst_265 = arith.constant dense<0.000000e+00> : vector<16x64xf32>
    %553 = tpu.matmul %549, %551, %cst_265 {dimension_numbers = #tpu.dot_dimension_numbers<[1], [0], [0], [1], [0, 0, 1, 1], [], []>} : vector<16x32xbf16>, vector<32x64xbf16>, vector<16x64xf32> -> vector<16x64xf32>
    %554 = vector.broadcast %552 : vector<1x64xf32> to vector<16x64xf32>
    %555 = arith.addf %553, %554 : vector<16x64xf32>
    %cst_266 = arith.constant 5.000000e-01 : f32
    %556 = vector.broadcast %cst_266 : f32 to vector<16x64xf32>
    %557 = arith.mulf %556, %555 : vector<16x64xf32>
    %cst_267 = arith.constant 4.471500e-02 : f32
    %558 = vector.broadcast %cst_267 : f32 to vector<16x64xf32>
    %559 = arith.mulf %558, %555 : vector<16x64xf32>
    %560 = arith.mulf %559, %555 : vector<16x64xf32>
    %561 = arith.mulf %560, %555 : vector<16x64xf32>
    %562 = arith.addf %555, %561 : vector<16x64xf32>
    %cst_268 = arith.constant 0.797884583 : f32
    %563 = vector.broadcast %cst_268 : f32 to vector<16x64xf32>
    %564 = arith.mulf %563, %562 : vector<16x64xf32>
    %565 = math.tanh %564 : vector<16x64xf32>
    %cst_269 = arith.constant 1.000000e+00 : f32
    %566 = vector.broadcast %cst_269 : f32 to vector<16x64xf32>
    %567 = arith.addf %566, %565 : vector<16x64xf32>
    %568 = arith.mulf %557, %567 : vector<16x64xf32>
    %569 = arith.truncf %568 : vector<16x64xf32> to vector<16x64xbf16>
    %c1_270 = arith.constant 1 : index
    %c0_271 = arith.constant 0 : index
    %c0_272 = arith.constant 0 : index
    %570 = vector.load %arg9[%c1_270, %c0_271, %c0_272] : memref<2x64x32xbf16, #tpu.memory_space<vmem>>, vector<1x64x32xbf16>
    %571 = vector.shape_cast %570 : vector<1x64x32xbf16> to vector<64x32xbf16>
    %572 = vector.extract_strided_slice %522 {offsets = [4, 0], sizes = [1, 32], strides = [1, 1]} : vector<7x64xf32> to vector<1x32xf32>
    %cst_273 = arith.constant dense<0.000000e+00> : vector<16x32xf32>
    %573 = tpu.matmul %569, %571, %cst_273 {dimension_numbers = #tpu.dot_dimension_numbers<[1], [0], [0], [1], [0, 0, 1, 1], [], []>} : vector<16x64xbf16>, vector<64x32xbf16>, vector<16x32xf32> -> vector<16x32xf32>
    %574 = vector.broadcast %572 : vector<1x32xf32> to vector<16x32xf32>
    %575 = arith.addf %573, %574 : vector<16x32xf32>
    %576 = arith.addf %575, %548 : vector<16x32xf32>
    %577 = vector.extract_strided_slice %522 {offsets = [5, 0], sizes = [1, 32], strides = [1, 1]} : vector<7x64xf32> to vector<1x32xf32>
    %578 = vector.extract_strided_slice %522 {offsets = [6, 0], sizes = [1, 32], strides = [1, 1]} : vector<7x64xf32> to vector<1x32xf32>
    %cst_274 = arith.constant dense<0.000000e+00> : vector<16xf32>
    %579 = vector.multi_reduction <add>, %576, %cst_274 [1] : vector<16x32xf32> to vector<16xf32>
    %580 = vector.shape_cast %579 : vector<16xf32> to vector<16x1xf32>
    %cst_275 = arith.constant 3.200000e+01 : f32
    %581 = vector.broadcast %cst_275 : f32 to vector<16x1xf32>
    %582 = arith.divf %580, %581 : vector<16x1xf32>
    %583 = vector.broadcast %582 : vector<16x1xf32> to vector<16x32xf32>
    %584 = arith.subf %576, %583 : vector<16x32xf32>
    %585 = arith.mulf %584, %584 : vector<16x32xf32>
    %cst_276 = arith.constant dense<0.000000e+00> : vector<16xf32>
    %586 = vector.multi_reduction <add>, %585, %cst_276 [1] : vector<16x32xf32> to vector<16xf32>
    %587 = vector.shape_cast %586 : vector<16xf32> to vector<16x1xf32>
    %cst_277 = arith.constant 3.200000e+01 : f32
    %588 = vector.broadcast %cst_277 : f32 to vector<16x1xf32>
    %589 = arith.divf %587, %588 : vector<16x1xf32>
    %cst_278 = arith.constant 9.99999996E-13 : f32
    %590 = vector.broadcast %cst_278 : f32 to vector<16x1xf32>
    %591 = arith.addf %589, %590 : vector<16x1xf32>
    %592 = math.rsqrt %591 : vector<16x1xf32>
    %593 = vector.broadcast %592 : vector<16x1xf32> to vector<16x32xf32>
    %594 = arith.mulf %584, %593 : vector<16x32xf32>
    %595 = vector.broadcast %577 : vector<1x32xf32> to vector<16x32xf32>
    %596 = arith.mulf %594, %595 : vector<16x32xf32>
    %597 = vector.broadcast %578 : vector<1x32xf32> to vector<16x32xf32>
    %598 = arith.addf %596, %597 : vector<16x32xf32>
    %599 = vector.shape_cast %598 : vector<16x32xf32> to vector<2x8x32xf32>
    %600 = vector.extract_strided_slice %599 {offsets = [0, 0, 0], sizes = [2, 1, 32], strides = [1, 1, 1]} : vector<2x8x32xf32> to vector<2x1x32xf32>
    %601 = vector.shape_cast %600 : vector<2x1x32xf32> to vector<2x32xf32>
    %602 = arith.truncf %601 : vector<2x32xf32> to vector<2x32xbf16>
    %c0_279 = arith.constant 0 : index
    %c0_280 = arith.constant 0 : index
    %c0_281 = arith.constant 0 : index
    %603 = vector.load %arg10[%c0_279, %c0_280, %c0_281] : memref<2x32x32xbf16, #tpu.memory_space<vmem>>, vector<1x32x32xbf16>
    %604 = vector.shape_cast %603 : vector<1x32x32xbf16> to vector<32x32xbf16>
    %605 = vector.extract_strided_slice %0 {offsets = [2, 0], sizes = [1, 32], strides = [1, 1]} : vector<4x32xf32> to vector<1x32xf32>
    %cst_282 = arith.constant dense<0.000000e+00> : vector<2x32xf32>
    %606 = tpu.matmul %602, %604, %cst_282 {dimension_numbers = #tpu.dot_dimension_numbers<[1], [0], [0], [1], [0, 0, 1, 1], [], []>} : vector<2x32xbf16>, vector<32x32xbf16>, vector<2x32xf32> -> vector<2x32xf32>
    %607 = vector.broadcast %605 : vector<1x32xf32> to vector<2x32xf32>
    %608 = arith.addf %606, %607 : vector<2x32xf32>
    %609 = math.tanh %608 : vector<2x32xf32>
    %610 = arith.truncf %609 : vector<2x32xf32> to vector<2x32xbf16>
    %c1_283 = arith.constant 1 : index
    %c0_284 = arith.constant 0 : index
    %c0_285 = arith.constant 0 : index
    %611 = vector.load %arg10[%c1_283, %c0_284, %c0_285] : memref<2x32x32xbf16, #tpu.memory_space<vmem>>, vector<1x32x32xbf16>
    %612 = vector.shape_cast %611 : vector<1x32x32xbf16> to vector<32x32xbf16>
    %613 = vector.extract_strided_slice %0 {offsets = [3, 0], sizes = [1, 32], strides = [1, 1]} : vector<4x32xf32> to vector<1x32xf32>
    %cst_286 = arith.constant dense<0.000000e+00> : vector<2x32xf32>
    %614 = tpu.matmul %610, %612, %cst_286 {dimension_numbers = #tpu.dot_dimension_numbers<[1], [0], [0], [1], [0, 0, 1, 1], [], []>} : vector<2x32xbf16>, vector<32x32xbf16>, vector<2x32xf32> -> vector<2x32xf32>
    %615 = vector.broadcast %613 : vector<1x32xf32> to vector<2x32xf32>
    %616 = arith.addf %614, %615 : vector<2x32xf32>
    %617 = vector.extract_strided_slice %616 {offsets = [0, 0], sizes = [2, 3], strides = [1, 1]} : vector<2x32xf32> to vector<2x3xf32>
    %cst_287 = arith.constant 0.000000e+00 : f32
    %618 = vector.broadcast %cst_287 : f32 to vector<2x3xf32>
    %619 = arith.subf %618, %617 : vector<2x3xf32>
    %620 = math.exp %619 : vector<2x3xf32>
    %cst_288 = arith.constant 1.000000e+00 : f32
    %621 = vector.broadcast %cst_288 : f32 to vector<2x3xf32>
    %622 = arith.addf %621, %620 : vector<2x3xf32>
    %cst_289 = arith.constant 1.000000e+00 : f32
    %623 = vector.broadcast %cst_289 : f32 to vector<2x3xf32>
    %624 = arith.divf %623, %622 : vector<2x3xf32>
    %c0_290 = arith.constant 0 : index
    %c0_291 = arith.constant 0 : index
    %625 = vector.load %arg11[%c0_290, %c0_291] : memref<2x3xf32, #tpu.memory_space<vmem>>, vector<2x3xf32>
    tpu.vector_store %arg11[%c0_290, %c0_291], %624 {strides = array<i32>} : memref<2x3xf32, #tpu.memory_space<vmem>>, vector<2x3xf32>,
    return
  }
}

</mosaic_0001>

<llo_original>
// kernel: forward.1
$region0: #{forward.1}
  #allocation0 [shape = 'u32[]', space=smem, size = 0x4, offset = 0x4, fixed_abs, tag = 'smem constant byte address 0x4 - core index']
  #allocation1 [shape = 'u32[144,128]{1,0:T(1,128)}', space=vmem, size = 0x12000, scoped, tag = 'internal scratch']
  %s0 = inlined_call_operand.vmem [shape: s32[16,2], index: 0, kind: input, shape index: {}]
  %s1 = inlined_call_operand.vmem [shape: s32[2,8], index: 1, kind: input, shape index: {}]
  %s2 = inlined_call_operand.vmem [shape: f32[112,32], index: 2, kind: input, shape index: {}]
  %s3 = inlined_call_operand.vmem [shape: f32[4,32], index: 3, kind: input, shape index: {}]
  %s4 = inlined_call_operand.vmem [shape: bf16[24,32,8], index: 4, kind: input, shape index: {}]
  %s5 = inlined_call_operand.vmem [shape: f32[24,1,8], index: 5, kind: input, shape index: {}]
  %s6 = inlined_call_operand.vmem [shape: bf16[8,8,32], index: 6, kind: input, shape index: {}]
  %s7 = inlined_call_operand.vmem [shape: f32[2,7,64], index: 7, kind: input, shape index: {}]
  %s8 = inlined_call_operand.vmem [shape: bf16[2,32,64], index: 8, kind: input, shape index: {}]
  %s9 = inlined_call_operand.vmem [shape: bf16[2,64,32], index: 9, kind: input, shape index: {}]
  %s10 = inlined_call_operand.vmem [shape: bf16[2,32,32], index: 10, kind: input, shape index: {}]
  %s11 = inlined_call_operand.hbm [shape: f32[2,3], index: 11, kind: output, shape index: {}]
  %s12 = sld [smem:[#allocation0]]
  $region54: #{forward.1} parent=0
    _
  %s14 = ssub.s32 1, %s12
  %s15 = scalar_select 0, %s14, %s12
  $region1: #{forward.1} parent=0
    #allocation2 [shape = 'u8[1024]{0}', space=vmem, size = 0x400, scoped, tag = 'output window, operand 0, single buffered']
    #allocation3 [shape = 's32[1]{0}', space=sflag, size = 0x4, scoped, tag = 'scoped memory for forward.1']
    %16 = vsyncpa [#allocation3], 0
    // Predicated region
    $region2: #{forward.1} parent=1 // pred_check
      _
    $region3: #{forward.1} parent=1 // pred_check_branch
      %18 = sbr.rel (0) target = $region5
    $region4: #{forward.1} parent=1 // pred_region
      _
    $region5: #{forward.1} parent=1 // pred_fallthru
      _
    // Predicated region
    $region6: #{forward.1} parent=1 // pred_check
      _
    $region7: #{forward.1} parent=1 // pred_check_branch
      %20 = sbr.rel (0) target = $region9
    $region8: #{forward.1} parent=1 // pred_region
      _
    $region9: #{forward.1} parent=1 // pred_fallthru
      _
    // Predicated region
    $region10: #{forward.1} parent=1 // pred_check
      _
    $region11: #{forward.1} parent=1 // pred_check_branch
      %22 = sbr.rel (0) target = $region13
    $region12: #{forward.1} parent=1 // pred_region
      _
    $region13: #{forward.1} parent=1 // pred_fallthru
      _
    // Predicated region
    $region14: #{forward.1} parent=1 // pred_check
      _
    $region15: #{forward.1} parent=1 // pred_check_branch
      %24 = sbr.rel (0) target = $region17
    $region16: #{forward.1} parent=1 // pred_region
      _
    $region17: #{forward.1} parent=1 // pred_fallthru
      _
    // Predicated region
    $region18: #{forward.1} parent=1 // pred_check
      _
    $region19: #{forward.1} parent=1 // pred_check_branch
      %26 = sbr.rel (0) target = $region21
    $region20: #{forward.1} parent=1 // pred_region
      _
    $region21: #{forward.1} parent=1 // pred_fallthru
      _
    // Predicated region
    $region22: #{forward.1} parent=1 // pred_check
      _
    $region23: #{forward.1} parent=1 // pred_check_branch
      %28 = sbr.rel (0) target = $region25
    $region24: #{forward.1} parent=1 // pred_region
      _
    $region25: #{forward.1} parent=1 // pred_fallthru
      _
    // Predicated region
    $region26: #{forward.1} parent=1 // pred_check
      _
    $region27: #{forward.1} parent=1 // pred_check_branch
      %30 = sbr.rel (0) target = $region29
    $region28: #{forward.1} parent=1 // pred_region
      _
    $region29: #{forward.1} parent=1 // pred_fallthru
      _
    // Predicated region
    $region30: #{forward.1} parent=1 // pred_check
      _
    $region31: #{forward.1} parent=1 // pred_check_branch
      %32 = sbr.rel (0) target = $region33
    $region32: #{forward.1} parent=1 // pred_region
      _
    $region33: #{forward.1} parent=1 // pred_fallthru
      _
    // Predicated region
    $region34: #{forward.1} parent=1 // pred_check
      _
    $region35: #{forward.1} parent=1 // pred_check_branch
      %34 = sbr.rel (0) target = $region37
    $region36: #{forward.1} parent=1 // pred_region
      _
    $region37: #{forward.1} parent=1 // pred_fallthru
      _
    // Predicated region
    $region38: #{forward.1} parent=1 // pred_check
      _
    $region39: #{forward.1} parent=1 // pred_check_branch
      %36 = sbr.rel (0) target = $region41
    $region40: #{forward.1} parent=1 // pred_region
      _
    $region41: #{forward.1} parent=1 // pred_fallthru
      _
    // Predicated region
    $region42: #{forward.1} parent=1 // pred_check
      _
    $region43: #{forward.1} parent=1 // pred_check_branch
      %38 = sbr.rel (0) target = $region45
    $region44: #{forward.1} parent=1 // pred_region
      _
    $region45: #{forward.1} parent=1 // pred_fallthru
      _
    %v40 = vld [vmem:[%s3] sm:$0xf]
    %v41 = vld [vmem:[%s0] sm:$0xff]
    %v42 = vld [vmem:[%s0 + $0x8] sm:$0xff]
    %v43 = vlaneseq
    %v44 = vand.u32 %v43, 127
    %45 = vset.pattern.permute.xlu0 0
    %46 = vperm.xlu0 %45, %v41
    %v47 = vpop.permute.xlu0 %46
    %48 = vset.pattern.permute.xlu0 0
    %49 = vperm.xlu0 %48, %v42
    %v50 = vpop.permute.xlu0 %49
    %vm51 = vcmp.eq.s32.totalorder %v44, %v47
    %vm52 = vcmp.eq.s32.totalorder %v44, %v50
    %v53 = vadd.s32 %v41, 100
    %v54 = vadd.s32 %v42, 100
    %55 = vset.pattern.permute.xlu0 1
    %56 = vperm.xlu0 %55, %v53
    %v57 = vpop.permute.xlu0 %56
    %58 = vset.pattern.permute.xlu0 1
    %59 = vperm.xlu0 %58, %v54
    %v60 = vpop.permute.xlu0 %59
    %vm61 = vcmp.eq.s32.totalorder %v44, %v57
    %vm62 = vcmp.eq.s32.totalorder %v44, %v60
    %vm63 = vmor %vm51, %vm61
    %vm64 = vmor %vm52, %vm62
    %v65 = vsel %vm63, 1.0, 0.0
    %v66 = vsel %vm64, 1.0, 0.0
    %v67 = vld [vmem:[%s2] sm:$0xff]
    %v68 = vld [vmem:[%s2 + $0x8] sm:$0xff]
    %v69 = vld [vmem:[%s2 + $0x10] sm:$0xff]
    %v70 = vld [vmem:[%s2 + $0x18] sm:$0xff]
    %v71 = vld [vmem:[%s2 + $0x20] sm:$0xff]
    %v72 = vld [vmem:[%s2 + $0x28] sm:$0xff]
    %v73 = vld [vmem:[%s2 + $0x30] sm:$0xff]
    %v74 = vld [vmem:[%s2 + $0x38] sm:$0xff]
    %v75 = vld [vmem:[%s2 + $0x40] sm:$0xff]
    %v76 = vld [vmem:[%s2 + $0x48] sm:$0xff]
    %v77 = vld [vmem:[%s2 + $0x50] sm:$0xff]
    %v78 = vld [vmem:[%s2 + $0x58] sm:$0xff]
    %v79 = vld [vmem:[%s2 + $0x60] sm:$0xff]
    %v80 = vlaneseq
    %v81 = vshrl.u32 %v80, 7
    %vm82 = vcmp.eq.s32.totalorder %v81, %v44
    %v83 = vsel %vm82, 1.0, 0.0
    %v84 = vld [vmem:[%s2 + $0x68] sm:$0xff]
    %vm85 = vcmask 64512
    %v87 = vsel %vm85, %v83, 0
    %89 = vmatprep.subr.mxu0 0.0
    %90 = vmatpush1.msra.mxu0 0.0
    %91 = vmatprep.subr.mxu0 0.0
    %92 = vmatpush1.msra.mxu0 0.0
    %93 = vmatprep.subr.mxu0 0.0
    %94 = vmatpush1.msra.mxu0 0.0
    %95 = vmatprep.subr.mxu0 0.0
    %96 = vmatpush1.msra.mxu0 0.0
    %97 = vmatprep.subr.mxu0 0.0
    %98 = vmatpush1.msra.mxu0 0.0
    %99 = vmatprep.subr.mxu0 0.0
    %100 = vmatpush1.msra.mxu0 0.0
    %101 = vmatprep.subr.mxu0 0.0
    %102 = vmatpush1.msra.mxu0 0.0
    %103 = vmatprep.subr.mxu0 0.0
    %104 = vmatpush1.msra.mxu0 0.0
    %105 = vmatprep.subr.mxu0 0.0
    %106 = vmatpush1.msra.mxu0 0.0
    %107 = vmatprep.subr.mxu0 0.0
    %108 = vmatpush1.msra.mxu0 0.0
    %109 = vmatprep.subr.mxu0 0.0
    %110 = vmatpush1.msra.mxu0 0.0
    %111 = vmatprep.subr.mxu0 0.0
    %112 = vmatpush1.msra.mxu0 0.0
    %113 = vmatprep.subr.mxu0 0.0
    %114 = vmatpush1.msra.mxu0 0.0
    %115 = vmatprep.subr.mxu0 0.0
    %116 = vmatpush1.msra.mxu0 0.0
    %117 = vmatprep.subr.mxu0 0.0
    %118 = vmatpush1.msra.mxu0 0.0
    %119 = vmatprep.subr.mxu0 0.0
    %120 = vmatpush1.msra.mxu0 %v84
    %121 = vmatprep.subr.mxu0 0.0
    %122 = vmatpush2.msra.mxu0 0.0
    %123 = vmatprep.subr.mxu0 0.0
    %124 = vmatpush2.msra.mxu0 0.0
    %125 = vmatprep.subr.mxu0 0.0
    %126 = vmatpush2.msra.mxu0 0.0
    %127 = vmatprep.subr.mxu0 0.0
    %128 = vmatpush2.msra.mxu0 0.0
    %129 = vmatprep.subr.mxu0 0.0
    %130 = vmatpush2.msra.mxu0 0.0
    %131 = vmatprep.subr.mxu0 0.0
    %132 = vmatpush2.msra.mxu0 0.0
    %133 = vmatprep.subr.mxu0 0.0
    %134 = vmatpush2.msra.mxu0 0.0
    %135 = vmatprep.subr.mxu0 0.0
    %136 = vmatpush2.msra.mxu0 0.0
    %137 = vmatprep.subr.mxu0 0.0
    %138 = vmatpush2.msra.mxu0 0.0
    %139 = vmatprep.subr.mxu0 0.0
    %140 = vmatpush2.msra.mxu0 0.0
    %141 = vmatprep.subr.mxu0 0.0
    %142 = vmatpush2.msra.mxu0 0.0
    %143 = vmatprep.subr.mxu0 0.0
    %144 = vmatpush2.msra.mxu0 0.0
    %145 = vmatprep.subr.mxu0 0.0
    %146 = vmatpush2.msra.mxu0 0.0
    %147 = vmatprep.subr.mxu0 0.0
    %148 = vmatpush2.msra.mxu0 0.0
    %149 = vmatprep.subr.mxu0 0.0
    %150 = vmatpush2.msra.mxu0 0.0
    %151 = vmatprep.subr.mxu0 0.0
    %152 = vmatpush2.msra.mxu0 0.0
    %153 = vmatprep.mubr.f32.mxu0 0.0
    %154 = vmatmul.mubr.f32.gmra.mxu0 %v87
    %v155 = vpop.f32.mrf.mxu0
    %v156 = vadd.f32 0.0, %v155
    %v157 = vpop.f32.mrf.mxu0
    %158 = vmatprep.mubr.f32.mxu0 0.0
    %159 = vmatmul.mubr.f32.gmra.mxu0 %v87
    %v160 = vpop.f32.mrf.mxu0
    %v161 = vadd.f32 0.0, %v160
    %v162 = vpop.f32.mrf.mxu0
    %163 = vdwg.mxu0
    %vm164 = vcmask 850944
    %v166 = vsel %vm164, %v65, 0
    %v169 = vsel %vm164, %v66, 0
    %171 = vmatprep.subr.mxu0 0.0
    %172 = vmatpush1.msra.mxu0 0.0
    %173 = vmatprep.subr.mxu0 0.0
    %174 = vmatpush1.msra.mxu0 0.0
    %175 = vmatprep.subr.mxu0 0.0
    %176 = vmatpush1.msra.mxu0 0.0
    %177 = vmatprep.subr.mxu0 0.0
    %178 = vmatpush1.msra.mxu0 %v79
    %179 = vmatprep.subr.mxu0 0.0
    %180 = vmatpush1.msra.mxu0 %v78
    %181 = vmatprep.subr.mxu0 0.0
    %182 = vmatpush1.msra.mxu0 %v77
    %183 = vmatprep.subr.mxu0 0.0
    %184 = vmatpush1.msra.mxu0 %v76
    %185 = vmatprep.subr.mxu0 0.0
    %186 = vmatpush1.msra.mxu0 %v75
    %187 = vmatprep.subr.mxu0 0.0
    %188 = vmatpush1.msra.mxu0 %v74
    %189 = vmatprep.subr.mxu0 0.0
    %190 = vmatpush1.msra.mxu0 %v73
    %191 = vmatprep.subr.mxu0 0.0
    %192 = vmatpush1.msra.mxu0 %v72
    %193 = vmatprep.subr.mxu0 0.0
    %194 = vmatpush1.msra.mxu0 %v71
    %195 = vmatprep.subr.mxu0 0.0
    %196 = vmatpush1.msra.mxu0 %v70
    %197 = vmatprep.subr.mxu0 0.0
    %198 = vmatpush1.msra.mxu0 %v69
    %199 = vmatprep.subr.mxu0 0.0
    %200 = vmatpush1.msra.mxu0 %v68
    %201 = vmatprep.subr.mxu0 0.0
    %202 = vmatpush1.msra.mxu0 %v67
    %203 = vmatprep.subr.mxu0 0.0
    %204 = vmatpush2.msra.mxu0 0.0
    %205 = vmatprep.subr.mxu0 0.0
    %206 = vmatpush2.msra.mxu0 0.0
    %207 = vmatprep.subr.mxu0 0.0
    %208 = vmatpush2.msra.mxu0 0.0
    %209 = vmatprep.subr.mxu0 0.0
    %210 = vmatpush2.msra.mxu0 0.0
    %211 = vmatprep.subr.mxu0 0.0
    %212 = vmatpush2.msra.mxu0 0.0
    %213 = vmatprep.subr.mxu0 0.0
    %214 = vmatpush2.msra.mxu0 0.0
    %215 = vmatprep.subr.mxu0 0.0
    %216 = vmatpush2.msra.mxu0 0.0
    %217 = vmatprep.subr.mxu0 0.0
    %218 = vmatpush2.msra.mxu0 0.0
    %219 = vmatprep.subr.mxu0 0.0
    %220 = vmatpush2.msra.mxu0 0.0
    %221 = vmatprep.subr.mxu0 0.0
    %222 = vmatpush2.msra.mxu0 0.0
    %223 = vmatprep.subr.mxu0 0.0
    %224 = vmatpush2.msra.mxu0 0.0
    %225 = vmatprep.subr.mxu0 0.0
    %226 = vmatpush2.msra.mxu0 0.0
    %227 = vmatprep.subr.mxu0 0.0
    %228 = vmatpush2.msra.mxu0 0.0
    %229 = vmatprep.subr.mxu0 0.0
    %230 = vmatpush2.msra.mxu0 0.0
    %231 = vmatprep.subr.mxu0 0.0
    %232 = vmatpush2.msra.mxu0 0.0
    %233 = vmatprep.subr.mxu0 0.0
    %234 = vmatpush2.msra.mxu0 0.0
    %235 = vmatprep.mubr.f32.mxu0 0.0
    %236 = vmatmul.mubr.f32.gmra.mxu0 %v166
    %v237 = vpop.f32.mrf.mxu0
    %v238 = vadd.f32 %v156, %v237
    %v239 = vpop.f32.mrf.mxu0
    %240 = vmatprep.mubr.f32.mxu0 0.0
    %241 = vmatmul.mubr.f32.gmra.mxu0 %v169
    %v242 = vpop.f32.mrf.mxu0
    %v243 = vadd.f32 %v161, %v242
    %v244 = vpop.f32.mrf.mxu0
    %245 = vdwg.mxu0
    %vm246 = vcmask 261120
    %v247 = vsel %vm246, %v238, 0.0
    %248 = vadd.xlane.f32.xlu0 %v247
    %v249 = vpop.xlane.xlu0 %248
    %v250 = vsel %vm246, %v243, 0.0
    %251 = vadd.xlane.f32.xlu0 %v250
    %v252 = vpop.xlane.xlu0 %251
    %v253 = vrcp.pop 32.0
    %v254 = vmul.f32 %v249, %v253
    %v255 = vmul.f32 %v252, %v253
    %v256 = vsub.f32 %v238, %v254
    %v257 = vsub.f32 %v243, %v255
    %v258 = vmul.f32 %v256, %v256
    %v259 = vmul.f32 %v257, %v257
    %v260 = vsel %vm246, %v258, 0.0
    %261 = vadd.xlane.f32.xlu0 %v260
    %v262 = vpop.xlane.xlu0 %261
    %v263 = vsel %vm246, %v259, 0.0
    %264 = vadd.xlane.f32.xlu0 %v263
    %v265 = vpop.xlane.xlu0 %264
    %v266 = vmul.f32 %v262, %v253
    %v267 = vmul.f32 %v265, %v253
    %v268 = vadd.f32 %v266, 1e-12
    %v269 = vadd.f32 %v267, 1e-12
    %v270 = vrsqrt.pop %v268
    %v271 = vrsqrt.pop %v269
    %v272 = vmul.f32 %v256, %v270
    %v273 = vmul.f32 %v257, %v271
    %v274 = vlaneseq
    %v275 = vshrl.u32 %v274, 7
    %v276 = vsub.s32 0, %v275
    %v277 = vrot.slane %v40, %v276
    %v278 = vmul.f32 %v272, %v277
    %v279 = vmul.f32 %v273, %v277
    %v280 = vlaneseq
    %v281 = vshrl.u32 %v280, 7
    %v282 = vsub.s32 1, %v281
    %v283 = vrot.slane %v40, %v282
    %v284 = vadd.f32 %v278, %v283
    %v285 = vadd.f32 %v279, %v283
    %v286 = vld [vmem:[%s1] sm:$0x3]
    %v287 = vcvt.s32.f32 %v286
    %v288 = vsub.f32 1.0, %v287
    %v291 = vunpack.c.l.s4 1966171168
    %v292 = vunpack.c.0.s8 %v291
    %v293 = vlaneseq
    %v294 = vshrl.u32 %v293, 7
    %v295 = vsub.s32 %v292, %v294
    %v296 = vrot.slane %v288, %v295
    %v297 = vcombine.high %v296, %v296
    %v299 = vunpack.c.l.s4 1966171168
    %v300 = vunpack.c.0.s8 %v299
    %v301 = vlaneseq
    %v302 = vshrl.u32 %v301, 7
    %v303 = vsub.s32 %v300, %v302
    %v304 = vrot.slane %v296, %v303
    %v306 = vunpack.c.l.s4 1966171168
    %v307 = vunpack.c.0.s8 %v306
    %v308 = vlaneseq
    %v309 = vshrl.u32 %v308, 7
    %v310 = vsub.s32 %v307, %v309
    %v311 = vrot.slane %v297, %v310
    %v314 = vmul.f32 %v304, -10000.0
    %v315 = vmul.f32 %v311, -10000.0
    %v316 = vpack.c.bf16 %v285, %v284
    %v317 = vld [vmem:[%s4] sm:$0xf]
    %v318 = vld [vmem:[%s4 + $0x4] sm:$0xf]
    %v319 = vld [vmem:[%s4 + $0x8] sm:$0xf]
    %v320 = vld [vmem:[%s4 + $0xc] sm:$0xf]
    %v321 = vld [vmem:[%s5] sm:$0x1]
    %v323 = vlaneseq
    %v324 = vshrl.u32 %v323, 7
    %v325 = vsub.s32 0, %v324
    %v326 = vrot.slane %v321, %v325
    %v332 = vunpack.c.l.b16 %v317
    %v333 = vunpack.c.l.b16 %v318
    %v334 = vunpack.c.l.b16 %v319
    %v335 = vunpack.c.l.b16 %v320
    %v336 = vpack.c.b16 %v333, %v332
    %v337 = vpack.c.b16 %v335, %v334
    %v341 = vsel %vm246, %v316, 0
    %343 = vmatprep.subr.bf16.mxu0 0
    %344 = vmatpush1.bf16.msra.mxu0 0
    %345 = vmatprep.subr.bf16.mxu0 0
    %346 = vmatpush1.bf16.msra.mxu0 0
    %347 = vmatprep.subr.bf16.mxu0 0
    %348 = vmatpush1.bf16.msra.mxu0 0
    %349 = vmatprep.subr.bf16.mxu0 0
    %350 = vmatpush1.bf16.msra.mxu0 0
    %351 = vmatprep.subr.bf16.mxu0 0
    %352 = vmatpush1.bf16.msra.mxu0 0
    %353 = vmatprep.subr.bf16.mxu0 0
    %354 = vmatpush1.bf16.msra.mxu0 0
    %355 = vmatprep.subr.bf16.mxu0 0
    %356 = vmatpush1.bf16.msra.mxu0 %v337
    %357 = vmatprep.subr.bf16.mxu0 0
    %358 = vmatpush1.bf16.msra.mxu0 %v336
    %359 = vmatprep.subr.bf16.mxu0 0
    %360 = vmatpush2.bf16.msra.mxu0 0
    %361 = vmatprep.subr.bf16.mxu0 0
    %362 = vmatpush2.bf16.msra.mxu0 0
    %363 = vmatprep.subr.bf16.mxu0 0
    %364 = vmatpush2.bf16.msra.mxu0 0
    %365 = vmatprep.subr.bf16.mxu0 0
    %366 = vmatpush2.bf16.msra.mxu0 0
    %367 = vmatprep.subr.bf16.mxu0 0
    %368 = vmatpush2.bf16.msra.mxu0 0
    %369 = vmatprep.subr.bf16.mxu0 0
    %370 = vmatpush2.bf16.msra.mxu0 0
    %371 = vmatprep.subr.bf16.mxu0 0
    %372 = vmatpush2.bf16.msra.mxu0 0
    %373 = vmatprep.subr.bf16.mxu0 0
    %374 = vmatpush2.bf16.msra.mxu0 0
    %375 = vmatprep.mubr.bf16.mxu0 0
    %376 = vmatmul.mubr.bf16.gmra.mxu0 %v341
    %v377 = vpop.f32.mrf.mxu0
    %v378 = vadd.f32 %v326, %v377
    %v379 = vpop.f32.mrf.mxu0
    %v380 = vpop.f32.mrf.mxu0
    %v381 = vadd.f32 %v326, %v380
    %v382 = vpop.f32.mrf.mxu0
    %383 = vdwg.mxu0
    %s384 = scalar_lea.vmem %s4, 64
    %v385 = vld [vmem:[%s384] sm:$0xf]
    %v386 = vld [vmem:[%s384 + $0x4] sm:$0xf]
    %v387 = vld [vmem:[%s384 + $0x8] sm:$0xf]
    %v388 = vld [vmem:[%s384 + $0xc] sm:$0xf]
    %s389 = scalar_lea.vmem %s5, 4
    %v390 = vld [vmem:[%s389] sm:$0x1]
    %v392 = vlaneseq
    %v393 = vshrl.u32 %v392, 7
    %v394 = vsub.s32 0, %v393
    %v395 = vrot.slane %v390, %v394
    %v401 = vunpack.c.l.b16 %v385
    %v402 = vunpack.c.l.b16 %v386
    %v403 = vunpack.c.l.b16 %v387
    %v404 = vunpack.c.l.b16 %v388
    %v405 = vpack.c.b16 %v402, %v401
    %v406 = vpack.c.b16 %v404, %v403
    %409 = vmatprep.subr.bf16.mxu0 0
    %410 = vmatpush1.bf16.msra.mxu0 0
    %411 = vmatprep.subr.bf16.mxu0 0
    %412 = vmatpush1.bf16.msra.mxu0 0
    %413 = vmatprep.subr.bf16.mxu0 0
    %414 = vmatpush1.bf16.msra.mxu0 0
    %415 = vmatprep.subr.bf16.mxu0 0
    %416 = vmatpush1.bf16.msra.mxu0 0
    %417 = vmatprep.subr.bf16.mxu0 0
    %418 = vmatpush1.bf16.msra.mxu0 0
    %419 = vmatprep.subr.bf16.mxu0 0
    %420 = vmatpush1.bf16.msra.mxu0 0
    %421 = vmatprep.subr.bf16.mxu0 0
    %422 = vmatpush1.bf16.msra.mxu0 %v406
    %423 = vmatprep.subr.bf16.mxu0 0
    %424 = vmatpush1.bf16.msra.mxu0 %v405
    %425 = vmatprep.subr.bf16.mxu0 0
    %426 = vmatpush2.bf16.msra.mxu0 0
    %427 = vmatprep.subr.bf16.mxu0 0
    %428 = vmatpush2.bf16.msra.mxu0 0
    %429 = vmatprep.subr.bf16.mxu0 0
    %430 = vmatpush2.bf16.msra.mxu0 0
    %431 = vmatprep.subr.bf16.mxu0 0
    %432 = vmatpush2.bf16.msra.mxu0 0
    %433 = vmatprep.subr.bf16.mxu0 0
    %434 = vmatpush2.bf16.msra.mxu0 0
    %435 = vmatprep.subr.bf16.mxu0 0
    %436 = vmatpush2.bf16.msra.mxu0 0
    %437 = vmatprep.subr.bf16.mxu0 0
    %438 = vmatpush2.bf16.msra.mxu0 0
    %439 = vmatprep.subr.bf16.mxu0 0
    %440 = vmatpush2.bf16.msra.mxu0 0
    %441 = vmatprep.mubr.bf16.mxu0 0
    %442 = vmatmul.mubr.bf16.gmra.mxu0 %v341
    %v443 = vpop.f32.mrf.mxu0
    %v444 = vadd.f32 %v395, %v443
    %v445 = vpop.f32.mrf.mxu0
    %v446 = vpop.f32.mrf.mxu0
    %v447 = vadd.f32 %v395, %v446
    %v448 = vpop.f32.mrf.mxu0
    %449 = vdwg.mxu0
    %s450 = scalar_lea.vmem %s4, 128
    %v451 = vld [vmem:[%s450] sm:$0xf]
    %v452 = vld [vmem:[%s450 + $0x4] sm:$0xf]
    %v453 = vld [vmem:[%s450 + $0x8] sm:$0xf]
    %v454 = vld [vmem:[%s450 + $0xc] sm:$0xf]
    %s455 = scalar_lea.vmem %s5, 8
    %v456 = vld [vmem:[%s455] sm:$0x1]
    %v458 = vlaneseq
    %v459 = vshrl.u32 %v458, 7
    %v460 = vsub.s32 0, %v459
    %v461 = vrot.slane %v456, %v460
    %v467 = vunpack.c.l.b16 %v451
    %v468 = vunpack.c.l.b16 %v452
    %v469 = vunpack.c.l.b16 %v453
    %v470 = vunpack.c.l.b16 %v454
    %v471 = vpack.c.b16 %v468, %v467
    %v472 = vpack.c.b16 %v470, %v469
    %475 = vmatprep.subr.bf16.mxu0 0
    %476 = vmatpush1.bf16.msra.mxu0 0
    %477 = vmatprep.subr.bf16.mxu0 0
    %478 = vmatpush1.bf16.msra.mxu0 0
    %479 = vmatprep.subr.bf16.mxu0 0
    %480 = vmatpush1.bf16.msra.mxu0 0
    %481 = vmatprep.subr.bf16.mxu0 0
    %482 = vmatpush1.bf16.msra.mxu0 0
    %483 = vmatprep.subr.bf16.mxu0 0
    %484 = vmatpush1.bf16.msra.mxu0 0
    %485 = vmatprep.subr.bf16.mxu0 0
    %486 = vmatpush1.bf16.msra.mxu0 0
    %487 = vmatprep.subr.bf16.mxu0 0
    %488 = vmatpush1.bf16.msra.mxu0 %v472
    %489 = vmatprep.subr.bf16.mxu0 0
    %490 = vmatpush1.bf16.msra.mxu0 %v471
    %491 = vmatprep.subr.bf16.mxu0 0
    %492 = vmatpush2.bf16.msra.mxu0 0
    %493 = vmatprep.subr.bf16.mxu0 0
    %494 = vmatpush2.bf16.msra.mxu0 0
    %495 = vmatprep.subr.bf16.mxu0 0
    %496 = vmatpush2.bf16.msra.mxu0 0
    %497 = vmatprep.subr.bf16.mxu0 0
    %498 = vmatpush2.bf16.msra.mxu0 0
    %499 = vmatprep.subr.bf16.mxu0 0
    %500 = vmatpush2.bf16.msra.mxu0 0
    %501 = vmatprep.subr.bf16.mxu0 0
    %502 = vmatpush2.bf16.msra.mxu0 0
    %503 = vmatprep.subr.bf16.mxu0 0
    %504 = vmatpush2.bf16.msra.mxu0 0
    %505 = vmatprep.subr.bf16.mxu0 0
    %506 = vmatpush2.bf16.msra.mxu0 0
    %507 = vmatprep.mubr.bf16.mxu0 0
    %508 = vmatmul.mubr.bf16.gmra.mxu0 %v341
    %v509 = vpop.f32.mrf.mxu0
    %v510 = vadd.f32 %v461, %v509
    %v511 = vpop.f32.mrf.mxu0
    %v512 = vpop.f32.mrf.mxu0
    %v513 = vadd.f32 %v461, %v512
    %v514 = vpop.f32.mrf.mxu0
    %515 = vdwg.mxu0
    %v516 = vpack.c.bf16 %v378, %v378
    %v517 = vpack.c.bf16 %v381, %v381
    %v518 = vpack.c.bf16 %v444, %v444
    %v519 = vpack.c.bf16 %v447, %v447
    %v522 = vlaneseq
    %v523 = vshrl.u32 %v522, 7
    %v524 = vsub.s32 0, %v523
    %v525 = vrot.slane %v314, %v524
    %v526 = vlaneseq
    %v527 = vshrl.u32 %v526, 7
    %v528 = vsub.s32 0, %v527
    %v529 = vrot.slane %v315, %v528
    %v533 = vsel %vm85, %v516, 0
    %v536 = vsel %vm85, %v518, 0
    %538 = vmatprep.subr.bf16.mxu0 0
    %539 = vmatpush1.bf16.xpose.msra.mxu0 0
    %540 = vmatprep.subr.bf16.mxu0 0
    %541 = vmatpush1.bf16.xpose.msra.mxu0 0
    %542 = vmatprep.subr.bf16.mxu0 0
    %543 = vmatpush1.bf16.xpose.msra.mxu0 0
    %544 = vmatprep.subr.bf16.mxu0 0
    %545 = vmatpush1.bf16.xpose.msra.mxu0 0
    %546 = vmatprep.subr.bf16.mxu0 0
    %547 = vmatpush1.bf16.xpose.msra.mxu0 0
    %548 = vmatprep.subr.bf16.mxu0 0
    %549 = vmatpush1.bf16.xpose.msra.mxu0 0
    %550 = vmatprep.subr.bf16.mxu0 0
    %551 = vmatpush1.bf16.xpose.msra.mxu0 0
    %552 = vmatprep.subr.bf16.mxu0 0
    %553 = vmatpush1.bf16.xpose.msra.mxu0 %v536
    %554 = vmatprep.subr.bf16.mxu0 0
    %555 = vmatpush2.bf16.xpose.msra.mxu0 0
    %556 = vmatprep.subr.bf16.mxu0 0
    %557 = vmatpush2.bf16.xpose.msra.mxu0 0
    %558 = vmatprep.subr.bf16.mxu0 0
    %559 = vmatpush2.bf16.xpose.msra.mxu0 0
    %560 = vmatprep.subr.bf16.mxu0 0
    %561 = vmatpush2.bf16.xpose.msra.mxu0 0
    %562 = vmatprep.subr.bf16.mxu0 0
    %563 = vmatpush2.bf16.xpose.msra.mxu0 0
    %564 = vmatprep.subr.bf16.mxu0 0
    %565 = vmatpush2.bf16.xpose.msra.mxu0 0
    %566 = vmatprep.subr.bf16.mxu0 0
    %567 = vmatpush2.bf16.xpose.msra.mxu0 0
    %568 = vmatprep.subr.bf16.mxu0 0
    %569 = vmatpush2.bf16.xpose.msra.mxu0 0
    %570 = vmatprep.mubr.bf16.mxu0 0
    %571 = vmatmul.mubr.bf16.gmra.mxu0 %v533
    %v572 = vpop.f32.mrf.mxu0
    %v573 = vadd.f32 %v525, %v572
    %v574 = vpop.f32.mrf.mxu0
    %v575 = vpop.f32.mrf.mxu0
    %v576 = vpop.f32.mrf.mxu0
    %577 = vdwg.mxu0
    %v579 = vsel %vm85, %v517, 0
    %v582 = vsel %vm85, %v519, 0
    %584 = vmatprep.subr.bf16.mxu0 0
    %585 = vmatpush1.bf16.xpose.msra.mxu0 0
    %586 = vmatprep.subr.bf16.mxu0 0
    %587 = vmatpush1.bf16.xpose.msra.mxu0 0
    %588 = vmatprep.subr.bf16.mxu0 0
    %589 = vmatpush1.bf16.xpose.msra.mxu0 0
    %590 = vmatprep.subr.bf16.mxu0 0
    %591 = vmatpush1.bf16.xpose.msra.mxu0 0
    %592 = vmatprep.subr.bf16.mxu0 0
    %593 = vmatpush1.bf16.xpose.msra.mxu0 0
    %594 = vmatprep.subr.bf16.mxu0 0
    %595 = vmatpush1.bf16.xpose.msra.mxu0 0
    %596 = vmatprep.subr.bf16.mxu0 0
    %597 = vmatpush1.bf16.xpose.msra.mxu0 0
    %598 = vmatprep.subr.bf16.mxu0 0
    %599 = vmatpush1.bf16.xpose.msra.mxu0 %v582
    %600 = vmatprep.subr.bf16.mxu0 0
    %601 = vmatpush2.bf16.xpose.msra.mxu0 0
    %602 = vmatprep.subr.bf16.mxu0 0
    %603 = vmatpush2.bf16.xpose.msra.mxu0 0
    %604 = vmatprep.subr.bf16.mxu0 0
    %605 = vmatpush2.bf16.xpose.msra.mxu0 0
    %606 = vmatprep.subr.bf16.mxu0 0
    %607 = vmatpush2.bf16.xpose.msra.mxu0 0
    %608 = vmatprep.subr.bf16.mxu0 0
    %609 = vmatpush2.bf16.xpose.msra.mxu0 0
    %610 = vmatprep.subr.bf16.mxu0 0
    %611 = vmatpush2.bf16.xpose.msra.mxu0 0
    %612 = vmatprep.subr.bf16.mxu0 0
    %613 = vmatpush2.bf16.xpose.msra.mxu0 0
    %614 = vmatprep.subr.bf16.mxu0 0
    %615 = vmatpush2.bf16.xpose.msra.mxu0 0
    %616 = vmatprep.mubr.bf16.mxu0 0
    %617 = vmatmul.mubr.bf16.gmra.mxu0 %v579
    %v618 = vpop.f32.mrf.mxu0
    %v619 = vadd.f32 %v529, %v618
    %v620 = vpop.f32.mrf.mxu0
    %v621 = vpop.f32.mrf.mxu0
    %v622 = vpop.f32.mrf.mxu0
    %623 = vdwg.mxu0
    %v624 = vsel %vm85, %v573, -inf
    %625 = vmax.xlane.f32.xlu0 %v624
    %v626 = vpop.xlane.xlu0 %625
    %v627 = vsel %vm85, %v619, -inf
    %628 = vmax.xlane.f32.xlu0 %v627
    %v629 = vpop.xlane.xlu0 %628
    %v630 = vsub.f32 %v573, %v626
    %v631 = vsub.f32 %v619, %v629
    %v632 = vmul.f32 %v630, 1.442695
    %v633 = vpow.pop %v632
    %v634 = vmul.f32 %v631, 1.442695
    %v635 = vpow.pop %v634
    %v636 = vsel %vm85, %v633, 0.0
    %637 = vadd.xlane.f32.xlu0 %v636
    %v638 = vpop.xlane.xlu0 %637
    %v639 = vsel %vm85, %v635, 0.0
    %640 = vadd.xlane.f32.xlu0 %v639
    %v641 = vpop.xlane.xlu0 %640
    %v642 = vrcp.pop %v638
    %v643 = vrcp.pop %v641
    %v644 = vmul.f32 %v633, %v642
    %v645 = vmul.f32 %v635, %v643
    %v646 = vpack.c.bf16 %v644, %v644
    %v647 = vpack.c.bf16 %v645, %v645
    %v648 = vpack.c.bf16 %v510, %v510
    %v649 = vpack.c.bf16 %v513, %v513
    %v651 = vsel %vm85, %v646, 0
    %vm653 = vcmask 1043456
    %v655 = vsel %vm653, %v648, 0
    %657 = vmatprep.subr.bf16.mxu0 0
    %658 = vmatpush1.bf16.msra.mxu0 0
    %659 = vmatprep.subr.bf16.mxu0 0
    %660 = vmatpush1.bf16.msra.mxu0 0
    %661 = vmatprep.subr.bf16.mxu0 0
    %662 = vmatpush1.bf16.msra.mxu0 0
    %663 = vmatprep.subr.bf16.mxu0 0
    %664 = vmatpush1.bf16.msra.mxu0 0
    %665 = vmatprep.subr.bf16.mxu0 0
    %666 = vmatpush1.bf16.msra.mxu0 0
    %667 = vmatprep.subr.bf16.mxu0 0
    %668 = vmatpush1.bf16.msra.mxu0 0
    %669 = vmatprep.subr.bf16.mxu0 0
    %670 = vmatpush1.bf16.msra.mxu0 0
    %671 = vmatprep.subr.bf16.mxu0 0
    %672 = vmatpush1.bf16.msra.mxu0 %v655
    %673 = vmatprep.subr.bf16.mxu0 0
    %674 = vmatpush2.bf16.msra.mxu0 0
    %675 = vmatprep.subr.bf16.mxu0 0
    %676 = vmatpush2.bf16.msra.mxu0 0
    %677 = vmatprep.subr.bf16.mxu0 0
    %678 = vmatpush2.bf16.msra.mxu0 0
    %679 = vmatprep.subr.bf16.mxu0 0
    %680 = vmatpush2.bf16.msra.mxu0 0
    %681 = vmatprep.subr.bf16.mxu0 0
    %682 = vmatpush2.bf16.msra.mxu0 0
    %683 = vmatprep.subr.bf16.mxu0 0
    %684 = vmatpush2.bf16.msra.mxu0 0
    %685 = vmatprep.subr.bf16.mxu0 0
    %686 = vmatpush2.bf16.msra.mxu0 0
    %687 = vmatprep.subr.bf16.mxu0 0
    %688 = vmatpush2.bf16.msra.mxu0 0
    %689 = vmatprep.mubr.bf16.mxu0 0
    %690 = vmatmul.mubr.bf16.gmra.mxu0 %v651
    %v691 = vpop.f32.mrf.mxu0
    %v692 = vadd.f32 0.0, %v691
    %v693 = vpop.f32.mrf.mxu0
    %v694 = vpop.f32.mrf.mxu0
    %v695 = vpop.f32.mrf.mxu0
    %696 = vdwg.mxu0
    %v698 = vsel %vm85, %v647, 0
    %v701 = vsel %vm653, %v649, 0
    %703 = vmatprep.subr.bf16.mxu0 0
    %704 = vmatpush1.bf16.msra.mxu0 0
    %705 = vmatprep.subr.bf16.mxu0 0
    %706 = vmatpush1.bf16.msra.mxu0 0
    %707 = vmatprep.subr.bf16.mxu0 0
    %708 = vmatpush1.bf16.msra.mxu0 0
    %709 = vmatprep.subr.bf16.mxu0 0
    %710 = vmatpush1.bf16.msra.mxu0 0
    %711 = vmatprep.subr.bf16.mxu0 0
    %712 = vmatpush1.bf16.msra.mxu0 0
    %713 = vmatprep.subr.bf16.mxu0 0
    %714 = vmatpush1.bf16.msra.mxu0 0
    %715 = vmatprep.subr.bf16.mxu0 0
    %716 = vmatpush1.bf16.msra.mxu0 0
    %717 = vmatprep.subr.bf16.mxu0 0
    %718 = vmatpush1.bf16.msra.mxu0 %v701
    %719 = vmatprep.subr.bf16.mxu0 0
    %720 = vmatpush2.bf16.msra.mxu0 0
    %721 = vmatprep.subr.bf16.mxu0 0
    %722 = vmatpush2.bf16.msra.mxu0 0
    %723 = vmatprep.subr.bf16.mxu0 0
    %724 = vmatpush2.bf16.msra.mxu0 0
    %725 = vmatprep.subr.bf16.mxu0 0
    %726 = vmatpush2.bf16.msra.mxu0 0
    %727 = vmatprep.subr.bf16.mxu0 0
    %728 = vmatpush2.bf16.msra.mxu0 0
    %729 = vmatprep.subr.bf16.mxu0 0
    %730 = vmatpush2.bf16.msra.mxu0 0
    %731 = vmatprep.subr.bf16.mxu0 0
    %732 = vmatpush2.bf16.msra.mxu0 0
    %733 = vmatprep.subr.bf16.mxu0 0
    %734 = vmatpush2.bf16.msra.mxu0 0
    %735 = vmatprep.mubr.bf16.mxu0 0
    %736 = vmatmul.mubr.bf16.gmra.mxu0 %v698
    %v737 = vpop.f32.mrf.mxu0
    %v738 = vadd.f32 0.0, %v737
    %v739 = vpop.f32.mrf.mxu0
    %v740 = vpop.f32.mrf.mxu0
    %v741 = vpop.f32.mrf.mxu0
    %742 = vdwg.mxu0
    %v743 = vpack.c.bf16 %v738, %v692
    %v744 = vld [vmem:[%s6] sm:$0xf]
    %s745 = scalar_lea.vmem %s4, 16
    %v746 = vld [vmem:[%s745] sm:$0xf]
    %v747 = vld [vmem:[%s745 + $0x4] sm:$0xf]
    %v748 = vld [vmem:[%s745 + $0x8] sm:$0xf]
    %v749 = vld [vmem:[%s745 + $0xc] sm:$0xf]
    %s750 = scalar_lea.vmem %s5, 1
    %v751 = vld [vmem:[%s750] sm:$0x1]
    %v753 = vlaneseq
    %v754 = vshrl.u32 %v753, 7
    %v755 = vsub.s32 0, %v754
    %v756 = vrot.slane %v751, %v755
    %v762 = vunpack.c.l.b16 %v746
    %v763 = vunpack.c.l.b16 %v747
    %v764 = vunpack.c.l.b16 %v748
    %v765 = vunpack.c.l.b16 %v749
    %v766 = vpack.c.b16 %v763, %v762
    %v767 = vpack.c.b16 %v765, %v764
    %770 = vmatprep.subr.bf16.mxu0 0
    %771 = vmatpush1.bf16.msra.mxu0 0
    %772 = vmatprep.subr.bf16.mxu0 0
    %773 = vmatpush1.bf16.msra.mxu0 0
    %774 = vmatprep.subr.bf16.mxu0 0
    %775 = vmatpush1.bf16.msra.mxu0 0
    %776 = vmatprep.subr.bf16.mxu0 0
    %777 = vmatpush1.bf16.msra.mxu0 0
    %778 = vmatprep.subr.bf16.mxu0 0
    %779 = vmatpush1.bf16.msra.mxu0 0
    %780 = vmatprep.subr.bf16.mxu0 0
    %781 = vmatpush1.bf16.msra.mxu0 0
    %782 = vmatprep.subr.bf16.mxu0 0
    %783 = vmatpush1.bf16.msra.mxu0 %v767
    %784 = vmatprep.subr.bf16.mxu0 0
    %785 = vmatpush1.bf16.msra.mxu0 %v766
    %786 = vmatprep.subr.bf16.mxu0 0
    %787 = vmatpush2.bf16.msra.mxu0 0
    %788 = vmatprep.subr.bf16.mxu0 0
    %789 = vmatpush2.bf16.msra.mxu0 0
    %790 = vmatprep.subr.bf16.mxu0 0
    %791 = vmatpush2.bf16.msra.mxu0 0
    %792 = vmatprep.subr.bf16.mxu0 0
    %793 = vmatpush2.bf16.msra.mxu0 0
    %794 = vmatprep.subr.bf16.mxu0 0
    %795 = vmatpush2.bf16.msra.mxu0 0
    %796 = vmatprep.subr.bf16.mxu0 0
    %797 = vmatpush2.bf16.msra.mxu0 0
    %798 = vmatprep.subr.bf16.mxu0 0
    %799 = vmatpush2.bf16.msra.mxu0 0
    %800 = vmatprep.subr.bf16.mxu0 0
    %801 = vmatpush2.bf16.msra.mxu0 0
    %802 = vmatprep.mubr.bf16.mxu0 0
    %803 = vmatmul.mubr.bf16.gmra.mxu0 %v341
    %v804 = vpop.f32.mrf.mxu0
    %v805 = vadd.f32 %v756, %v804
    %v806 = vpop.f32.mrf.mxu0
    %v807 = vpop.f32.mrf.mxu0
    %v808 = vadd.f32 %v756, %v807
    %v809 = vpop.f32.mrf.mxu0
    %810 = vdwg.mxu0
    %s811 = scalar_lea.vmem %s4, 80
    %v812 = vld [vmem:[%s811] sm:$0xf]
    %v813 = vld [vmem:[%s811 + $0x4] sm:$0xf]
    %v814 = vld [vmem:[%s811 + $0x8] sm:$0xf]
    %v815 = vld [vmem:[%s811 + $0xc] sm:$0xf]
    %s816 = scalar_lea.vmem %s5, 5
    %v817 = vld [vmem:[%s816] sm:$0x1]
    %v819 = vlaneseq
    %v820 = vshrl.u32 %v819, 7
    %v821 = vsub.s32 0, %v820
    %v822 = vrot.slane %v817, %v821
    %v828 = vunpack.c.l.b16 %v812
    %v829 = vunpack.c.l.b16 %v813
    %v830 = vunpack.c.l.b16 %v814
    %v831 = vunpack.c.l.b16 %v815
    %v832 = vpack.c.b16 %v829, %v828
    %v833 = vpack.c.b16 %v831, %v830
    %836 = vmatprep.subr.bf16.mxu0 0
    %837 = vmatpush1.bf16.msra.mxu0 0
    %838 = vmatprep.subr.bf16.mxu0 0
    %839 = vmatpush1.bf16.msra.mxu0 0
    %840 = vmatprep.subr.bf16.mxu0 0
    %841 = vmatpush1.bf16.msra.mxu0 0
    %842 = vmatprep.subr.bf16.mxu0 0
    %843 = vmatpush1.bf16.msra.mxu0 0
    %844 = vmatprep.subr.bf16.mxu0 0
    %845 = vmatpush1.bf16.msra.mxu0 0
    %846 = vmatprep.subr.bf16.mxu0 0
    %847 = vmatpush1.bf16.msra.mxu0 0
    %848 = vmatprep.subr.bf16.mxu0 0
    %849 = vmatpush1.bf16.msra.mxu0 %v833
    %850 = vmatprep.subr.bf16.mxu0 0
    %851 = vmatpush1.bf16.msra.mxu0 %v832
    %852 = vmatprep.subr.bf16.mxu0 0
    %853 = vmatpush2.bf16.msra.mxu0 0
    %854 = vmatprep.subr.bf16.mxu0 0
    %855 = vmatpush2.bf16.msra.mxu0 0
    %856 = vmatprep.subr.bf16.mxu0 0
    %857 = vmatpush2.bf16.msra.mxu0 0
    %858 = vmatprep.subr.bf16.mxu0 0
    %859 = vmatpush2.bf16.msra.mxu0 0
    %860 = vmatprep.subr.bf16.mxu0 0
    %861 = vmatpush2.bf16.msra.mxu0 0
    %862 = vmatprep.subr.bf16.mxu0 0
    %863 = vmatpush2.bf16.msra.mxu0 0
    %864 = vmatprep.subr.bf16.mxu0 0
    %865 = vmatpush2.bf16.msra.mxu0 0
    %866 = vmatprep.subr.bf16.mxu0 0
    %867 = vmatpush2.bf16.msra.mxu0 0
    %868 = vmatprep.mubr.bf16.mxu0 0
    %869 = vmatmul.mubr.bf16.gmra.mxu0 %v341
    %v870 = vpop.f32.mrf.mxu0
    %v871 = vadd.f32 %v822, %v870
    %v872 = vpop.f32.mrf.mxu0
    %v873 = vpop.f32.mrf.mxu0
    %v874 = vadd.f32 %v822, %v873
    %v875 = vpop.f32.mrf.mxu0
    %876 = vdwg.mxu0
    %s877 = scalar_lea.vmem %s4, 144
    %v878 = vld [vmem:[%s877] sm:$0xf]
    %v879 = vld [vmem:[%s877 + $0x4] sm:$0xf]
    %v880 = vld [vmem:[%s877 + $0x8] sm:$0xf]
    %v881 = vld [vmem:[%s877 + $0xc] sm:$0xf]
    %s882 = scalar_lea.vmem %s5, 9
    %v883 = vld [vmem:[%s882] sm:$0x1]
    %v885 = vlaneseq
    %v886 = vshrl.u32 %v885, 7
    %v887 = vsub.s32 0, %v886
    %v888 = vrot.slane %v883, %v887
    %v894 = vunpack.c.l.b16 %v878
    %v895 = vunpack.c.l.b16 %v879
    %v896 = vunpack.c.l.b16 %v880
    %v897 = vunpack.c.l.b16 %v881
    %v898 = vpack.c.b16 %v895, %v894
    %v899 = vpack.c.b16 %v897, %v896
    %902 = vmatprep.subr.bf16.mxu0 0
    %903 = vmatpush1.bf16.msra.mxu0 0
    %904 = vmatprep.subr.bf16.mxu0 0
    %905 = vmatpush1.bf16.msra.mxu0 0
    %906 = vmatprep.subr.bf16.mxu0 0
    %907 = vmatpush1.bf16.msra.mxu0 0
    %908 = vmatprep.subr.bf16.mxu0 0
    %909 = vmatpush1.bf16.msra.mxu0 0
    %910 = vmatprep.subr.bf16.mxu0 0
    %911 = vmatpush1.bf16.msra.mxu0 0
    %912 = vmatprep.subr.bf16.mxu0 0
    %913 = vmatpush1.bf16.msra.mxu0 0
    %914 = vmatprep.subr.bf16.mxu0 0
    %915 = vmatpush1.bf16.msra.mxu0 %v899
    %916 = vmatprep.subr.bf16.mxu0 0
    %917 = vmatpush1.bf16.msra.mxu0 %v898
    %918 = vmatprep.subr.bf16.mxu0 0
    %919 = vmatpush2.bf16.msra.mxu0 0
    %920 = vmatprep.subr.bf16.mxu0 0
    %921 = vmatpush2.bf16.msra.mxu0 0
    %922 = vmatprep.subr.bf16.mxu0 0
    %923 = vmatpush2.bf16.msra.mxu0 0
    %924 = vmatprep.subr.bf16.mxu0 0
    %925 = vmatpush2.bf16.msra.mxu0 0
    %926 = vmatprep.subr.bf16.mxu0 0
    %927 = vmatpush2.bf16.msra.mxu0 0
    %928 = vmatprep.subr.bf16.mxu0 0
    %929 = vmatpush2.bf16.msra.mxu0 0
    %930 = vmatprep.subr.bf16.mxu0 0
    %931 = vmatpush2.bf16.msra.mxu0 0
    %932 = vmatprep.subr.bf16.mxu0 0
    %933 = vmatpush2.bf16.msra.mxu0 0
    %934 = vmatprep.mubr.bf16.mxu0 0
    %935 = vmatmul.mubr.bf16.gmra.mxu0 %v341
    %v936 = vpop.f32.mrf.mxu0
    %v937 = vadd.f32 %v888, %v936
    %v938 = vpop.f32.mrf.mxu0
    %v939 = vpop.f32.mrf.mxu0
    %v940 = vadd.f32 %v888, %v939
    %v941 = vpop.f32.mrf.mxu0
    %942 = vdwg.mxu0
    %v943 = vpack.c.bf16 %v805, %v805
    %v944 = vpack.c.bf16 %v808, %v808
    %v945 = vpack.c.bf16 %v871, %v871
    %v946 = vpack.c.bf16 %v874, %v874
    %v948 = vsel %vm85, %v943, 0
    %v951 = vsel %vm85, %v945, 0
    %953 = vmatprep.subr.bf16.mxu0 0
    %954 = vmatpush1.bf16.xpose.msra.mxu0 0
    %955 = vmatprep.subr.bf16.mxu0 0
    %956 = vmatpush1.bf16.xpose.msra.mxu0 0
    %957 = vmatprep.subr.bf16.mxu0 0
    %958 = vmatpush1.bf16.xpose.msra.mxu0 0
    %959 = vmatprep.subr.bf16.mxu0 0
    %960 = vmatpush1.bf16.xpose.msra.mxu0 0
    %961 = vmatprep.subr.bf16.mxu0 0
    %962 = vmatpush1.bf16.xpose.msra.mxu0 0
    %963 = vmatprep.subr.bf16.mxu0 0
    %964 = vmatpush1.bf16.xpose.msra.mxu0 0
    %965 = vmatprep.subr.bf16.mxu0 0
    %966 = vmatpush1.bf16.xpose.msra.mxu0 0
    %967 = vmatprep.subr.bf16.mxu0 0
    %968 = vmatpush1.bf16.xpose.msra.mxu0 %v951
    %969 = vmatprep.subr.bf16.mxu0 0
    %970 = vmatpush2.bf16.xpose.msra.mxu0 0
    %971 = vmatprep.subr.bf16.mxu0 0
    %972 = vmatpush2.bf16.xpose.msra.mxu0 0
    %973 = vmatprep.subr.bf16.mxu0 0
    %974 = vmatpush2.bf16.xpose.msra.mxu0 0
    %975 = vmatprep.subr.bf16.mxu0 0
    %976 = vmatpush2.bf16.xpose.msra.mxu0 0
    %977 = vmatprep.subr.bf16.mxu0 0
    %978 = vmatpush2.bf16.xpose.msra.mxu0 0
    %979 = vmatprep.subr.bf16.mxu0 0
    %980 = vmatpush2.bf16.xpose.msra.mxu0 0
    %981 = vmatprep.subr.bf16.mxu0 0
    %982 = vmatpush2.bf16.xpose.msra.mxu0 0
    %983 = vmatprep.subr.bf16.mxu0 0
    %984 = vmatpush2.bf16.xpose.msra.mxu0 0
    %985 = vmatprep.mubr.bf16.mxu0 0
    %986 = vmatmul.mubr.bf16.gmra.mxu0 %v948
    %v987 = vpop.f32.mrf.mxu0
    %v988 = vadd.f32 %v525, %v987
    %v989 = vpop.f32.mrf.mxu0
    %v990 = vpop.f32.mrf.mxu0
    %v991 = vpop.f32.mrf.mxu0
    %992 = vdwg.mxu0
    %v994 = vsel %vm85, %v944, 0
    %v997 = vsel %vm85, %v946, 0
    %999 = vmatprep.subr.bf16.mxu0 0
    %1000 = vmatpush1.bf16.xpose.msra.mxu0 0
    %1001 = vmatprep.subr.bf16.mxu0 0
    %1002 = vmatpush1.bf16.xpose.msra.mxu0 0
    %1003 = vmatprep.subr.bf16.mxu0 0
    %1004 = vmatpush1.bf16.xpose.msra.mxu0 0
    %1005 = vmatprep.subr.bf16.mxu0 0
    %1006 = vmatpush1.bf16.xpose.msra.mxu0 0
    %1007 = vmatprep.subr.bf16.mxu0 0
    %1008 = vmatpush1.bf16.xpose.msra.mxu0 0
    %1009 = vmatprep.subr.bf16.mxu0 0
    %1010 = vmatpush1.bf16.xpose.msra.mxu0 0
    %1011 = vmatprep.subr.bf16.mxu0 0
    %1012 = vmatpush1.bf16.xpose.msra.mxu0 0
    %1013 = vmatprep.subr.bf16.mxu0 0
    %1014 = vmatpush1.bf16.xpose.msra.mxu0 %v997
    %1015 = vmatprep.subr.bf16.mxu0 0
    %1016 = vmatpush2.bf16.xpose.msra.mxu0 0
    %1017 = vmatprep.subr.bf16.mxu0 0
    %1018 = vmatpush2.bf16.xpose.msra.mxu0 0
    %1019 = vmatprep.subr.bf16.mxu0 0
    %1020 = vmatpush2.bf16.xpose.msra.mxu0 0
    %1021 = vmatprep.subr.bf16.mxu0 0
    %1022 = vmatpush2.bf16.xpose.msra.mxu0 0
    %1023 = vmatprep.subr.bf16.mxu0 0
    %1024 = vmatpush2.bf16.xpose.msra.mxu0 0
    %1025 = vmatprep.subr.bf16.mxu0 0
    %1026 = vmatpush2.bf16.xpose.msra.mxu0 0
    %1027 = vmatprep.subr.bf16.mxu0 0
    %1028 = vmatpush2.bf16.xpose.msra.mxu0 0
    %1029 = vmatprep.subr.bf16.mxu0 0
    %1030 = vmatpush2.bf16.xpose.msra.mxu0 0
    %1031 = vmatprep.mubr.bf16.mxu0 0
    %1032 = vmatmul.mubr.bf16.gmra.mxu0 %v994
    %v1033 = vpop.f32.mrf.mxu0
    %v1034 = vadd.f32 %v529, %v1033
    %v1035 = vpop.f32.mrf.mxu0
    %v1036 = vpop.f32.mrf.mxu0
    %v1037 = vpop.f32.mrf.mxu0
    %1038 = vdwg.mxu0
    %v1039 = vsel %vm85, %v988, -inf
    %1040 = vmax.xlane.f32.xlu0 %v1039
    %v1041 = vpop.xlane.xlu0 %1040
    %v1042 = vsel %vm85, %v1034, -inf
    %1043 = vmax.xlane.f32.xlu0 %v1042
    %v1044 = vpop.xlane.xlu0 %1043
    %v1045 = vsub.f32 %v988, %v1041
    %v1046 = vsub.f32 %v1034, %v1044
    %v1047 = vmul.f32 %v1045, 1.442695
    %v1048 = vpow.pop %v1047
    %v1049 = vmul.f32 %v1046, 1.442695
    %v1050 = vpow.pop %v1049
    %v1051 = vsel %vm85, %v1048, 0.0
    %1052 = vadd.xlane.f32.xlu0 %v1051
    %v1053 = vpop.xlane.xlu0 %1052
    %v1054 = vsel %vm85, %v1050, 0.0
    %1055 = vadd.xlane.f32.xlu0 %v1054
    %v1056 = vpop.xlane.xlu0 %1055
    %v1057 = vrcp.pop %v1053
    %v1058 = vrcp.pop %v1056
    %v1059 = vmul.f32 %v1048, %v1057
    %v1060 = vmul.f32 %v1050, %v1058
    %v1061 = vpack.c.bf16 %v1059, %v1059
    %v1062 = vpack.c.bf16 %v1060, %v1060
    %v1063 = vpack.c.bf16 %v937, %v937
    %v1064 = vpack.c.bf16 %v940, %v940
    %v1066 = vsel %vm85, %v1061, 0
    %v1069 = vsel %vm653, %v1063, 0
    %1071 = vmatprep.subr.bf16.mxu0 0
    %1072 = vmatpush1.bf16.msra.mxu0 0
    %1073 = vmatprep.subr.bf16.mxu0 0
    %1074 = vmatpush1.bf16.msra.mxu0 0
    %1075 = vmatprep.subr.bf16.mxu0 0
    %1076 = vmatpush1.bf16.msra.mxu0 0
    %1077 = vmatprep.subr.bf16.mxu0 0
    %1078 = vmatpush1.bf16.msra.mxu0 0
    %1079 = vmatprep.subr.bf16.mxu0 0
    %1080 = vmatpush1.bf16.msra.mxu0 0
    %1081 = vmatprep.subr.bf16.mxu0 0
    %1082 = vmatpush1.bf16.msra.mxu0 0
    %1083 = vmatprep.subr.bf16.mxu0 0
    %1084 = vmatpush1.bf16.msra.mxu0 0
    %1085 = vmatprep.subr.bf16.mxu0 0
    %1086 = vmatpush1.bf16.msra.mxu0 %v1069
    %1087 = vmatprep.subr.bf16.mxu0 0
    %1088 = vmatpush2.bf16.msra.mxu0 0
    %1089 = vmatprep.subr.bf16.mxu0 0
    %1090 = vmatpush2.bf16.msra.mxu0 0
    %1091 = vmatprep.subr.bf16.mxu0 0
    %1092 = vmatpush2.bf16.msra.mxu0 0
    %1093 = vmatprep.subr.bf16.mxu0 0
    %1094 = vmatpush2.bf16.msra.mxu0 0
    %1095 = vmatprep.subr.bf16.mxu0 0
    %1096 = vmatpush2.bf16.msra.mxu0 0
    %1097 = vmatprep.subr.bf16.mxu0 0
    %1098 = vmatpush2.bf16.msra.mxu0 0
    %1099 = vmatprep.subr.bf16.mxu0 0
    %1100 = vmatpush2.bf16.msra.mxu0 0
    %1101 = vmatprep.subr.bf16.mxu0 0
    %1102 = vmatpush2.bf16.msra.mxu0 0
    %1103 = vmatprep.mubr.bf16.mxu0 0
    %1104 = vmatmul.mubr.bf16.gmra.mxu0 %v1066
    %v1105 = vpop.f32.mrf.mxu0
    %v1106 = vadd.f32 0.0, %v1105
    %v1107 = vpop.f32.mrf.mxu0
    %v1108 = vpop.f32.mrf.mxu0
    %v1109 = vpop.f32.mrf.mxu0
    %1110 = vdwg.mxu0
    %v1112 = vsel %vm85, %v1062, 0
    %v1115 = vsel %vm653, %v1064, 0
    %1117 = vmatprep.subr.bf16.mxu0 0
    %1118 = vmatpush1.bf16.msra.mxu0 0
    %1119 = vmatprep.subr.bf16.mxu0 0
    %1120 = vmatpush1.bf16.msra.mxu0 0
    %1121 = vmatprep.subr.bf16.mxu0 0
    %1122 = vmatpush1.bf16.msra.mxu0 0
    %1123 = vmatprep.subr.bf16.mxu0 0
    %1124 = vmatpush1.bf16.msra.mxu0 0
    %1125 = vmatprep.subr.bf16.mxu0 0
    %1126 = vmatpush1.bf16.msra.mxu0 0
    %1127 = vmatprep.subr.bf16.mxu0 0
    %1128 = vmatpush1.bf16.msra.mxu0 0
    %1129 = vmatprep.subr.bf16.mxu0 0
    %1130 = vmatpush1.bf16.msra.mxu0 0
    %1131 = vmatprep.subr.bf16.mxu0 0
    %1132 = vmatpush1.bf16.msra.mxu0 %v1115
    %1133 = vmatprep.subr.bf16.mxu0 0
    %1134 = vmatpush2.bf16.msra.mxu0 0
    %1135 = vmatprep.subr.bf16.mxu0 0
    %1136 = vmatpush2.bf16.msra.mxu0 0
    %1137 = vmatprep.subr.bf16.mxu0 0
    %1138 = vmatpush2.bf16.msra.mxu0 0
    %1139 = vmatprep.subr.bf16.mxu0 0
    %1140 = vmatpush2.bf16.msra.mxu0 0
    %1141 = vmatprep.subr.bf16.mxu0 0
    %1142 = vmatpush2.bf16.msra.mxu0 0
    %1143 = vmatprep.subr.bf16.mxu0 0
    %1144 = vmatpush2.bf16.msra.mxu0 0
    %1145 = vmatprep.subr.bf16.mxu0 0
    %1146 = vmatpush2.bf16.msra.mxu0 0
    %1147 = vmatprep.subr.bf16.mxu0 0
    %1148 = vmatpush2.bf16.msra.mxu0 0
    %1149 = vmatprep.mubr.bf16.mxu0 0
    %1150 = vmatmul.mubr.bf16.gmra.mxu0 %v1112
    %v1151 = vpop.f32.mrf.mxu0
    %v1152 = vadd.f32 0.0, %v1151
    %v1153 = vpop.f32.mrf.mxu0
    %v1154 = vpop.f32.mrf.mxu0
    %v1155 = vpop.f32.mrf.mxu0
    %1156 = vdwg.mxu0
    %v1157 = vpack.c.bf16 %v1152, %v1106
    %s1158 = scalar_lea.vmem %s6, 4
    %v1159 = vld [vmem:[%s1158] sm:$0xf]
    %v1161 = vsel %vm85, %v1157, 0
    %v1164 = vsel %vm653, %v1159, 0
    %1166 = vmatprep.subr.bf16.mxu0 0
    %1167 = vmatpush1.bf16.msra.mxu0 0
    %1168 = vmatprep.subr.bf16.mxu0 0
    %1169 = vmatpush1.bf16.msra.mxu0 0
    %1170 = vmatprep.subr.bf16.mxu0 0
    %1171 = vmatpush1.bf16.msra.mxu0 0
    %1172 = vmatprep.subr.bf16.mxu0 0
    %1173 = vmatpush1.bf16.msra.mxu0 0
    %1174 = vmatprep.subr.bf16.mxu0 0
    %1175 = vmatpush1.bf16.msra.mxu0 0
    %1176 = vmatprep.subr.bf16.mxu0 0
    %1177 = vmatpush1.bf16.msra.mxu0 0
    %1178 = vmatprep.subr.bf16.mxu0 0
    %1179 = vmatpush1.bf16.msra.mxu0 0
    %1180 = vmatprep.subr.bf16.mxu0 0
    %1181 = vmatpush1.bf16.msra.mxu0 %v1164
    %1182 = vmatprep.subr.bf16.mxu0 0
    %1183 = vmatpush2.bf16.msra.mxu0 0
    %1184 = vmatprep.subr.bf16.mxu0 0
    %1185 = vmatpush2.bf16.msra.mxu0 0
    %1186 = vmatprep.subr.bf16.mxu0 0
    %1187 = vmatpush2.bf16.msra.mxu0 0
    %1188 = vmatprep.subr.bf16.mxu0 0
    %1189 = vmatpush2.bf16.msra.mxu0 0
    %1190 = vmatprep.subr.bf16.mxu0 0
    %1191 = vmatpush2.bf16.msra.mxu0 0
    %1192 = vmatprep.subr.bf16.mxu0 0
    %1193 = vmatpush2.bf16.msra.mxu0 0
    %1194 = vmatprep.subr.bf16.mxu0 0
    %1195 = vmatpush2.bf16.msra.mxu0 0
    %1196 = vmatprep.subr.bf16.mxu0 0
    %1197 = vmatpush2.bf16.msra.mxu0 0
    %1198 = vmatprep.mubr.bf16.mxu0 0
    %1199 = vmatmul.mubr.bf16.gmra.mxu0 %v1161
    %v1200 = vpop.f32.mrf.mxu0
    %v1201 = vadd.f32 0.0, %v1200
    %v1202 = vpop.f32.mrf.mxu0
    %v1203 = vpop.f32.mrf.mxu0
    %v1204 = vadd.f32 0.0, %v1203
    %v1205 = vpop.f32.mrf.mxu0
    %1206 = vdwg.mxu0
    %v1208 = vsel %vm85, %v743, 0
    %v1211 = vsel %vm653, %v744, 0
    %1213 = vmatprep.subr.bf16.mxu0 0
    %1214 = vmatpush1.bf16.msra.mxu0 0
    %1215 = vmatprep.subr.bf16.mxu0 0
    %1216 = vmatpush1.bf16.msra.mxu0 0
    %1217 = vmatprep.subr.bf16.mxu0 0
    %1218 = vmatpush1.bf16.msra.mxu0 0
    %1219 = vmatprep.subr.bf16.mxu0 0
    %1220 = vmatpush1.bf16.msra.mxu0 0
    %1221 = vmatprep.subr.bf16.mxu0 0
    %1222 = vmatpush1.bf16.msra.mxu0 0
    %1223 = vmatprep.subr.bf16.mxu0 0
    %1224 = vmatpush1.bf16.msra.mxu0 0
    %1225 = vmatprep.subr.bf16.mxu0 0
    %1226 = vmatpush1.bf16.msra.mxu0 0
    %1227 = vmatprep.subr.bf16.mxu0 0
    %1228 = vmatpush1.bf16.msra.mxu0 %v1211
    %1229 = vmatprep.subr.bf16.mxu0 0
    %1230 = vmatpush2.bf16.msra.mxu0 0
    %1231 = vmatprep.subr.bf16.mxu0 0
    %1232 = vmatpush2.bf16.msra.mxu0 0
    %1233 = vmatprep.subr.bf16.mxu0 0
    %1234 = vmatpush2.bf16.msra.mxu0 0
    %1235 = vmatprep.subr.bf16.mxu0 0
    %1236 = vmatpush2.bf16.msra.mxu0 0
    %1237 = vmatprep.subr.bf16.mxu0 0
    %1238 = vmatpush2.bf16.msra.mxu0 0
    %1239 = vmatprep.subr.bf16.mxu0 0
    %1240 = vmatpush2.bf16.msra.mxu0 0
    %1241 = vmatprep.subr.bf16.mxu0 0
    %1242 = vmatpush2.bf16.msra.mxu0 0
    %1243 = vmatprep.subr.bf16.mxu0 0
    %1244 = vmatpush2.bf16.msra.mxu0 0
    %1245 = vmatprep.mubr.bf16.mxu0 0
    %1246 = vmatmul.mubr.bf16.gmra.mxu0 %v1208
    %v1247 = vpop.f32.mrf.mxu0
    %v1248 = vadd.f32 %v1201, %v1247
    %v1249 = vpop.f32.mrf.mxu0
    %v1250 = vpop.f32.mrf.mxu0
    %v1251 = vadd.f32 %v1204, %v1250
    %v1252 = vpop.f32.mrf.mxu0
    %1253 = vdwg.mxu0
    %s1254 = scalar_lea.vmem %s4, 32
    %v1255 = vld [vmem:[%s1254] sm:$0xf]
    %v1256 = vld [vmem:[%s1254 + $0x4] sm:$0xf]
    %v1257 = vld [vmem:[%s1254 + $0x8] sm:$0xf]
    %v1258 = vld [vmem:[%s1254 + $0xc] sm:$0xf]
    %s1259 = scalar_lea.vmem %s5, 2
    %v1260 = vld [vmem:[%s1259] sm:$0x1]
    %v1262 = vlaneseq
    %v1263 = vshrl.u32 %v1262, 7
    %v1264 = vsub.s32 0, %v1263
    %v1265 = vrot.slane %v1260, %v1264
    %v1271 = vunpack.c.l.b16 %v1255
    %v1272 = vunpack.c.l.b16 %v1256
    %v1273 = vunpack.c.l.b16 %v1257
    %v1274 = vunpack.c.l.b16 %v1258
    %v1275 = vpack.c.b16 %v1272, %v1271
    %v1276 = vpack.c.b16 %v1274, %v1273
    %1279 = vmatprep.subr.bf16.mxu0 0
    %1280 = vmatpush1.bf16.msra.mxu0 0
    %1281 = vmatprep.subr.bf16.mxu0 0
    %1282 = vmatpush1.bf16.msra.mxu0 0
    %1283 = vmatprep.subr.bf16.mxu0 0
    %1284 = vmatpush1.bf16.msra.mxu0 0
    %1285 = vmatprep.subr.bf16.mxu0 0
    %1286 = vmatpush1.bf16.msra.mxu0 0
    %1287 = vmatprep.subr.bf16.mxu0 0
    %1288 = vmatpush1.bf16.msra.mxu0 0
    %1289 = vmatprep.subr.bf16.mxu0 0
    %1290 = vmatpush1.bf16.msra.mxu0 0
    %1291 = vmatprep.subr.bf16.mxu0 0
    %1292 = vmatpush1.bf16.msra.mxu0 %v1276
    %1293 = vmatprep.subr.bf16.mxu0 0
    %1294 = vmatpush1.bf16.msra.mxu0 %v1275
    %1295 = vmatprep.subr.bf16.mxu0 0
    %1296 = vmatpush2.bf16.msra.mxu0 0
    %1297 = vmatprep.subr.bf16.mxu0 0
    %1298 = vmatpush2.bf16.msra.mxu0 0
    %1299 = vmatprep.subr.bf16.mxu0 0
    %1300 = vmatpush2.bf16.msra.mxu0 0
    %1301 = vmatprep.subr.bf16.mxu0 0
    %1302 = vmatpush2.bf16.msra.mxu0 0
    %1303 = vmatprep.subr.bf16.mxu0 0
    %1304 = vmatpush2.bf16.msra.mxu0 0
    %1305 = vmatprep.subr.bf16.mxu0 0
    %1306 = vmatpush2.bf16.msra.mxu0 0
    %1307 = vmatprep.subr.bf16.mxu0 0
    %1308 = vmatpush2.bf16.msra.mxu0 0
    %1309 = vmatprep.subr.bf16.mxu0 0
    %1310 = vmatpush2.bf16.msra.mxu0 0
    %1311 = vmatprep.mubr.bf16.mxu0 0
    %1312 = vmatmul.mubr.bf16.gmra.mxu0 %v341
    %v1313 = vpop.f32.mrf.mxu0
    %v1314 = vadd.f32 %v1265, %v1313
    %v1315 = vpop.f32.mrf.mxu0
    %v1316 = vpop.f32.mrf.mxu0
    %v1317 = vadd.f32 %v1265, %v1316
    %v1318 = vpop.f32.mrf.mxu0
    %1319 = vdwg.mxu0
    %s1320 = scalar_lea.vmem %s4, 96
    %v1321 = vld [vmem:[%s1320] sm:$0xf]
    %v1322 = vld [vmem:[%s1320 + $0x4] sm:$0xf]
    %v1323 = vld [vmem:[%s1320 + $0x8] sm:$0xf]
    %v1324 = vld [vmem:[%s1320 + $0xc] sm:$0xf]
    %s1325 = scalar_lea.vmem %s5, 6
    %v1326 = vld [vmem:[%s1325] sm:$0x1]
    %v1328 = vlaneseq
    %v1329 = vshrl.u32 %v1328, 7
    %v1330 = vsub.s32 0, %v1329
    %v1331 = vrot.slane %v1326, %v1330
    %v1337 = vunpack.c.l.b16 %v1321
    %v1338 = vunpack.c.l.b16 %v1322
    %v1339 = vunpack.c.l.b16 %v1323
    %v1340 = vunpack.c.l.b16 %v1324
    %v1341 = vpack.c.b16 %v1338, %v1337
    %v1342 = vpack.c.b16 %v1340, %v1339
    %1345 = vmatprep.subr.bf16.mxu0 0
    %1346 = vmatpush1.bf16.msra.mxu0 0
    %1347 = vmatprep.subr.bf16.mxu0 0
    %1348 = vmatpush1.bf16.msra.mxu0 0
    %1349 = vmatprep.subr.bf16.mxu0 0
    %1350 = vmatpush1.bf16.msra.mxu0 0
    %1351 = vmatprep.subr.bf16.mxu0 0
    %1352 = vmatpush1.bf16.msra.mxu0 0
    %1353 = vmatprep.subr.bf16.mxu0 0
    %1354 = vmatpush1.bf16.msra.mxu0 0
    %1355 = vmatprep.subr.bf16.mxu0 0
    %1356 = vmatpush1.bf16.msra.mxu0 0
    %1357 = vmatprep.subr.bf16.mxu0 0
    %1358 = vmatpush1.bf16.msra.mxu0 %v1342
    %1359 = vmatprep.subr.bf16.mxu0 0
    %1360 = vmatpush1.bf16.msra.mxu0 %v1341
    %1361 = vmatprep.subr.bf16.mxu0 0
    %1362 = vmatpush2.bf16.msra.mxu0 0
    %1363 = vmatprep.subr.bf16.mxu0 0
    %1364 = vmatpush2.bf16.msra.mxu0 0
    %1365 = vmatprep.subr.bf16.mxu0 0
    %1366 = vmatpush2.bf16.msra.mxu0 0
    %1367 = vmatprep.subr.bf16.mxu0 0
    %1368 = vmatpush2.bf16.msra.mxu0 0
    %1369 = vmatprep.subr.bf16.mxu0 0
    %1370 = vmatpush2.bf16.msra.mxu0 0
    %1371 = vmatprep.subr.bf16.mxu0 0
    %1372 = vmatpush2.bf16.msra.mxu0 0
    %1373 = vmatprep.subr.bf16.mxu0 0
    %1374 = vmatpush2.bf16.msra.mxu0 0
    %1375 = vmatprep.subr.bf16.mxu0 0
    %1376 = vmatpush2.bf16.msra.mxu0 0
    %1377 = vmatprep.mubr.bf16.mxu0 0
    %1378 = vmatmul.mubr.bf16.gmra.mxu0 %v341
    %v1379 = vpop.f32.mrf.mxu0
    %v1380 = vadd.f32 %v1331, %v1379
    %v1381 = vpop.f32.mrf.mxu0
    %v1382 = vpop.f32.mrf.mxu0
    %v1383 = vadd.f32 %v1331, %v1382
    %v1384 = vpop.f32.mrf.mxu0
    %1385 = vdwg.mxu0
    %s1386 = scalar_lea.vmem %s4, 160
    %v1387 = vld [vmem:[%s1386] sm:$0xf]
    %v1388 = vld [vmem:[%s1386 + $0x4] sm:$0xf]
    %v1389 = vld [vmem:[%s1386 + $0x8] sm:$0xf]
    %v1390 = vld [vmem:[%s1386 + $0xc] sm:$0xf]
    %s1391 = scalar_lea.vmem %s5, 10
    %v1392 = vld [vmem:[%s1391] sm:$0x1]
    %v1394 = vlaneseq
    %v1395 = vshrl.u32 %v1394, 7
    %v1396 = vsub.s32 0, %v1395
    %v1397 = vrot.slane %v1392, %v1396
    %v1403 = vunpack.c.l.b16 %v1387
    %v1404 = vunpack.c.l.b16 %v1388
    %v1405 = vunpack.c.l.b16 %v1389
    %v1406 = vunpack.c.l.b16 %v1390
    %v1407 = vpack.c.b16 %v1404, %v1403
    %v1408 = vpack.c.b16 %v1406, %v1405
    %1411 = vmatprep.subr.bf16.mxu0 0
    %1412 = vmatpush1.bf16.msra.mxu0 0
    %1413 = vmatprep.subr.bf16.mxu0 0
    %1414 = vmatpush1.bf16.msra.mxu0 0
    %1415 = vmatprep.subr.bf16.mxu0 0
    %1416 = vmatpush1.bf16.msra.mxu0 0
    %1417 = vmatprep.subr.bf16.mxu0 0
    %1418 = vmatpush1.bf16.msra.mxu0 0
    %1419 = vmatprep.subr.bf16.mxu0 0
    %1420 = vmatpush1.bf16.msra.mxu0 0
    %1421 = vmatprep.subr.bf16.mxu0 0
    %1422 = vmatpush1.bf16.msra.mxu0 0
    %1423 = vmatprep.subr.bf16.mxu0 0
    %1424 = vmatpush1.bf16.msra.mxu0 %v1408
    %1425 = vmatprep.subr.bf16.mxu0 0
    %1426 = vmatpush1.bf16.msra.mxu0 %v1407
    %1427 = vmatprep.subr.bf16.mxu0 0
    %1428 = vmatpush2.bf16.msra.mxu0 0
    %1429 = vmatprep.subr.bf16.mxu0 0
    %1430 = vmatpush2.bf16.msra.mxu0 0
    %1431 = vmatprep.subr.bf16.mxu0 0
    %1432 = vmatpush2.bf16.msra.mxu0 0
    %1433 = vmatprep.subr.bf16.mxu0 0
    %1434 = vmatpush2.bf16.msra.mxu0 0
    %1435 = vmatprep.subr.bf16.mxu0 0
    %1436 = vmatpush2.bf16.msra.mxu0 0
    %1437 = vmatprep.subr.bf16.mxu0 0
    %1438 = vmatpush2.bf16.msra.mxu0 0
    %1439 = vmatprep.subr.bf16.mxu0 0
    %1440 = vmatpush2.bf16.msra.mxu0 0
    %1441 = vmatprep.subr.bf16.mxu0 0
    %1442 = vmatpush2.bf16.msra.mxu0 0
    %1443 = vmatprep.mubr.bf16.mxu0 0
    %1444 = vmatmul.mubr.bf16.gmra.mxu0 %v341
    %v1445 = vpop.f32.mrf.mxu0
    %v1446 = vadd.f32 %v1397, %v1445
    %v1447 = vpop.f32.mrf.mxu0
    %v1448 = vpop.f32.mrf.mxu0
    %v1449 = vadd.f32 %v1397, %v1448
    %v1450 = vpop.f32.mrf.mxu0
    %1451 = vdwg.mxu0
    %v1452 = vpack.c.bf16 %v1314, %v1314
    %v1453 = vpack.c.bf16 %v1317, %v1317
    %v1454 = vpack.c.bf16 %v1380, %v1380
    %v1455 = vpack.c.bf16 %v1383, %v1383
    %v1457 = vsel %vm85, %v1452, 0
    %v1460 = vsel %vm85, %v1454, 0
    %1462 = vmatprep.subr.bf16.mxu0 0
    %1463 = vmatpush1.bf16.xpose.msra.mxu0 0
    %1464 = vmatprep.subr.bf16.mxu0 0
    %1465 = vmatpush1.bf16.xpose.msra.mxu0 0
    %1466 = vmatprep.subr.bf16.mxu0 0
    %1467 = vmatpush1.bf16.xpose.msra.mxu0 0
    %1468 = vmatprep.subr.bf16.mxu0 0
    %1469 = vmatpush1.bf16.xpose.msra.mxu0 0
    %1470 = vmatprep.subr.bf16.mxu0 0
    %1471 = vmatpush1.bf16.xpose.msra.mxu0 0
    %1472 = vmatprep.subr.bf16.mxu0 0
    %1473 = vmatpush1.bf16.xpose.msra.mxu0 0
    %1474 = vmatprep.subr.bf16.mxu0 0
    %1475 = vmatpush1.bf16.xpose.msra.mxu0 0
    %1476 = vmatprep.subr.bf16.mxu0 0
    %1477 = vmatpush1.bf16.xpose.msra.mxu0 %v1460
    %1478 = vmatprep.subr.bf16.mxu0 0
    %1479 = vmatpush2.bf16.xpose.msra.mxu0 0
    %1480 = vmatprep.subr.bf16.mxu0 0
    %1481 = vmatpush2.bf16.xpose.msra.mxu0 0
    %1482 = vmatprep.subr.bf16.mxu0 0
    %1483 = vmatpush2.bf16.xpose.msra.mxu0 0
    %1484 = vmatprep.subr.bf16.mxu0 0
    %1485 = vmatpush2.bf16.xpose.msra.mxu0 0
    %1486 = vmatprep.subr.bf16.mxu0 0
    %1487 = vmatpush2.bf16.xpose.msra.mxu0 0
    %1488 = vmatprep.subr.bf16.mxu0 0
    %1489 = vmatpush2.bf16.xpose.msra.mxu0 0
    %1490 = vmatprep.subr.bf16.mxu0 0
    %1491 = vmatpush2.bf16.xpose.msra.mxu0 0
    %1492 = vmatprep.subr.bf16.mxu0 0
    %1493 = vmatpush2.bf16.xpose.msra.mxu0 0
    %1494 = vmatprep.mubr.bf16.mxu0 0
    %1495 = vmatmul.mubr.bf16.gmra.mxu0 %v1457
    %v1496 = vpop.f32.mrf.mxu0
    %v1497 = vadd.f32 %v525, %v1496
    %v1498 = vpop.f32.mrf.mxu0
    %v1499 = vpop.f32.mrf.mxu0
    %v1500 = vpop.f32.mrf.mxu0
    %1501 = vdwg.mxu0
    %v1503 = vsel %vm85, %v1453, 0
    %v1506 = vsel %vm85, %v1455, 0
    %1508 = vmatprep.subr.bf16.mxu0 0
    %1509 = vmatpush1.bf16.xpose.msra.mxu0 0
    %1510 = vmatprep.subr.bf16.mxu0 0
    %1511 = vmatpush1.bf16.xpose.msra.mxu0 0
    %1512 = vmatprep.subr.bf16.mxu0 0
    %1513 = vmatpush1.bf16.xpose.msra.mxu0 0
    %1514 = vmatprep.subr.bf16.mxu0 0
    %1515 = vmatpush1.bf16.xpose.msra.mxu0 0
    %1516 = vmatprep.subr.bf16.mxu0 0
    %1517 = vmatpush1.bf16.xpose.msra.mxu0 0
    %1518 = vmatprep.subr.bf16.mxu0 0
    %1519 = vmatpush1.bf16.xpose.msra.mxu0 0
    %1520 = vmatprep.subr.bf16.mxu0 0
    %1521 = vmatpush1.bf16.xpose.msra.mxu0 0
    %1522 = vmatprep.subr.bf16.mxu0 0
    %1523 = vmatpush1.bf16.xpose.msra.mxu0 %v1506
    %1524 = vmatprep.subr.bf16.mxu0 0
    %1525 = vmatpush2.bf16.xpose.msra.mxu0 0
    %1526 = vmatprep.subr.bf16.mxu0 0
    %1527 = vmatpush2.bf16.xpose.msra.mxu0 0
    %1528 = vmatprep.subr.bf16.mxu0 0
    %1529 = vmatpush2.bf16.xpose.msra.mxu0 0
    %1530 = vmatprep.subr.bf16.mxu0 0
    %1531 = vmatpush2.bf16.xpose.msra.mxu0 0
    %1532 = vmatprep.subr.bf16.mxu0 0
    %1533 = vmatpush2.bf16.xpose.msra.mxu0 0
    %1534 = vmatprep.subr.bf16.mxu0 0
    %1535 = vmatpush2.bf16.xpose.msra.mxu0 0
    %1536 = vmatprep.subr.bf16.mxu0 0
    %1537 = vmatpush2.bf16.xpose.msra.mxu0 0
    %1538 = vmatprep.subr.bf16.mxu0 0
    %1539 = vmatpush2.bf16.xpose.msra.mxu0 0
    %1540 = vmatprep.mubr.bf16.mxu0 0
    %1541 = vmatmul.mubr.bf16.gmra.mxu0 %v1503
    %v1542 = vpop.f32.mrf.mxu0
    %v1543 = vadd.f32 %v529, %v1542
    %v1544 = vpop.f32.mrf.mxu0
    %v1545 = vpop.f32.mrf.mxu0
    %v1546 = vpop.f32.mrf.mxu0
    %1547 = vdwg.mxu0
    %v1548 = vsel %vm85, %v1497, -inf
    %1549 = vmax.xlane.f32.xlu0 %v1548
    %v1550 = vpop.xlane.xlu0 %1549
    %v1551 = vsel %vm85, %v1543, -inf
    %1552 = vmax.xlane.f32.xlu0 %v1551
    %v1553 = vpop.xlane.xlu0 %1552
    %v1554 = vsub.f32 %v1497, %v1550
    %v1555 = vsub.f32 %v1543, %v1553
    %v1556 = vmul.f32 %v1554, 1.442695
    %v1557 = vpow.pop %v1556
    %v1558 = vmul.f32 %v1555, 1.442695
    %v1559 = vpow.pop %v1558
    %v1560 = vsel %vm85, %v1557, 0.0
    %1561 = vadd.xlane.f32.xlu0 %v1560
    %v1562 = vpop.xlane.xlu0 %1561
    %v1563 = vsel %vm85, %v1559, 0.0
    %1564 = vadd.xlane.f32.xlu0 %v1563
    %v1565 = vpop.xlane.xlu0 %1564
    %v1566 = vrcp.pop %v1562
    %v1567 = vrcp.pop %v1565
    %v1568 = vmul.f32 %v1557, %v1566
    %v1569 = vmul.f32 %v1559, %v1567
    %v1570 = vpack.c.bf16 %v1568, %v1568
    %v1571 = vpack.c.bf16 %v1569, %v1569
    %v1572 = vpack.c.bf16 %v1446, %v1446
    %v1573 = vpack.c.bf16 %v1449, %v1449
    %v1575 = vsel %vm85, %v1570, 0
    %v1578 = vsel %vm653, %v1572, 0
    %1580 = vmatprep.subr.bf16.mxu0 0
    %1581 = vmatpush1.bf16.msra.mxu0 0
    %1582 = vmatprep.subr.bf16.mxu0 0
    %1583 = vmatpush1.bf16.msra.mxu0 0
    %1584 = vmatprep.subr.bf16.mxu0 0
    %1585 = vmatpush1.bf16.msra.mxu0 0
    %1586 = vmatprep.subr.bf16.mxu0 0
    %1587 = vmatpush1.bf16.msra.mxu0 0
    %1588 = vmatprep.subr.bf16.mxu0 0
    %1589 = vmatpush1.bf16.msra.mxu0 0
    %1590 = vmatprep.subr.bf16.mxu0 0
    %1591 = vmatpush1.bf16.msra.mxu0 0
    %1592 = vmatprep.subr.bf16.mxu0 0
    %1593 = vmatpush1.bf16.msra.mxu0 0
    %1594 = vmatprep.subr.bf16.mxu0 0
    %1595 = vmatpush1.bf16.msra.mxu0 %v1578
    %1596 = vmatprep.subr.bf16.mxu0 0
    %1597 = vmatpush2.bf16.msra.mxu0 0
    %1598 = vmatprep.subr.bf16.mxu0 0
    %1599 = vmatpush2.bf16.msra.mxu0 0
    %1600 = vmatprep.subr.bf16.mxu0 0
    %1601 = vmatpush2.bf16.msra.mxu0 0
    %1602 = vmatprep.subr.bf16.mxu0 0
    %1603 = vmatpush2.bf16.msra.mxu0 0
    %1604 = vmatprep.subr.bf16.mxu0 0
    %1605 = vmatpush2.bf16.msra.mxu0 0
    %1606 = vmatprep.subr.bf16.mxu0 0
    %1607 = vmatpush2.bf16.msra.mxu0 0
    %1608 = vmatprep.subr.bf16.mxu0 0
    %1609 = vmatpush2.bf16.msra.mxu0 0
    %1610 = vmatprep.subr.bf16.mxu0 0
    %1611 = vmatpush2.bf16.msra.mxu0 0
    %1612 = vmatprep.mubr.bf16.mxu0 0
    %1613 = vmatmul.mubr.bf16.gmra.mxu0 %v1575
    %v1614 = vpop.f32.mrf.mxu0
    %v1615 = vadd.f32 0.0, %v1614
    %v1616 = vpop.f32.mrf.mxu0
    %v1617 = vpop.f32.mrf.mxu0
    %v1618 = vpop.f32.mrf.mxu0
    %1619 = vdwg.mxu0
    %v1621 = vsel %vm85, %v1571, 0
    %v1624 = vsel %vm653, %v1573, 0
    %1626 = vmatprep.subr.bf16.mxu0 0
    %1627 = vmatpush1.bf16.msra.mxu0 0
    %1628 = vmatprep.subr.bf16.mxu0 0
    %1629 = vmatpush1.bf16.msra.mxu0 0
    %1630 = vmatprep.subr.bf16.mxu0 0
    %1631 = vmatpush1.bf16.msra.mxu0 0
    %1632 = vmatprep.subr.bf16.mxu0 0
    %1633 = vmatpush1.bf16.msra.mxu0 0
    %1634 = vmatprep.subr.bf16.mxu0 0
    %1635 = vmatpush1.bf16.msra.mxu0 0
    %1636 = vmatprep.subr.bf16.mxu0 0
    %1637 = vmatpush1.bf16.msra.mxu0 0
    %1638 = vmatprep.subr.bf16.mxu0 0
    %1639 = vmatpush1.bf16.msra.mxu0 0
    %1640 = vmatprep.subr.bf16.mxu0 0
    %1641 = vmatpush1.bf16.msra.mxu0 %v1624
    %1642 = vmatprep.subr.bf16.mxu0 0
    %1643 = vmatpush2.bf16.msra.mxu0 0
    %1644 = vmatprep.subr.bf16.mxu0 0
    %1645 = vmatpush2.bf16.msra.mxu0 0
    %1646 = vmatprep.subr.bf16.mxu0 0
    %1647 = vmatpush2.bf16.msra.mxu0 0
    %1648 = vmatprep.subr.bf16.mxu0 0
    %1649 = vmatpush2.bf16.msra.mxu0 0
    %1650 = vmatprep.subr.bf16.mxu0 0
    %1651 = vmatpush2.bf16.msra.mxu0 0
    %1652 = vmatprep.subr.bf16.mxu0 0
    %1653 = vmatpush2.bf16.msra.mxu0 0
    %1654 = vmatprep.subr.bf16.mxu0 0
    %1655 = vmatpush2.bf16.msra.mxu0 0
    %1656 = vmatprep.subr.bf16.mxu0 0
    %1657 = vmatpush2.bf16.msra.mxu0 0
    %1658 = vmatprep.mubr.bf16.mxu0 0
    %1659 = vmatmul.mubr.bf16.gmra.mxu0 %v1621
    %v1660 = vpop.f32.mrf.mxu0
    %v1661 = vadd.f32 0.0, %v1660
    %v1662 = vpop.f32.mrf.mxu0
    %v1663 = vpop.f32.mrf.mxu0
    %v1664 = vpop.f32.mrf.mxu0
    %1665 = vdwg.mxu0
    %v1666 = vpack.c.bf16 %v1661, %v1615
    %s1667 = scalar_lea.vmem %s6, 8
    %v1668 = vld [vmem:[%s1667] sm:$0xf]
    %v1670 = vsel %vm85, %v1666, 0
    %v1673 = vsel %vm653, %v1668, 0
    %1675 = vmatprep.subr.bf16.mxu0 0
    %1676 = vmatpush1.bf16.msra.mxu0 0
    %1677 = vmatprep.subr.bf16.mxu0 0
    %1678 = vmatpush1.bf16.msra.mxu0 0
    %1679 = vmatprep.subr.bf16.mxu0 0
    %1680 = vmatpush1.bf16.msra.mxu0 0
    %1681 = vmatprep.subr.bf16.mxu0 0
    %1682 = vmatpush1.bf16.msra.mxu0 0
    %1683 = vmatprep.subr.bf16.mxu0 0
    %1684 = vmatpush1.bf16.msra.mxu0 0
    %1685 = vmatprep.subr.bf16.mxu0 0
    %1686 = vmatpush1.bf16.msra.mxu0 0
    %1687 = vmatprep.subr.bf16.mxu0 0
    %1688 = vmatpush1.bf16.msra.mxu0 0
    %1689 = vmatprep.subr.bf16.mxu0 0
    %1690 = vmatpush1.bf16.msra.mxu0 %v1673
    %1691 = vmatprep.subr.bf16.mxu0 0
    %1692 = vmatpush2.bf16.msra.mxu0 0
    %1693 = vmatprep.subr.bf16.mxu0 0
    %1694 = vmatpush2.bf16.msra.mxu0 0
    %1695 = vmatprep.subr.bf16.mxu0 0
    %1696 = vmatpush2.bf16.msra.mxu0 0
    %1697 = vmatprep.subr.bf16.mxu0 0
    %1698 = vmatpush2.bf16.msra.mxu0 0
    %1699 = vmatprep.subr.bf16.mxu0 0
    %1700 = vmatpush2.bf16.msra.mxu0 0
    %1701 = vmatprep.subr.bf16.mxu0 0
    %1702 = vmatpush2.bf16.msra.mxu0 0
    %1703 = vmatprep.subr.bf16.mxu0 0
    %1704 = vmatpush2.bf16.msra.mxu0 0
    %1705 = vmatprep.subr.bf16.mxu0 0
    %1706 = vmatpush2.bf16.msra.mxu0 0
    %1707 = vmatprep.mubr.bf16.mxu0 0
    %1708 = vmatmul.mubr.bf16.gmra.mxu0 %v1670
    %v1709 = vpop.f32.mrf.mxu0
    %v1710 = vadd.f32 0.0, %v1709
    %v1711 = vpop.f32.mrf.mxu0
    %v1712 = vpop.f32.mrf.mxu0
    %v1713 = vadd.f32 0.0, %v1712
    %v1714 = vpop.f32.mrf.mxu0
    %1715 = vdwg.mxu0
    %v1716 = vadd.f32 %v1248, %v1710
    %v1717 = vadd.f32 %v1251, %v1713
    %s1718 = scalar_lea.vmem %s4, 48
    %v1719 = vld [vmem:[%s1718] sm:$0xf]
    %v1720 = vld [vmem:[%s1718 + $0x4] sm:$0xf]
    %v1721 = vld [vmem:[%s1718 + $0x8] sm:$0xf]
    %v1722 = vld [vmem:[%s1718 + $0xc] sm:$0xf]
    %s1723 = scalar_lea.vmem %s5, 3
    %v1724 = vld [vmem:[%s1723] sm:$0x1]
    %v1726 = vlaneseq
    %v1727 = vshrl.u32 %v1726, 7
    %v1728 = vsub.s32 0, %v1727
    %v1729 = vrot.slane %v1724, %v1728
    %v1735 = vunpack.c.l.b16 %v1719
    %v1736 = vunpack.c.l.b16 %v1720
    %v1737 = vunpack.c.l.b16 %v1721
    %v1738 = vunpack.c.l.b16 %v1722
    %v1739 = vpack.c.b16 %v1736, %v1735
    %v1740 = vpack.c.b16 %v1738, %v1737
    %1743 = vmatprep.subr.bf16.mxu0 0
    %1744 = vmatpush1.bf16.msra.mxu0 0
    %1745 = vmatprep.subr.bf16.mxu0 0
    %1746 = vmatpush1.bf16.msra.mxu0 0
    %1747 = vmatprep.subr.bf16.mxu0 0
    %1748 = vmatpush1.bf16.msra.mxu0 0
    %1749 = vmatprep.subr.bf16.mxu0 0
    %1750 = vmatpush1.bf16.msra.mxu0 0
    %1751 = vmatprep.subr.bf16.mxu0 0
    %1752 = vmatpush1.bf16.msra.mxu0 0
    %1753 = vmatprep.subr.bf16.mxu0 0
    %1754 = vmatpush1.bf16.msra.mxu0 0
    %1755 = vmatprep.subr.bf16.mxu0 0
    %1756 = vmatpush1.bf16.msra.mxu0 %v1740
    %1757 = vmatprep.subr.bf16.mxu0 0
    %1758 = vmatpush1.bf16.msra.mxu0 %v1739
    %1759 = vmatprep.subr.bf16.mxu0 0
    %1760 = vmatpush2.bf16.msra.mxu0 0
    %1761 = vmatprep.subr.bf16.mxu0 0
    %1762 = vmatpush2.bf16.msra.mxu0 0
    %1763 = vmatprep.subr.bf16.mxu0 0
    %1764 = vmatpush2.bf16.msra.mxu0 0
    %1765 = vmatprep.subr.bf16.mxu0 0
    %1766 = vmatpush2.bf16.msra.mxu0 0
    %1767 = vmatprep.subr.bf16.mxu0 0
    %1768 = vmatpush2.bf16.msra.mxu0 0
    %1769 = vmatprep.subr.bf16.mxu0 0
    %1770 = vmatpush2.bf16.msra.mxu0 0
    %1771 = vmatprep.subr.bf16.mxu0 0
    %1772 = vmatpush2.bf16.msra.mxu0 0
    %1773 = vmatprep.subr.bf16.mxu0 0
    %1774 = vmatpush2.bf16.msra.mxu0 0
    %1775 = vmatprep.mubr.bf16.mxu0 0
    %1776 = vmatmul.mubr.bf16.gmra.mxu0 %v341
    %v1777 = vpop.f32.mrf.mxu0
    %v1778 = vadd.f32 %v1729, %v1777
    %v1779 = vpop.f32.mrf.mxu0
    %v1780 = vpop.f32.mrf.mxu0
    %v1781 = vadd.f32 %v1729, %v1780
    %v1782 = vpop.f32.mrf.mxu0
    %1783 = vdwg.mxu0
    %s1784 = scalar_lea.vmem %s4, 112
    %v1785 = vld [vmem:[%s1784] sm:$0xf]
    %v1786 = vld [vmem:[%s1784 + $0x4] sm:$0xf]
    %v1787 = vld [vmem:[%s1784 + $0x8] sm:$0xf]
    %v1788 = vld [vmem:[%s1784 + $0xc] sm:$0xf]
    %s1789 = scalar_lea.vmem %s5, 7
    %v1790 = vld [vmem:[%s1789] sm:$0x1]
    %v1792 = vlaneseq
    %v1793 = vshrl.u32 %v1792, 7
    %v1794 = vsub.s32 0, %v1793
    %v1795 = vrot.slane %v1790, %v1794
    %v1801 = vunpack.c.l.b16 %v1785
    %v1802 = vunpack.c.l.b16 %v1786
    %v1803 = vunpack.c.l.b16 %v1787
    %v1804 = vunpack.c.l.b16 %v1788
    %v1805 = vpack.c.b16 %v1802, %v1801
    %v1806 = vpack.c.b16 %v1804, %v1803
    %1809 = vmatprep.subr.bf16.mxu0 0
    %1810 = vmatpush1.bf16.msra.mxu0 0
    %1811 = vmatprep.subr.bf16.mxu0 0
    %1812 = vmatpush1.bf16.msra.mxu0 0
    %1813 = vmatprep.subr.bf16.mxu0 0
    %1814 = vmatpush1.bf16.msra.mxu0 0
    %1815 = vmatprep.subr.bf16.mxu0 0
    %1816 = vmatpush1.bf16.msra.mxu0 0
    %1817 = vmatprep.subr.bf16.mxu0 0
    %1818 = vmatpush1.bf16.msra.mxu0 0
    %1819 = vmatprep.subr.bf16.mxu0 0
    %1820 = vmatpush1.bf16.msra.mxu0 0
    %1821 = vmatprep.subr.bf16.mxu0 0
    %1822 = vmatpush1.bf16.msra.mxu0 %v1806
    %1823 = vmatprep.subr.bf16.mxu0 0
    %1824 = vmatpush1.bf16.msra.mxu0 %v1805
    %1825 = vmatprep.subr.bf16.mxu0 0
    %1826 = vmatpush2.bf16.msra.mxu0 0
    %1827 = vmatprep.subr.bf16.mxu0 0
    %1828 = vmatpush2.bf16.msra.mxu0 0
    %1829 = vmatprep.subr.bf16.mxu0 0
    %1830 = vmatpush2.bf16.msra.mxu0 0
    %1831 = vmatprep.subr.bf16.mxu0 0
    %1832 = vmatpush2.bf16.msra.mxu0 0
    %1833 = vmatprep.subr.bf16.mxu0 0
    %1834 = vmatpush2.bf16.msra.mxu0 0
    %1835 = vmatprep.subr.bf16.mxu0 0
    %1836 = vmatpush2.bf16.msra.mxu0 0
    %1837 = vmatprep.subr.bf16.mxu0 0
    %1838 = vmatpush2.bf16.msra.mxu0 0
    %1839 = vmatprep.subr.bf16.mxu0 0
    %1840 = vmatpush2.bf16.msra.mxu0 0
    %1841 = vmatprep.mubr.bf16.mxu0 0
    %1842 = vmatmul.mubr.bf16.gmra.mxu0 %v341
    %v1843 = vpop.f32.mrf.mxu0
    %v1844 = vadd.f32 %v1795, %v1843
    %v1845 = vpop.f32.mrf.mxu0
    %v1846 = vpop.f32.mrf.mxu0
    %v1847 = vadd.f32 %v1795, %v1846
    %v1848 = vpop.f32.mrf.mxu0
    %1849 = vdwg.mxu0
    %s1850 = scalar_lea.vmem %s4, 176
    %v1851 = vld [vmem:[%s1850] sm:$0xf]
    %v1852 = vld [vmem:[%s1850 + $0x4] sm:$0xf]
    %v1853 = vld [vmem:[%s1850 + $0x8] sm:$0xf]
    %v1854 = vld [vmem:[%s1850 + $0xc] sm:$0xf]
    %s1855 = scalar_lea.vmem %s5, 11
    %v1856 = vld [vmem:[%s1855] sm:$0x1]
    %v1858 = vlaneseq
    %v1859 = vshrl.u32 %v1858, 7
    %v1860 = vsub.s32 0, %v1859
    %v1861 = vrot.slane %v1856, %v1860
    %v1867 = vunpack.c.l.b16 %v1851
    %v1868 = vunpack.c.l.b16 %v1852
    %v1869 = vunpack.c.l.b16 %v1853
    %v1870 = vunpack.c.l.b16 %v1854
    %v1871 = vpack.c.b16 %v1868, %v1867
    %v1872 = vpack.c.b16 %v1870, %v1869
    %1875 = vmatprep.subr.bf16.mxu0 0
    %1876 = vmatpush1.bf16.msra.mxu0 0
    %1877 = vmatprep.subr.bf16.mxu0 0
    %1878 = vmatpush1.bf16.msra.mxu0 0
    %1879 = vmatprep.subr.bf16.mxu0 0
    %1880 = vmatpush1.bf16.msra.mxu0 0
    %1881 = vmatprep.subr.bf16.mxu0 0
    %1882 = vmatpush1.bf16.msra.mxu0 0
    %1883 = vmatprep.subr.bf16.mxu0 0
    %1884 = vmatpush1.bf16.msra.mxu0 0
    %1885 = vmatprep.subr.bf16.mxu0 0
    %1886 = vmatpush1.bf16.msra.mxu0 0
    %1887 = vmatprep.subr.bf16.mxu0 0
    %1888 = vmatpush1.bf16.msra.mxu0 %v1872
    %1889 = vmatprep.subr.bf16.mxu0 0
    %1890 = vmatpush1.bf16.msra.mxu0 %v1871
    %1891 = vmatprep.subr.bf16.mxu0 0
    %1892 = vmatpush2.bf16.msra.mxu0 0
    %1893 = vmatprep.subr.bf16.mxu0 0
    %1894 = vmatpush2.bf16.msra.mxu0 0
    %1895 = vmatprep.subr.bf16.mxu0 0
    %1896 = vmatpush2.bf16.msra.mxu0 0
    %1897 = vmatprep.subr.bf16.mxu0 0
    %1898 = vmatpush2.bf16.msra.mxu0 0
    %1899 = vmatprep.subr.bf16.mxu0 0
    %1900 = vmatpush2.bf16.msra.mxu0 0
    %1901 = vmatprep.subr.bf16.mxu0 0
    %1902 = vmatpush2.bf16.msra.mxu0 0
    %1903 = vmatprep.subr.bf16.mxu0 0
    %1904 = vmatpush2.bf16.msra.mxu0 0
    %1905 = vmatprep.subr.bf16.mxu0 0
    %1906 = vmatpush2.bf16.msra.mxu0 0
    %1907 = vmatprep.mubr.bf16.mxu0 0
    %1908 = vmatmul.mubr.bf16.gmra.mxu0 %v341
    %v1909 = vpop.f32.mrf.mxu0
    %v1910 = vadd.f32 %v1861, %v1909
    %v1911 = vpop.f32.mrf.mxu0
    %v1912 = vpop.f32.mrf.mxu0
    %v1913 = vadd.f32 %v1861, %v1912
    %v1914 = vpop.f32.mrf.mxu0
    %1915 = vdwg.mxu0
    %v1916 = vpack.c.bf16 %v1778, %v1778
    %v1917 = vpack.c.bf16 %v1781, %v1781
    %v1918 = vpack.c.bf16 %v1844, %v1844
    %v1919 = vpack.c.bf16 %v1847, %v1847
    %v1921 = vsel %vm85, %v1916, 0
    %v1924 = vsel %vm85, %v1918, 0
    %1926 = vmatprep.subr.bf16.mxu0 0
    %1927 = vmatpush1.bf16.xpose.msra.mxu0 0
    %1928 = vmatprep.subr.bf16.mxu0 0
    %1929 = vmatpush1.bf16.xpose.msra.mxu0 0
    %1930 = vmatprep.subr.bf16.mxu0 0
    %1931 = vmatpush1.bf16.xpose.msra.mxu0 0
    %1932 = vmatprep.subr.bf16.mxu0 0
    %1933 = vmatpush1.bf16.xpose.msra.mxu0 0
    %1934 = vmatprep.subr.bf16.mxu0 0
    %1935 = vmatpush1.bf16.xpose.msra.mxu0 0
    %1936 = vmatprep.subr.bf16.mxu0 0
    %1937 = vmatpush1.bf16.xpose.msra.mxu0 0
    %1938 = vmatprep.subr.bf16.mxu0 0
    %1939 = vmatpush1.bf16.xpose.msra.mxu0 0
    %1940 = vmatprep.subr.bf16.mxu0 0
    %1941 = vmatpush1.bf16.xpose.msra.mxu0 %v1924
    %1942 = vmatprep.subr.bf16.mxu0 0
    %1943 = vmatpush2.bf16.xpose.msra.mxu0 0
    %1944 = vmatprep.subr.bf16.mxu0 0
    %1945 = vmatpush2.bf16.xpose.msra.mxu0 0
    %1946 = vmatprep.subr.bf16.mxu0 0
    %1947 = vmatpush2.bf16.xpose.msra.mxu0 0
    %1948 = vmatprep.subr.bf16.mxu0 0
    %1949 = vmatpush2.bf16.xpose.msra.mxu0 0
    %1950 = vmatprep.subr.bf16.mxu0 0
    %1951 = vmatpush2.bf16.xpose.msra.mxu0 0
    %1952 = vmatprep.subr.bf16.mxu0 0
    %1953 = vmatpush2.bf16.xpose.msra.mxu0 0
    %1954 = vmatprep.subr.bf16.mxu0 0
    %1955 = vmatpush2.bf16.xpose.msra.mxu0 0
    %1956 = vmatprep.subr.bf16.mxu0 0
    %1957 = vmatpush2.bf16.xpose.msra.mxu0 0
    %1958 = vmatprep.mubr.bf16.mxu0 0
    %1959 = vmatmul.mubr.bf16.gmra.mxu0 %v1921
    %v1960 = vpop.f32.mrf.mxu0
    %v1961 = vadd.f32 %v525, %v1960
    %v1962 = vpop.f32.mrf.mxu0
    %v1963 = vpop.f32.mrf.mxu0
    %v1964 = vpop.f32.mrf.mxu0
    %1965 = vdwg.mxu0
    %v1967 = vsel %vm85, %v1917, 0
    %v1970 = vsel %vm85, %v1919, 0
    %1972 = vmatprep.subr.bf16.mxu0 0
    %1973 = vmatpush1.bf16.xpose.msra.mxu0 0
    %1974 = vmatprep.subr.bf16.mxu0 0
    %1975 = vmatpush1.bf16.xpose.msra.mxu0 0
    %1976 = vmatprep.subr.bf16.mxu0 0
    %1977 = vmatpush1.bf16.xpose.msra.mxu0 0
    %1978 = vmatprep.subr.bf16.mxu0 0
    %1979 = vmatpush1.bf16.xpose.msra.mxu0 0
    %1980 = vmatprep.subr.bf16.mxu0 0
    %1981 = vmatpush1.bf16.xpose.msra.mxu0 0
    %1982 = vmatprep.subr.bf16.mxu0 0
    %1983 = vmatpush1.bf16.xpose.msra.mxu0 0
    %1984 = vmatprep.subr.bf16.mxu0 0
    %1985 = vmatpush1.bf16.xpose.msra.mxu0 0
    %1986 = vmatprep.subr.bf16.mxu0 0
    %1987 = vmatpush1.bf16.xpose.msra.mxu0 %v1970
    %1988 = vmatprep.subr.bf16.mxu0 0
    %1989 = vmatpush2.bf16.xpose.msra.mxu0 0
    %1990 = vmatprep.subr.bf16.mxu0 0
    %1991 = vmatpush2.bf16.xpose.msra.mxu0 0
    %1992 = vmatprep.subr.bf16.mxu0 0
    %1993 = vmatpush2.bf16.xpose.msra.mxu0 0
    %1994 = vmatprep.subr.bf16.mxu0 0
    %1995 = vmatpush2.bf16.xpose.msra.mxu0 0
    %1996 = vmatprep.subr.bf16.mxu0 0
    %1997 = vmatpush2.bf16.xpose.msra.mxu0 0
    %1998 = vmatprep.subr.bf16.mxu0 0
    %1999 = vmatpush2.bf16.xpose.msra.mxu0 0
    %2000 = vmatprep.subr.bf16.mxu0 0
    %2001 = vmatpush2.bf16.xpose.msra.mxu0 0
    %2002 = vmatprep.subr.bf16.mxu0 0
    %2003 = vmatpush2.bf16.xpose.msra.mxu0 0
    %2004 = vmatprep.mubr.bf16.mxu0 0
    %2005 = vmatmul.mubr.bf16.gmra.mxu0 %v1967
    %v2006 = vpop.f32.mrf.mxu0
    %v2007 = vadd.f32 %v529, %v2006
    %v2008 = vpop.f32.mrf.mxu0
    %v2009 = vpop.f32.mrf.mxu0
    %v2010 = vpop.f32.mrf.mxu0
    %2011 = vdwg.mxu0
    %v2012 = vsel %vm85, %v1961, -inf
    %2013 = vmax.xlane.f32.xlu0 %v2012
    %v2014 = vpop.xlane.xlu0 %2013
    %v2015 = vsel %vm85, %v2007, -inf
    %2016 = vmax.xlane.f32.xlu0 %v2015
    %v2017 = vpop.xlane.xlu0 %2016
    %v2018 = vsub.f32 %v1961, %v2014
    %v2019 = vsub.f32 %v2007, %v2017
    %v2020 = vmul.f32 %v2018, 1.442695
    %v2021 = vpow.pop %v2020
    %v2022 = vmul.f32 %v2019, 1.442695
    %v2023 = vpow.pop %v2022
    %v2024 = vsel %vm85, %v2021, 0.0
    %2025 = vadd.xlane.f32.xlu0 %v2024
    %v2026 = vpop.xlane.xlu0 %2025
    %v2027 = vsel %vm85, %v2023, 0.0
    %2028 = vadd.xlane.f32.xlu0 %v2027
    %v2029 = vpop.xlane.xlu0 %2028
    %v2030 = vrcp.pop %v2026
    %v2031 = vrcp.pop %v2029
    %v2032 = vmul.f32 %v2021, %v2030
    %v2033 = vmul.f32 %v2023, %v2031
    %v2034 = vpack.c.bf16 %v2032, %v2032
    %v2035 = vpack.c.bf16 %v2033, %v2033
    %v2036 = vpack.c.bf16 %v1910, %v1910
    %v2037 = vpack.c.bf16 %v1913, %v1913
    %v2039 = vsel %vm85, %v2034, 0
    %v2042 = vsel %vm653, %v2036, 0
    %2044 = vmatprep.subr.bf16.mxu0 0
    %2045 = vmatpush1.bf16.msra.mxu0 0
    %2046 = vmatprep.subr.bf16.mxu0 0
    %2047 = vmatpush1.bf16.msra.mxu0 0
    %2048 = vmatprep.subr.bf16.mxu0 0
    %2049 = vmatpush1.bf16.msra.mxu0 0
    %2050 = vmatprep.subr.bf16.mxu0 0
    %2051 = vmatpush1.bf16.msra.mxu0 0
    %2052 = vmatprep.subr.bf16.mxu0 0
    %2053 = vmatpush1.bf16.msra.mxu0 0
    %2054 = vmatprep.subr.bf16.mxu0 0
    %2055 = vmatpush1.bf16.msra.mxu0 0
    %2056 = vmatprep.subr.bf16.mxu0 0
    %2057 = vmatpush1.bf16.msra.mxu0 0
    %2058 = vmatprep.subr.bf16.mxu0 0
    %2059 = vmatpush1.bf16.msra.mxu0 %v2042
    %2060 = vmatprep.subr.bf16.mxu0 0
    %2061 = vmatpush2.bf16.msra.mxu0 0
    %2062 = vmatprep.subr.bf16.mxu0 0
    %2063 = vmatpush2.bf16.msra.mxu0 0
    %2064 = vmatprep.subr.bf16.mxu0 0
    %2065 = vmatpush2.bf16.msra.mxu0 0
    %2066 = vmatprep.subr.bf16.mxu0 0
    %2067 = vmatpush2.bf16.msra.mxu0 0
    %2068 = vmatprep.subr.bf16.mxu0 0
    %2069 = vmatpush2.bf16.msra.mxu0 0
    %2070 = vmatprep.subr.bf16.mxu0 0
    %2071 = vmatpush2.bf16.msra.mxu0 0
    %2072 = vmatprep.subr.bf16.mxu0 0
    %2073 = vmatpush2.bf16.msra.mxu0 0
    %2074 = vmatprep.subr.bf16.mxu0 0
    %2075 = vmatpush2.bf16.msra.mxu0 0
    %2076 = vmatprep.mubr.bf16.mxu0 0
    %2077 = vmatmul.mubr.bf16.gmra.mxu0 %v2039
    %v2078 = vpop.f32.mrf.mxu0
    %v2079 = vadd.f32 0.0, %v2078
    %v2080 = vpop.f32.mrf.mxu0
    %v2081 = vpop.f32.mrf.mxu0
    %v2082 = vpop.f32.mrf.mxu0
    %2083 = vdwg.mxu0
    %v2085 = vsel %vm85, %v2035, 0
    %v2088 = vsel %vm653, %v2037, 0
    %2090 = vmatprep.subr.bf16.mxu0 0
    %2091 = vmatpush1.bf16.msra.mxu0 0
    %2092 = vmatprep.subr.bf16.mxu0 0
    %2093 = vmatpush1.bf16.msra.mxu0 0
    %2094 = vmatprep.subr.bf16.mxu0 0
    %2095 = vmatpush1.bf16.msra.mxu0 0
    %2096 = vmatprep.subr.bf16.mxu0 0
    %2097 = vmatpush1.bf16.msra.mxu0 0
    %2098 = vmatprep.subr.bf16.mxu0 0
    %2099 = vmatpush1.bf16.msra.mxu0 0
    %2100 = vmatprep.subr.bf16.mxu0 0
    %2101 = vmatpush1.bf16.msra.mxu0 0
    %2102 = vmatprep.subr.bf16.mxu0 0
    %2103 = vmatpush1.bf16.msra.mxu0 0
    %2104 = vmatprep.subr.bf16.mxu0 0
    %2105 = vmatpush1.bf16.msra.mxu0 %v2088
    %2106 = vmatprep.subr.bf16.mxu0 0
    %2107 = vmatpush2.bf16.msra.mxu0 0
    %2108 = vmatprep.subr.bf16.mxu0 0
    %2109 = vmatpush2.bf16.msra.mxu0 0
    %2110 = vmatprep.subr.bf16.mxu0 0
    %2111 = vmatpush2.bf16.msra.mxu0 0
    %2112 = vmatprep.subr.bf16.mxu0 0
    %2113 = vmatpush2.bf16.msra.mxu0 0
    %2114 = vmatprep.subr.bf16.mxu0 0
    %2115 = vmatpush2.bf16.msra.mxu0 0
    %2116 = vmatprep.subr.bf16.mxu0 0
    %2117 = vmatpush2.bf16.msra.mxu0 0
    %2118 = vmatprep.subr.bf16.mxu0 0
    %2119 = vmatpush2.bf16.msra.mxu0 0
    %2120 = vmatprep.subr.bf16.mxu0 0
    %2121 = vmatpush2.bf16.msra.mxu0 0
    %2122 = vmatprep.mubr.bf16.mxu0 0
    %2123 = vmatmul.mubr.bf16.gmra.mxu0 %v2085
    %v2124 = vpop.f32.mrf.mxu0
    %v2125 = vadd.f32 0.0, %v2124
    %v2126 = vpop.f32.mrf.mxu0
    %v2127 = vpop.f32.mrf.mxu0
    %v2128 = vpop.f32.mrf.mxu0
    %2129 = vdwg.mxu0
    %v2130 = vpack.c.bf16 %v2125, %v2079
    %s2131 = scalar_lea.vmem %s6, 12
    %v2132 = vld [vmem:[%s2131] sm:$0xf]
    %v2134 = vsel %vm85, %v2130, 0
    %v2137 = vsel %vm653, %v2132, 0
    %2139 = vmatprep.subr.bf16.mxu0 0
    %2140 = vmatpush1.bf16.msra.mxu0 0
    %2141 = vmatprep.subr.bf16.mxu0 0
    %2142 = vmatpush1.bf16.msra.mxu0 0
    %2143 = vmatprep.subr.bf16.mxu0 0
    %2144 = vmatpush1.bf16.msra.mxu0 0
    %2145 = vmatprep.subr.bf16.mxu0 0
    %2146 = vmatpush1.bf16.msra.mxu0 0
    %2147 = vmatprep.subr.bf16.mxu0 0
    %2148 = vmatpush1.bf16.msra.mxu0 0
    %2149 = vmatprep.subr.bf16.mxu0 0
    %2150 = vmatpush1.bf16.msra.mxu0 0
    %2151 = vmatprep.subr.bf16.mxu0 0
    %2152 = vmatpush1.bf16.msra.mxu0 0
    %2153 = vmatprep.subr.bf16.mxu0 0
    %2154 = vmatpush1.bf16.msra.mxu0 %v2137
    %2155 = vmatprep.subr.bf16.mxu0 0
    %2156 = vmatpush2.bf16.msra.mxu0 0
    %2157 = vmatprep.subr.bf16.mxu0 0
    %2158 = vmatpush2.bf16.msra.mxu0 0
    %2159 = vmatprep.subr.bf16.mxu0 0
    %2160 = vmatpush2.bf16.msra.mxu0 0
    %2161 = vmatprep.subr.bf16.mxu0 0
    %2162 = vmatpush2.bf16.msra.mxu0 0
    %2163 = vmatprep.subr.bf16.mxu0 0
    %2164 = vmatpush2.bf16.msra.mxu0 0
    %2165 = vmatprep.subr.bf16.mxu0 0
    %2166 = vmatpush2.bf16.msra.mxu0 0
    %2167 = vmatprep.subr.bf16.mxu0 0
    %2168 = vmatpush2.bf16.msra.mxu0 0
    %2169 = vmatprep.subr.bf16.mxu0 0
    %2170 = vmatpush2.bf16.msra.mxu0 0
    %2171 = vmatprep.mubr.bf16.mxu0 0
    %2172 = vmatmul.mubr.bf16.gmra.mxu0 %v2134
    %v2173 = vpop.f32.mrf.mxu0
    %v2174 = vadd.f32 0.0, %v2173
    %v2175 = vpop.f32.mrf.mxu0
    %v2176 = vpop.f32.mrf.mxu0
    %v2177 = vadd.f32 0.0, %v2176
    %v2178 = vpop.f32.mrf.mxu0
    %2179 = vdwg.mxu0
    %v2180 = vadd.f32 %v1716, %v2174
    %v2181 = vadd.f32 %v1717, %v2177
    %v2182 = vld [vmem:[%s7] sm:$0x7f]
    %v2183 = vlaneseq
    %v2184 = vshrl.u32 %v2183, 7
    %v2185 = vsub.s32 0, %v2184
    %v2186 = vrot.slane %v2182, %v2185
    %v2187 = vadd.f32 %v2180, %v2186
    %v2188 = vadd.f32 %v2181, %v2186
    %v2189 = vadd.f32 %v2187, %v284
    %v2190 = vadd.f32 %v2188, %v285
    %v2191 = vsel %vm246, %v2189, 0.0
    %2192 = vadd.xlane.f32.xlu0 %v2191
    %v2193 = vpop.xlane.xlu0 %2192
    %v2194 = vsel %vm246, %v2190, 0.0
    %2195 = vadd.xlane.f32.xlu0 %v2194
    %v2196 = vpop.xlane.xlu0 %2195
    %v2197 = vmul.f32 %v2193, %v253
    %v2198 = vmul.f32 %v2196, %v253
    %v2199 = vsub.f32 %v2189, %v2197
    %v2200 = vsub.f32 %v2190, %v2198
    %v2201 = vmul.f32 %v2199, %v2199
    %v2202 = vmul.f32 %v2200, %v2200
    %v2203 = vsel %vm246, %v2201, 0.0
    %2204 = vadd.xlane.f32.xlu0 %v2203
    %v2205 = vpop.xlane.xlu0 %2204
    %v2206 = vsel %vm246, %v2202, 0.0
    %2207 = vadd.xlane.f32.xlu0 %v2206
    %v2208 = vpop.xlane.xlu0 %2207
    %v2209 = vmul.f32 %v2205, %v253
    %v2210 = vmul.f32 %v2208, %v253
    %v2211 = vadd.f32 %v2209, 1e-12
    %v2212 = vadd.f32 %v2210, 1e-12
    %v2213 = vrsqrt.pop %v2211
    %v2214 = vrsqrt.pop %v2212
    %v2215 = vmul.f32 %v2199, %v2213
    %v2216 = vmul.f32 %v2200, %v2214
    %v2217 = vlaneseq
    %v2218 = vshrl.u32 %v2217, 7
    %v2219 = vsub.s32 1, %v2218
    %v2220 = vrot.slane %v2182, %v2219
    %v2221 = vmul.f32 %v2215, %v2220
    %v2222 = vmul.f32 %v2216, %v2220
    %v2223 = vlaneseq
    %v2224 = vshrl.u32 %v2223, 7
    %v2225 = vsub.s32 2, %v2224
    %v2226 = vrot.slane %v2182, %v2225
    %v2227 = vadd.f32 %v2221, %v2226
    %v2228 = vadd.f32 %v2222, %v2226
    %v2229 = vpack.c.bf16 %v2228, %v2227
    %v2230 = vld [vmem:[%s8] sm:$0xf]
    %v2231 = vld [vmem:[%s8 + $0x4] sm:$0xf]
    %v2232 = vld [vmem:[%s8 + $0x8] sm:$0xf]
    %v2233 = vld [vmem:[%s8 + $0xc] sm:$0xf]
    %v2234 = vlaneseq
    %v2235 = vshrl.u32 %v2234, 7
    %v2236 = vsub.s32 3, %v2235
    %v2237 = vrot.slane %v2182, %v2236
    %v2242 = vunpack.c.l.b16 %v2230
    %v2243 = vunpack.c.l.b16 %v2231
    %v2244 = vunpack.c.l.b16 %v2232
    %v2245 = vunpack.c.l.b16 %v2233
    %v2246 = vpack.c.b16 %v2243, %v2242
    %v2247 = vpack.c.b16 %v2245, %v2244
    %v2251 = vsel %vm246, %v2229, 0
    %2253 = vmatprep.subr.bf16.mxu0 0
    %2254 = vmatpush1.bf16.msra.mxu0 0
    %2255 = vmatprep.subr.bf16.mxu0 0
    %2256 = vmatpush1.bf16.msra.mxu0 0
    %2257 = vmatprep.subr.bf16.mxu0 0
    %2258 = vmatpush1.bf16.msra.mxu0 0
    %2259 = vmatprep.subr.bf16.mxu0 0
    %2260 = vmatpush1.bf16.msra.mxu0 0
    %2261 = vmatprep.subr.bf16.mxu0 0
    %2262 = vmatpush1.bf16.msra.mxu0 0
    %2263 = vmatprep.subr.bf16.mxu0 0
    %2264 = vmatpush1.bf16.msra.mxu0 0
    %2265 = vmatprep.subr.bf16.mxu0 0
    %2266 = vmatpush1.bf16.msra.mxu0 %v2247
    %2267 = vmatprep.subr.bf16.mxu0 0
    %2268 = vmatpush1.bf16.msra.mxu0 %v2246
    %2269 = vmatprep.subr.bf16.mxu0 0
    %2270 = vmatpush2.bf16.msra.mxu0 0
    %2271 = vmatprep.subr.bf16.mxu0 0
    %2272 = vmatpush2.bf16.msra.mxu0 0
    %2273 = vmatprep.subr.bf16.mxu0 0
    %2274 = vmatpush2.bf16.msra.mxu0 0
    %2275 = vmatprep.subr.bf16.mxu0 0
    %2276 = vmatpush2.bf16.msra.mxu0 0
    %2277 = vmatprep.subr.bf16.mxu0 0
    %2278 = vmatpush2.bf16.msra.mxu0 0
    %2279 = vmatprep.subr.bf16.mxu0 0
    %2280 = vmatpush2.bf16.msra.mxu0 0
    %2281 = vmatprep.subr.bf16.mxu0 0
    %2282 = vmatpush2.bf16.msra.mxu0 0
    %2283 = vmatprep.subr.bf16.mxu0 0
    %2284 = vmatpush2.bf16.msra.mxu0 0
    %2285 = vmatprep.mubr.bf16.mxu0 0
    %2286 = vmatmul.mubr.bf16.gmra.mxu0 %v2251
    %v2287 = vpop.f32.mrf.mxu0
    %v2288 = vadd.f32 %v2237, %v2287
    %v2289 = vpop.f32.mrf.mxu0
    %v2290 = vpop.f32.mrf.mxu0
    %v2291 = vadd.f32 %v2237, %v2290
    %v2292 = vpop.f32.mrf.mxu0
    %2293 = vdwg.mxu0
    %v2294 = vmul.f32 %v2288, 0.5
    %v2295 = vmul.f32 %v2291, 0.5
    %v2296 = vmul.f32 %v2288, 0.044715
    %v2297 = vmul.f32 %v2291, 0.044715
    %v2298 = vmul.f32 %v2296, %v2288
    %v2299 = vmul.f32 %v2297, %v2291
    %v2300 = vmul.f32 %v2298, %v2288
    %v2301 = vmul.f32 %v2299, %v2291
    %v2302 = vadd.f32 %v2288, %v2300
    %v2303 = vadd.f32 %v2291, %v2301
    %v2304 = vmul.f32 %v2302, 0.7978846
    %v2305 = vmul.f32 %v2303, 0.7978846
    %v2306 = vtanh.pop %v2304
    %v2307 = vtanh.pop %v2305
    %v2308 = vadd.f32 %v2306, 1.0
    %v2309 = vadd.f32 %v2307, 1.0
    %v2310 = vmul.f32 %v2294, %v2308
    %v2311 = vmul.f32 %v2295, %v2309
    %v2312 = vpack.c.bf16 %v2311, %v2310
    %v2313 = vld [vmem:[%s9] sm:$0xf]
    %v2314 = vld [vmem:[%s9 + $0x4] sm:$0xf]
    %v2315 = vld [vmem:[%s9 + $0x8] sm:$0xf]
    %v2316 = vld [vmem:[%s9 + $0xc] sm:$0xf]
    %v2317 = vld [vmem:[%s9 + $0x10] sm:$0xf]
    %v2318 = vld [vmem:[%s9 + $0x14] sm:$0xf]
    %v2319 = vld [vmem:[%s9 + $0x18] sm:$0xf]
    %v2320 = vld [vmem:[%s9 + $0x1c] sm:$0xf]
    %v2321 = vlaneseq
    %v2322 = vshrl.u32 %v2321, 7
    %v2323 = vsub.s32 4, %v2322
    %v2324 = vrot.slane %v2182, %v2323
    %v2333 = vunpack.c.l.b16 %v2313
    %v2334 = vunpack.c.l.b16 %v2314
    %v2335 = vunpack.c.l.b16 %v2315
    %v2336 = vunpack.c.l.b16 %v2316
    %v2337 = vunpack.c.l.b16 %v2317
    %v2338 = vunpack.c.l.b16 %v2318
    %v2339 = vunpack.c.l.b16 %v2319
    %v2340 = vunpack.c.l.b16 %v2320
    %v2341 = vpack.c.b16 %v2334, %v2333
    %v2342 = vpack.c.b16 %v2336, %v2335
    %v2343 = vpack.c.b16 %v2338, %v2337
    %v2344 = vpack.c.b16 %v2340, %v2339
    %vm2349 = vcmask 523264
    %v2351 = vsel %vm2349, %v2312, 0
    %2353 = vmatprep.subr.bf16.mxu0 0
    %2354 = vmatpush1.bf16.msra.mxu0 0
    %2355 = vmatprep.subr.bf16.mxu0 0
    %2356 = vmatpush1.bf16.msra.mxu0 0
    %2357 = vmatprep.subr.bf16.mxu0 0
    %2358 = vmatpush1.bf16.msra.mxu0 0
    %2359 = vmatprep.subr.bf16.mxu0 0
    %2360 = vmatpush1.bf16.msra.mxu0 0
    %2361 = vmatprep.subr.bf16.mxu0 0
    %2362 = vmatpush1.bf16.msra.mxu0 %v2344
    %2363 = vmatprep.subr.bf16.mxu0 0
    %2364 = vmatpush1.bf16.msra.mxu0 %v2343
    %2365 = vmatprep.subr.bf16.mxu0 0
    %2366 = vmatpush1.bf16.msra.mxu0 %v2342
    %2367 = vmatprep.subr.bf16.mxu0 0
    %2368 = vmatpush1.bf16.msra.mxu0 %v2341
    %2369 = vmatprep.subr.bf16.mxu0 0
    %2370 = vmatpush2.bf16.msra.mxu0 0
    %2371 = vmatprep.subr.bf16.mxu0 0
    %2372 = vmatpush2.bf16.msra.mxu0 0
    %2373 = vmatprep.subr.bf16.mxu0 0
    %2374 = vmatpush2.bf16.msra.mxu0 0
    %2375 = vmatprep.subr.bf16.mxu0 0
    %2376 = vmatpush2.bf16.msra.mxu0 0
    %2377 = vmatprep.subr.bf16.mxu0 0
    %2378 = vmatpush2.bf16.msra.mxu0 0
    %2379 = vmatprep.subr.bf16.mxu0 0
    %2380 = vmatpush2.bf16.msra.mxu0 0
    %2381 = vmatprep.subr.bf16.mxu0 0
    %2382 = vmatpush2.bf16.msra.mxu0 0
    %2383 = vmatprep.subr.bf16.mxu0 0
    %2384 = vmatpush2.bf16.msra.mxu0 0
    %2385 = vmatprep.mubr.bf16.mxu0 0
    %2386 = vmatmul.mubr.bf16.gmra.mxu0 %v2351
    %v2387 = vpop.f32.mrf.mxu0
    %v2388 = vadd.f32 %v2324, %v2387
    %v2389 = vpop.f32.mrf.mxu0
    %v2390 = vpop.f32.mrf.mxu0
    %v2391 = vadd.f32 %v2324, %v2390
    %v2392 = vpop.f32.mrf.mxu0
    %2393 = vdwg.mxu0
    %v2394 = vadd.f32 %v2388, %v2227
    %v2395 = vadd.f32 %v2391, %v2228
    %v2396 = vsel %vm246, %v2394, 0.0
    %2397 = vadd.xlane.f32.xlu0 %v2396
    %v2398 = vpop.xlane.xlu0 %2397
    %v2399 = vsel %vm246, %v2395, 0.0
    %2400 = vadd.xlane.f32.xlu0 %v2399
    %v2401 = vpop.xlane.xlu0 %2400
    %v2402 = vmul.f32 %v2398, %v253
    %v2403 = vmul.f32 %v2401, %v253
    %v2404 = vsub.f32 %v2394, %v2402
    %v2405 = vsub.f32 %v2395, %v2403
    %v2406 = vmul.f32 %v2404, %v2404
    %v2407 = vmul.f32 %v2405, %v2405
    %v2408 = vsel %vm246, %v2406, 0.0
    %2409 = vadd.xlane.f32.xlu0 %v2408
    %v2410 = vpop.xlane.xlu0 %2409
    %v2411 = vsel %vm246, %v2407, 0.0
    %2412 = vadd.xlane.f32.xlu0 %v2411
    %v2413 = vpop.xlane.xlu0 %2412
    %v2414 = vmul.f32 %v2410, %v253
    %v2415 = vmul.f32 %v2413, %v253
    %v2416 = vadd.f32 %v2414, 1e-12
    %v2417 = vadd.f32 %v2415, 1e-12
    %v2418 = vrsqrt.pop %v2416
    %v2419 = vrsqrt.pop %v2417
    %v2420 = vmul.f32 %v2404, %v2418
    %v2421 = vmul.f32 %v2405, %v2419
    %v2422 = vlaneseq
    %v2423 = vshrl.u32 %v2422, 7
    %v2424 = vsub.s32 5, %v2423
    %v2425 = vrot.slane %v2182, %v2424
    %v2426 = vmul.f32 %v2420, %v2425
    %v2427 = vmul.f32 %v2421, %v2425
    %v2428 = vlaneseq
    %v2429 = vshrl.u32 %v2428, 7
    %v2430 = vsub.s32 6, %v2429
    %v2431 = vrot.slane %v2182, %v2430
    %v2432 = vadd.f32 %v2426, %v2431
    %v2433 = vadd.f32 %v2427, %v2431
    %v2434 = vpack.c.bf16 %v2433, %v2432
    %s2435 = scalar_lea.vmem %s4, 192
    %v2436 = vld [vmem:[%s2435] sm:$0xf]
    %v2437 = vld [vmem:[%s2435 + $0x4] sm:$0xf]
    %v2438 = vld [vmem:[%s2435 + $0x8] sm:$0xf]
    %v2439 = vld [vmem:[%s2435 + $0xc] sm:$0xf]
    %s2440 = scalar_lea.vmem %s5, 12
    %v2441 = vld [vmem:[%s2440] sm:$0x1]
    %v2443 = vlaneseq
    %v2444 = vshrl.u32 %v2443, 7
    %v2445 = vsub.s32 0, %v2444
    %v2446 = vrot.slane %v2441, %v2445
    %v2452 = vunpack.c.l.b16 %v2436
    %v2453 = vunpack.c.l.b16 %v2437
    %v2454 = vunpack.c.l.b16 %v2438
    %v2455 = vunpack.c.l.b16 %v2439
    %v2456 = vpack.c.b16 %v2453, %v2452
    %v2457 = vpack.c.b16 %v2455, %v2454
    %v2461 = vsel %vm246, %v2434, 0
    %2463 = vmatprep.subr.bf16.mxu0 0
    %2464 = vmatpush1.bf16.msra.mxu0 0
    %2465 = vmatprep.subr.bf16.mxu0 0
    %2466 = vmatpush1.bf16.msra.mxu0 0
    %2467 = vmatprep.subr.bf16.mxu0 0
    %2468 = vmatpush1.bf16.msra.mxu0 0
    %2469 = vmatprep.subr.bf16.mxu0 0
    %2470 = vmatpush1.bf16.msra.mxu0 0
    %2471 = vmatprep.subr.bf16.mxu0 0
    %2472 = vmatpush1.bf16.msra.mxu0 0
    %2473 = vmatprep.subr.bf16.mxu0 0
    %2474 = vmatpush1.bf16.msra.mxu0 0
    %2475 = vmatprep.subr.bf16.mxu0 0
    %2476 = vmatpush1.bf16.msra.mxu0 %v2457
    %2477 = vmatprep.subr.bf16.mxu0 0
    %2478 = vmatpush1.bf16.msra.mxu0 %v2456
    %2479 = vmatprep.subr.bf16.mxu0 0
    %2480 = vmatpush2.bf16.msra.mxu0 0
    %2481 = vmatprep.subr.bf16.mxu0 0
    %2482 = vmatpush2.bf16.msra.mxu0 0
    %2483 = vmatprep.subr.bf16.mxu0 0
    %2484 = vmatpush2.bf16.msra.mxu0 0
    %2485 = vmatprep.subr.bf16.mxu0 0
    %2486 = vmatpush2.bf16.msra.mxu0 0
    %2487 = vmatprep.subr.bf16.mxu0 0
    %2488 = vmatpush2.bf16.msra.mxu0 0
    %2489 = vmatprep.subr.bf16.mxu0 0
    %2490 = vmatpush2.bf16.msra.mxu0 0
    %2491 = vmatprep.subr.bf16.mxu0 0
    %2492 = vmatpush2.bf16.msra.mxu0 0
    %2493 = vmatprep.subr.bf16.mxu0 0
    %2494 = vmatpush2.bf16.msra.mxu0 0
    %2495 = vmatprep.mubr.bf16.mxu0 0
    %2496 = vmatmul.mubr.bf16.gmra.mxu0 %v2461
    %v2497 = vpop.f32.mrf.mxu0
    %v2498 = vadd.f32 %v2446, %v2497
    %v2499 = vpop.f32.mrf.mxu0
    %v2500 = vpop.f32.mrf.mxu0
    %v2501 = vadd.f32 %v2446, %v2500
    %v2502 = vpop.f32.mrf.mxu0
    %2503 = vdwg.mxu0
    %s2504 = scalar_lea.vmem %s4, 256
    %v2505 = vld [vmem:[%s2504] sm:$0xf]
    %v2506 = vld [vmem:[%s2504 + $0x4] sm:$0xf]
    %v2507 = vld [vmem:[%s2504 + $0x8] sm:$0xf]
    %v2508 = vld [vmem:[%s2504 + $0xc] sm:$0xf]
    %s2509 = scalar_lea.vmem %s5, 16
    %v2510 = vld [vmem:[%s2509] sm:$0x1]
    %v2512 = vlaneseq
    %v2513 = vshrl.u32 %v2512, 7
    %v2514 = vsub.s32 0, %v2513
    %v2515 = vrot.slane %v2510, %v2514
    %v2521 = vunpack.c.l.b16 %v2505
    %v2522 = vunpack.c.l.b16 %v2506
    %v2523 = vunpack.c.l.b16 %v2507
    %v2524 = vunpack.c.l.b16 %v2508
    %v2525 = vpack.c.b16 %v2522, %v2521
    %v2526 = vpack.c.b16 %v2524, %v2523
    %2529 = vmatprep.subr.bf16.mxu0 0
    %2530 = vmatpush1.bf16.msra.mxu0 0
    %2531 = vmatprep.subr.bf16.mxu0 0
    %2532 = vmatpush1.bf16.msra.mxu0 0
    %2533 = vmatprep.subr.bf16.mxu0 0
    %2534 = vmatpush1.bf16.msra.mxu0 0
    %2535 = vmatprep.subr.bf16.mxu0 0
    %2536 = vmatpush1.bf16.msra.mxu0 0
    %2537 = vmatprep.subr.bf16.mxu0 0
    %2538 = vmatpush1.bf16.msra.mxu0 0
    %2539 = vmatprep.subr.bf16.mxu0 0
    %2540 = vmatpush1.bf16.msra.mxu0 0
    %2541 = vmatprep.subr.bf16.mxu0 0
    %2542 = vmatpush1.bf16.msra.mxu0 %v2526
    %2543 = vmatprep.subr.bf16.mxu0 0
    %2544 = vmatpush1.bf16.msra.mxu0 %v2525
    %2545 = vmatprep.subr.bf16.mxu0 0
    %2546 = vmatpush2.bf16.msra.mxu0 0
    %2547 = vmatprep.subr.bf16.mxu0 0
    %2548 = vmatpush2.bf16.msra.mxu0 0
    %2549 = vmatprep.subr.bf16.mxu0 0
    %2550 = vmatpush2.bf16.msra.mxu0 0
    %2551 = vmatprep.subr.bf16.mxu0 0
    %2552 = vmatpush2.bf16.msra.mxu0 0
    %2553 = vmatprep.subr.bf16.mxu0 0
    %2554 = vmatpush2.bf16.msra.mxu0 0
    %2555 = vmatprep.subr.bf16.mxu0 0
    %2556 = vmatpush2.bf16.msra.mxu0 0
    %2557 = vmatprep.subr.bf16.mxu0 0
    %2558 = vmatpush2.bf16.msra.mxu0 0
    %2559 = vmatprep.subr.bf16.mxu0 0
    %2560 = vmatpush2.bf16.msra.mxu0 0
    %2561 = vmatprep.mubr.bf16.mxu0 0
    %2562 = vmatmul.mubr.bf16.gmra.mxu0 %v2461
    %v2563 = vpop.f32.mrf.mxu0
    %v2564 = vadd.f32 %v2515, %v2563
    %v2565 = vpop.f32.mrf.mxu0
    %v2566 = vpop.f32.mrf.mxu0
    %v2567 = vadd.f32 %v2515, %v2566
    %v2568 = vpop.f32.mrf.mxu0
    %2569 = vdwg.mxu0
    %s2570 = scalar_lea.vmem %s4, 320
    %v2571 = vld [vmem:[%s2570] sm:$0xf]
    %v2572 = vld [vmem:[%s2570 + $0x4] sm:$0xf]
    %v2573 = vld [vmem:[%s2570 + $0x8] sm:$0xf]
    %v2574 = vld [vmem:[%s2570 + $0xc] sm:$0xf]
    %s2575 = scalar_lea.vmem %s5, 20
    %v2576 = vld [vmem:[%s2575] sm:$0x1]
    %v2578 = vlaneseq
    %v2579 = vshrl.u32 %v2578, 7
    %v2580 = vsub.s32 0, %v2579
    %v2581 = vrot.slane %v2576, %v2580
    %v2587 = vunpack.c.l.b16 %v2571
    %v2588 = vunpack.c.l.b16 %v2572
    %v2589 = vunpack.c.l.b16 %v2573
    %v2590 = vunpack.c.l.b16 %v2574
    %v2591 = vpack.c.b16 %v2588, %v2587
    %v2592 = vpack.c.b16 %v2590, %v2589
    %2595 = vmatprep.subr.bf16.mxu0 0
    %2596 = vmatpush1.bf16.msra.mxu0 0
    %2597 = vmatprep.subr.bf16.mxu0 0
    %2598 = vmatpush1.bf16.msra.mxu0 0
    %2599 = vmatprep.subr.bf16.mxu0 0
    %2600 = vmatpush1.bf16.msra.mxu0 0
    %2601 = vmatprep.subr.bf16.mxu0 0
    %2602 = vmatpush1.bf16.msra.mxu0 0
    %2603 = vmatprep.subr.bf16.mxu0 0
    %2604 = vmatpush1.bf16.msra.mxu0 0
    %2605 = vmatprep.subr.bf16.mxu0 0
    %2606 = vmatpush1.bf16.msra.mxu0 0
    %2607 = vmatprep.subr.bf16.mxu0 0
    %2608 = vmatpush1.bf16.msra.mxu0 %v2592
    %2609 = vmatprep.subr.bf16.mxu0 0
    %2610 = vmatpush1.bf16.msra.mxu0 %v2591
    %2611 = vmatprep.subr.bf16.mxu0 0
    %2612 = vmatpush2.bf16.msra.mxu0 0
    %2613 = vmatprep.subr.bf16.mxu0 0
    %2614 = vmatpush2.bf16.msra.mxu0 0
    %2615 = vmatprep.subr.bf16.mxu0 0
    %2616 = vmatpush2.bf16.msra.mxu0 0
    %2617 = vmatprep.subr.bf16.mxu0 0
    %2618 = vmatpush2.bf16.msra.mxu0 0
    %2619 = vmatprep.subr.bf16.mxu0 0
    %2620 = vmatpush2.bf16.msra.mxu0 0
    %2621 = vmatprep.subr.bf16.mxu0 0
    %2622 = vmatpush2.bf16.msra.mxu0 0
    %2623 = vmatprep.subr.bf16.mxu0 0
    %2624 = vmatpush2.bf16.msra.mxu0 0
    %2625 = vmatprep.subr.bf16.mxu0 0
    %2626 = vmatpush2.bf16.msra.mxu0 0
    %2627 = vmatprep.mubr.bf16.mxu0 0
    %2628 = vmatmul.mubr.bf16.gmra.mxu0 %v2461
    %v2629 = vpop.f32.mrf.mxu0
    %v2630 = vadd.f32 %v2581, %v2629
    %v2631 = vpop.f32.mrf.mxu0
    %v2632 = vpop.f32.mrf.mxu0
    %v2633 = vadd.f32 %v2581, %v2632
    %v2634 = vpop.f32.mrf.mxu0
    %2635 = vdwg.mxu0
    %v2636 = vpack.c.bf16 %v2498, %v2498
    %v2637 = vpack.c.bf16 %v2501, %v2501
    %v2638 = vpack.c.bf16 %v2564, %v2564
    %v2639 = vpack.c.bf16 %v2567, %v2567
    %v2641 = vsel %vm85, %v2636, 0
    %v2644 = vsel %vm85, %v2638, 0
    %2646 = vmatprep.subr.bf16.mxu0 0
    %2647 = vmatpush1.bf16.xpose.msra.mxu0 0
    %2648 = vmatprep.subr.bf16.mxu0 0
    %2649 = vmatpush1.bf16.xpose.msra.mxu0 0
    %2650 = vmatprep.subr.bf16.mxu0 0
    %2651 = vmatpush1.bf16.xpose.msra.mxu0 0
    %2652 = vmatprep.subr.bf16.mxu0 0
    %2653 = vmatpush1.bf16.xpose.msra.mxu0 0
    %2654 = vmatprep.subr.bf16.mxu0 0
    %2655 = vmatpush1.bf16.xpose.msra.mxu0 0
    %2656 = vmatprep.subr.bf16.mxu0 0
    %2657 = vmatpush1.bf16.xpose.msra.mxu0 0
    %2658 = vmatprep.subr.bf16.mxu0 0
    %2659 = vmatpush1.bf16.xpose.msra.mxu0 0
    %2660 = vmatprep.subr.bf16.mxu0 0
    %2661 = vmatpush1.bf16.xpose.msra.mxu0 %v2644
    %2662 = vmatprep.subr.bf16.mxu0 0
    %2663 = vmatpush2.bf16.xpose.msra.mxu0 0
    %2664 = vmatprep.subr.bf16.mxu0 0
    %2665 = vmatpush2.bf16.xpose.msra.mxu0 0
    %2666 = vmatprep.subr.bf16.mxu0 0
    %2667 = vmatpush2.bf16.xpose.msra.mxu0 0
    %2668 = vmatprep.subr.bf16.mxu0 0
    %2669 = vmatpush2.bf16.xpose.msra.mxu0 0
    %2670 = vmatprep.subr.bf16.mxu0 0
    %2671 = vmatpush2.bf16.xpose.msra.mxu0 0
    %2672 = vmatprep.subr.bf16.mxu0 0
    %2673 = vmatpush2.bf16.xpose.msra.mxu0 0
    %2674 = vmatprep.subr.bf16.mxu0 0
    %2675 = vmatpush2.bf16.xpose.msra.mxu0 0
    %2676 = vmatprep.subr.bf16.mxu0 0
    %2677 = vmatpush2.bf16.xpose.msra.mxu0 0
    %2678 = vmatprep.mubr.bf16.mxu0 0
    %2679 = vmatmul.mubr.bf16.gmra.mxu0 %v2641
    %v2680 = vpop.f32.mrf.mxu0
    %v2681 = vadd.f32 %v525, %v2680
    %v2682 = vpop.f32.mrf.mxu0
    %v2683 = vpop.f32.mrf.mxu0
    %v2684 = vpop.f32.mrf.mxu0
    %2685 = vdwg.mxu0
    %v2687 = vsel %vm85, %v2637, 0
    %v2690 = vsel %vm85, %v2639, 0
    %2692 = vmatprep.subr.bf16.mxu0 0
    %2693 = vmatpush1.bf16.xpose.msra.mxu0 0
    %2694 = vmatprep.subr.bf16.mxu0 0
    %2695 = vmatpush1.bf16.xpose.msra.mxu0 0
    %2696 = vmatprep.subr.bf16.mxu0 0
    %2697 = vmatpush1.bf16.xpose.msra.mxu0 0
    %2698 = vmatprep.subr.bf16.mxu0 0
    %2699 = vmatpush1.bf16.xpose.msra.mxu0 0
    %2700 = vmatprep.subr.bf16.mxu0 0
    %2701 = vmatpush1.bf16.xpose.msra.mxu0 0
    %2702 = vmatprep.subr.bf16.mxu0 0
    %2703 = vmatpush1.bf16.xpose.msra.mxu0 0
    %2704 = vmatprep.subr.bf16.mxu0 0
    %2705 = vmatpush1.bf16.xpose.msra.mxu0 0
    %2706 = vmatprep.subr.bf16.mxu0 0
    %2707 = vmatpush1.bf16.xpose.msra.mxu0 %v2690
    %2708 = vmatprep.subr.bf16.mxu0 0
    %2709 = vmatpush2.bf16.xpose.msra.mxu0 0
    %2710 = vmatprep.subr.bf16.mxu0 0
    %2711 = vmatpush2.bf16.xpose.msra.mxu0 0
    %2712 = vmatprep.subr.bf16.mxu0 0
    %2713 = vmatpush2.bf16.xpose.msra.mxu0 0
    %2714 = vmatprep.subr.bf16.mxu0 0
    %2715 = vmatpush2.bf16.xpose.msra.mxu0 0
    %2716 = vmatprep.subr.bf16.mxu0 0
    %2717 = vmatpush2.bf16.xpose.msra.mxu0 0
    %2718 = vmatprep.subr.bf16.mxu0 0
    %2719 = vmatpush2.bf16.xpose.msra.mxu0 0
    %2720 = vmatprep.subr.bf16.mxu0 0
    %2721 = vmatpush2.bf16.xpose.msra.mxu0 0
    %2722 = vmatprep.subr.bf16.mxu0 0
    %2723 = vmatpush2.bf16.xpose.msra.mxu0 0
    %2724 = vmatprep.mubr.bf16.mxu0 0
    %2725 = vmatmul.mubr.bf16.gmra.mxu0 %v2687
    %v2726 = vpop.f32.mrf.mxu0
    %v2727 = vadd.f32 %v529, %v2726
    %v2728 = vpop.f32.mrf.mxu0
    %v2729 = vpop.f32.mrf.mxu0
    %v2730 = vpop.f32.mrf.mxu0
    %2731 = vdwg.mxu0
    %v2732 = vsel %vm85, %v2681, -inf
    %2733 = vmax.xlane.f32.xlu0 %v2732
    %v2734 = vpop.xlane.xlu0 %2733
    %v2735 = vsel %vm85, %v2727, -inf
    %2736 = vmax.xlane.f32.xlu0 %v2735
    %v2737 = vpop.xlane.xlu0 %2736
    %v2738 = vsub.f32 %v2681, %v2734
    %v2739 = vsub.f32 %v2727, %v2737
    %v2740 = vmul.f32 %v2738, 1.442695
    %v2741 = vpow.pop %v2740
    %v2742 = vmul.f32 %v2739, 1.442695
    %v2743 = vpow.pop %v2742
    %v2744 = vsel %vm85, %v2741, 0.0
    %2745 = vadd.xlane.f32.xlu0 %v2744
    %v2746 = vpop.xlane.xlu0 %2745
    %v2747 = vsel %vm85, %v2743, 0.0
    %2748 = vadd.xlane.f32.xlu0 %v2747
    %v2749 = vpop.xlane.xlu0 %2748
    %v2750 = vrcp.pop %v2746
    %v2751 = vrcp.pop %v2749
    %v2752 = vmul.f32 %v2741, %v2750
    %v2753 = vmul.f32 %v2743, %v2751
    %v2754 = vpack.c.bf16 %v2752, %v2752
    %v2755 = vpack.c.bf16 %v2753, %v2753
    %v2756 = vpack.c.bf16 %v2630, %v2630
    %v2757 = vpack.c.bf16 %v2633, %v2633
    %v2759 = vsel %vm85, %v2754, 0
    %v2762 = vsel %vm653, %v2756, 0
    %2764 = vmatprep.subr.bf16.mxu0 0
    %2765 = vmatpush1.bf16.msra.mxu0 0
    %2766 = vmatprep.subr.bf16.mxu0 0
    %2767 = vmatpush1.bf16.msra.mxu0 0
    %2768 = vmatprep.subr.bf16.mxu0 0
    %2769 = vmatpush1.bf16.msra.mxu0 0
    %2770 = vmatprep.subr.bf16.mxu0 0
    %2771 = vmatpush1.bf16.msra.mxu0 0
    %2772 = vmatprep.subr.bf16.mxu0 0
    %2773 = vmatpush1.bf16.msra.mxu0 0
    %2774 = vmatprep.subr.bf16.mxu0 0
    %2775 = vmatpush1.bf16.msra.mxu0 0
    %2776 = vmatprep.subr.bf16.mxu0 0
    %2777 = vmatpush1.bf16.msra.mxu0 0
    %2778 = vmatprep.subr.bf16.mxu0 0
    %2779 = vmatpush1.bf16.msra.mxu0 %v2762
    %2780 = vmatprep.subr.bf16.mxu0 0
    %2781 = vmatpush2.bf16.msra.mxu0 0
    %2782 = vmatprep.subr.bf16.mxu0 0
    %2783 = vmatpush2.bf16.msra.mxu0 0
    %2784 = vmatprep.subr.bf16.mxu0 0
    %2785 = vmatpush2.bf16.msra.mxu0 0
    %2786 = vmatprep.subr.bf16.mxu0 0
    %2787 = vmatpush2.bf16.msra.mxu0 0
    %2788 = vmatprep.subr.bf16.mxu0 0
    %2789 = vmatpush2.bf16.msra.mxu0 0
    %2790 = vmatprep.subr.bf16.mxu0 0
    %2791 = vmatpush2.bf16.msra.mxu0 0
    %2792 = vmatprep.subr.bf16.mxu0 0
    %2793 = vmatpush2.bf16.msra.mxu0 0
    %2794 = vmatprep.subr.bf16.mxu0 0
    %2795 = vmatpush2.bf16.msra.mxu0 0
    %2796 = vmatprep.mubr.bf16.mxu0 0
    %2797 = vmatmul.mubr.bf16.gmra.mxu0 %v2759
    %v2798 = vpop.f32.mrf.mxu0
    %v2799 = vadd.f32 0.0, %v2798
    %v2800 = vpop.f32.mrf.mxu0
    %v2801 = vpop.f32.mrf.mxu0
    %v2802 = vpop.f32.mrf.mxu0
    %2803 = vdwg.mxu0
    %v2805 = vsel %vm85, %v2755, 0
    %v2808 = vsel %vm653, %v2757, 0
    %2810 = vmatprep.subr.bf16.mxu0 0
    %2811 = vmatpush1.bf16.msra.mxu0 0
    %2812 = vmatprep.subr.bf16.mxu0 0
    %2813 = vmatpush1.bf16.msra.mxu0 0
    %2814 = vmatprep.subr.bf16.mxu0 0
    %2815 = vmatpush1.bf16.msra.mxu0 0
    %2816 = vmatprep.subr.bf16.mxu0 0
    %2817 = vmatpush1.bf16.msra.mxu0 0
    %2818 = vmatprep.subr.bf16.mxu0 0
    %2819 = vmatpush1.bf16.msra.mxu0 0
    %2820 = vmatprep.subr.bf16.mxu0 0
    %2821 = vmatpush1.bf16.msra.mxu0 0
    %2822 = vmatprep.subr.bf16.mxu0 0
    %2823 = vmatpush1.bf16.msra.mxu0 0
    %2824 = vmatprep.subr.bf16.mxu0 0
    %2825 = vmatpush1.bf16.msra.mxu0 %v2808
    %2826 = vmatprep.subr.bf16.mxu0 0
    %2827 = vmatpush2.bf16.msra.mxu0 0
    %2828 = vmatprep.subr.bf16.mxu0 0
    %2829 = vmatpush2.bf16.msra.mxu0 0
    %2830 = vmatprep.subr.bf16.mxu0 0
    %2831 = vmatpush2.bf16.msra.mxu0 0
    %2832 = vmatprep.subr.bf16.mxu0 0
    %2833 = vmatpush2.bf16.msra.mxu0 0
    %2834 = vmatprep.subr.bf16.mxu0 0
    %2835 = vmatpush2.bf16.msra.mxu0 0
    %2836 = vmatprep.subr.bf16.mxu0 0
    %2837 = vmatpush2.bf16.msra.mxu0 0
    %2838 = vmatprep.subr.bf16.mxu0 0
    %2839 = vmatpush2.bf16.msra.mxu0 0
    %2840 = vmatprep.subr.bf16.mxu0 0
    %2841 = vmatpush2.bf16.msra.mxu0 0
    %2842 = vmatprep.mubr.bf16.mxu0 0
    %2843 = vmatmul.mubr.bf16.gmra.mxu0 %v2805
    %v2844 = vpop.f32.mrf.mxu0
    %v2845 = vadd.f32 0.0, %v2844
    %v2846 = vpop.f32.mrf.mxu0
    %v2847 = vpop.f32.mrf.mxu0
    %v2848 = vpop.f32.mrf.mxu0
    %2849 = vdwg.mxu0
    %v2850 = vpack.c.bf16 %v2845, %v2799
    %s2851 = scalar_lea.vmem %s6, 16
    %v2852 = vld [vmem:[%s2851] sm:$0xf]
    %s2853 = scalar_lea.vmem %s4, 208
    %v2854 = vld [vmem:[%s2853] sm:$0xf]
    %v2855 = vld [vmem:[%s2853 + $0x4] sm:$0xf]
    %v2856 = vld [vmem:[%s2853 + $0x8] sm:$0xf]
    %v2857 = vld [vmem:[%s2853 + $0xc] sm:$0xf]
    %s2858 = scalar_lea.vmem %s5, 13
    %v2859 = vld [vmem:[%s2858] sm:$0x1]
    %v2861 = vlaneseq
    %v2862 = vshrl.u32 %v2861, 7
    %v2863 = vsub.s32 0, %v2862
    %v2864 = vrot.slane %v2859, %v2863
    %v2870 = vunpack.c.l.b16 %v2854
    %v2871 = vunpack.c.l.b16 %v2855
    %v2872 = vunpack.c.l.b16 %v2856
    %v2873 = vunpack.c.l.b16 %v2857
    %v2874 = vpack.c.b16 %v2871, %v2870
    %v2875 = vpack.c.b16 %v2873, %v2872
    %2878 = vmatprep.subr.bf16.mxu0 0
    %2879 = vmatpush1.bf16.msra.mxu0 0
    %2880 = vmatprep.subr.bf16.mxu0 0
    %2881 = vmatpush1.bf16.msra.mxu0 0
    %2882 = vmatprep.subr.bf16.mxu0 0
    %2883 = vmatpush1.bf16.msra.mxu0 0
    %2884 = vmatprep.subr.bf16.mxu0 0
    %2885 = vmatpush1.bf16.msra.mxu0 0
    %2886 = vmatprep.subr.bf16.mxu0 0
    %2887 = vmatpush1.bf16.msra.mxu0 0
    %2888 = vmatprep.subr.bf16.mxu0 0
    %2889 = vmatpush1.bf16.msra.mxu0 0
    %2890 = vmatprep.subr.bf16.mxu0 0
    %2891 = vmatpush1.bf16.msra.mxu0 %v2875
    %2892 = vmatprep.subr.bf16.mxu0 0
    %2893 = vmatpush1.bf16.msra.mxu0 %v2874
    %2894 = vmatprep.subr.bf16.mxu0 0
    %2895 = vmatpush2.bf16.msra.mxu0 0
    %2896 = vmatprep.subr.bf16.mxu0 0
    %2897 = vmatpush2.bf16.msra.mxu0 0
    %2898 = vmatprep.subr.bf16.mxu0 0
    %2899 = vmatpush2.bf16.msra.mxu0 0
    %2900 = vmatprep.subr.bf16.mxu0 0
    %2901 = vmatpush2.bf16.msra.mxu0 0
    %2902 = vmatprep.subr.bf16.mxu0 0
    %2903 = vmatpush2.bf16.msra.mxu0 0
    %2904 = vmatprep.subr.bf16.mxu0 0
    %2905 = vmatpush2.bf16.msra.mxu0 0
    %2906 = vmatprep.subr.bf16.mxu0 0
    %2907 = vmatpush2.bf16.msra.mxu0 0
    %2908 = vmatprep.subr.bf16.mxu0 0
    %2909 = vmatpush2.bf16.msra.mxu0 0
    %2910 = vmatprep.mubr.bf16.mxu0 0
    %2911 = vmatmul.mubr.bf16.gmra.mxu0 %v2461
    %v2912 = vpop.f32.mrf.mxu0
    %v2913 = vadd.f32 %v2864, %v2912
    %v2914 = vpop.f32.mrf.mxu0
    %v2915 = vpop.f32.mrf.mxu0
    %v2916 = vadd.f32 %v2864, %v2915
    %v2917 = vpop.f32.mrf.mxu0
    %2918 = vdwg.mxu0
    %s2919 = scalar_lea.vmem %s4, 272
    %v2920 = vld [vmem:[%s2919] sm:$0xf]
    %v2921 = vld [vmem:[%s2919 + $0x4] sm:$0xf]
    %v2922 = vld [vmem:[%s2919 + $0x8] sm:$0xf]
    %v2923 = vld [vmem:[%s2919 + $0xc] sm:$0xf]
    %s2924 = scalar_lea.vmem %s5, 17
    %v2925 = vld [vmem:[%s2924] sm:$0x1]
    %v2927 = vlaneseq
    %v2928 = vshrl.u32 %v2927, 7
    %v2929 = vsub.s32 0, %v2928
    %v2930 = vrot.slane %v2925, %v2929
    %v2936 = vunpack.c.l.b16 %v2920
    %v2937 = vunpack.c.l.b16 %v2921
    %v2938 = vunpack.c.l.b16 %v2922
    %v2939 = vunpack.c.l.b16 %v2923
    %v2940 = vpack.c.b16 %v2937, %v2936
    %v2941 = vpack.c.b16 %v2939, %v2938
    %2944 = vmatprep.subr.bf16.mxu0 0
    %2945 = vmatpush1.bf16.msra.mxu0 0
    %2946 = vmatprep.subr.bf16.mxu0 0
    %2947 = vmatpush1.bf16.msra.mxu0 0
    %2948 = vmatprep.subr.bf16.mxu0 0
    %2949 = vmatpush1.bf16.msra.mxu0 0
    %2950 = vmatprep.subr.bf16.mxu0 0
    %2951 = vmatpush1.bf16.msra.mxu0 0
    %2952 = vmatprep.subr.bf16.mxu0 0
    %2953 = vmatpush1.bf16.msra.mxu0 0
    %2954 = vmatprep.subr.bf16.mxu0 0
    %2955 = vmatpush1.bf16.msra.mxu0 0
    %2956 = vmatprep.subr.bf16.mxu0 0
    %2957 = vmatpush1.bf16.msra.mxu0 %v2941
    %2958 = vmatprep.subr.bf16.mxu0 0
    %2959 = vmatpush1.bf16.msra.mxu0 %v2940
    %2960 = vmatprep.subr.bf16.mxu0 0
    %2961 = vmatpush2.bf16.msra.mxu0 0
    %2962 = vmatprep.subr.bf16.mxu0 0
    %2963 = vmatpush2.bf16.msra.mxu0 0
    %2964 = vmatprep.subr.bf16.mxu0 0
    %2965 = vmatpush2.bf16.msra.mxu0 0
    %2966 = vmatprep.subr.bf16.mxu0 0
    %2967 = vmatpush2.bf16.msra.mxu0 0
    %2968 = vmatprep.subr.bf16.mxu0 0
    %2969 = vmatpush2.bf16.msra.mxu0 0
    %2970 = vmatprep.subr.bf16.mxu0 0
    %2971 = vmatpush2.bf16.msra.mxu0 0
    %2972 = vmatprep.subr.bf16.mxu0 0
    %2973 = vmatpush2.bf16.msra.mxu0 0
    %2974 = vmatprep.subr.bf16.mxu0 0
    %2975 = vmatpush2.bf16.msra.mxu0 0
    %2976 = vmatprep.mubr.bf16.mxu0 0
    %2977 = vmatmul.mubr.bf16.gmra.mxu0 %v2461
    %v2978 = vpop.f32.mrf.mxu0
    %v2979 = vadd.f32 %v2930, %v2978
    %v2980 = vpop.f32.mrf.mxu0
    %v2981 = vpop.f32.mrf.mxu0
    %v2982 = vadd.f32 %v2930, %v2981
    %v2983 = vpop.f32.mrf.mxu0
    %2984 = vdwg.mxu0
    %s2985 = scalar_lea.vmem %s4, 336
    %v2986 = vld [vmem:[%s2985] sm:$0xf]
    %v2987 = vld [vmem:[%s2985 + $0x4] sm:$0xf]
    %v2988 = vld [vmem:[%s2985 + $0x8] sm:$0xf]
    %v2989 = vld [vmem:[%s2985 + $0xc] sm:$0xf]
    %s2990 = scalar_lea.vmem %s5, 21
    %v2991 = vld [vmem:[%s2990] sm:$0x1]
    %v2993 = vlaneseq
    %v2994 = vshrl.u32 %v2993, 7
    %v2995 = vsub.s32 0, %v2994
    %v2996 = vrot.slane %v2991, %v2995
    %v3002 = vunpack.c.l.b16 %v2986
    %v3003 = vunpack.c.l.b16 %v2987
    %v3004 = vunpack.c.l.b16 %v2988
    %v3005 = vunpack.c.l.b16 %v2989
    %v3006 = vpack.c.b16 %v3003, %v3002
    %v3007 = vpack.c.b16 %v3005, %v3004
    %3010 = vmatprep.subr.bf16.mxu0 0
    %3011 = vmatpush1.bf16.msra.mxu0 0
    %3012 = vmatprep.subr.bf16.mxu0 0
    %3013 = vmatpush1.bf16.msra.mxu0 0
    %3014 = vmatprep.subr.bf16.mxu0 0
    %3015 = vmatpush1.bf16.msra.mxu0 0
    %3016 = vmatprep.subr.bf16.mxu0 0
    %3017 = vmatpush1.bf16.msra.mxu0 0
    %3018 = vmatprep.subr.bf16.mxu0 0
    %3019 = vmatpush1.bf16.msra.mxu0 0
    %3020 = vmatprep.subr.bf16.mxu0 0
    %3021 = vmatpush1.bf16.msra.mxu0 0
    %3022 = vmatprep.subr.bf16.mxu0 0
    %3023 = vmatpush1.bf16.msra.mxu0 %v3007
    %3024 = vmatprep.subr.bf16.mxu0 0
    %3025 = vmatpush1.bf16.msra.mxu0 %v3006
    %3026 = vmatprep.subr.bf16.mxu0 0
    %3027 = vmatpush2.bf16.msra.mxu0 0
    %3028 = vmatprep.subr.bf16.mxu0 0
    %3029 = vmatpush2.bf16.msra.mxu0 0
    %3030 = vmatprep.subr.bf16.mxu0 0
    %3031 = vmatpush2.bf16.msra.mxu0 0
    %3032 = vmatprep.subr.bf16.mxu0 0
    %3033 = vmatpush2.bf16.msra.mxu0 0
    %3034 = vmatprep.subr.bf16.mxu0 0
    %3035 = vmatpush2.bf16.msra.mxu0 0
    %3036 = vmatprep.subr.bf16.mxu0 0
    %3037 = vmatpush2.bf16.msra.mxu0 0
    %3038 = vmatprep.subr.bf16.mxu0 0
    %3039 = vmatpush2.bf16.msra.mxu0 0
    %3040 = vmatprep.subr.bf16.mxu0 0
    %3041 = vmatpush2.bf16.msra.mxu0 0
    %3042 = vmatprep.mubr.bf16.mxu0 0
    %3043 = vmatmul.mubr.bf16.gmra.mxu0 %v2461
    %v3044 = vpop.f32.mrf.mxu0
    %v3045 = vadd.f32 %v2996, %v3044
    %v3046 = vpop.f32.mrf.mxu0
    %v3047 = vpop.f32.mrf.mxu0
    %v3048 = vadd.f32 %v2996, %v3047
    %v3049 = vpop.f32.mrf.mxu0
    %3050 = vdwg.mxu0
    %v3051 = vpack.c.bf16 %v2913, %v2913
    %v3052 = vpack.c.bf16 %v2916, %v2916
    %v3053 = vpack.c.bf16 %v2979, %v2979
    %v3054 = vpack.c.bf16 %v2982, %v2982
    %v3056 = vsel %vm85, %v3051, 0
    %v3059 = vsel %vm85, %v3053, 0
    %3061 = vmatprep.subr.bf16.mxu0 0
    %3062 = vmatpush1.bf16.xpose.msra.mxu0 0
    %3063 = vmatprep.subr.bf16.mxu0 0
    %3064 = vmatpush1.bf16.xpose.msra.mxu0 0
    %3065 = vmatprep.subr.bf16.mxu0 0
    %3066 = vmatpush1.bf16.xpose.msra.mxu0 0
    %3067 = vmatprep.subr.bf16.mxu0 0
    %3068 = vmatpush1.bf16.xpose.msra.mxu0 0
    %3069 = vmatprep.subr.bf16.mxu0 0
    %3070 = vmatpush1.bf16.xpose.msra.mxu0 0
    %3071 = vmatprep.subr.bf16.mxu0 0
    %3072 = vmatpush1.bf16.xpose.msra.mxu0 0
    %3073 = vmatprep.subr.bf16.mxu0 0
    %3074 = vmatpush1.bf16.xpose.msra.mxu0 0
    %3075 = vmatprep.subr.bf16.mxu0 0
    %3076 = vmatpush1.bf16.xpose.msra.mxu0 %v3059
    %3077 = vmatprep.subr.bf16.mxu0 0
    %3078 = vmatpush2.bf16.xpose.msra.mxu0 0
    %3079 = vmatprep.subr.bf16.mxu0 0
    %3080 = vmatpush2.bf16.xpose.msra.mxu0 0
    %3081 = vmatprep.subr.bf16.mxu0 0
    %3082 = vmatpush2.bf16.xpose.msra.mxu0 0
    %3083 = vmatprep.subr.bf16.mxu0 0
    %3084 = vmatpush2.bf16.xpose.msra.mxu0 0
    %3085 = vmatprep.subr.bf16.mxu0 0
    %3086 = vmatpush2.bf16.xpose.msra.mxu0 0
    %3087 = vmatprep.subr.bf16.mxu0 0
    %3088 = vmatpush2.bf16.xpose.msra.mxu0 0
    %3089 = vmatprep.subr.bf16.mxu0 0
    %3090 = vmatpush2.bf16.xpose.msra.mxu0 0
    %3091 = vmatprep.subr.bf16.mxu0 0
    %3092 = vmatpush2.bf16.xpose.msra.mxu0 0
    %3093 = vmatprep.mubr.bf16.mxu0 0
    %3094 = vmatmul.mubr.bf16.gmra.mxu0 %v3056
    %v3095 = vpop.f32.mrf.mxu0
    %v3096 = vadd.f32 %v525, %v3095
    %v3097 = vpop.f32.mrf.mxu0
    %v3098 = vpop.f32.mrf.mxu0
    %v3099 = vpop.f32.mrf.mxu0
    %3100 = vdwg.mxu0
    %v3102 = vsel %vm85, %v3052, 0
    %v3105 = vsel %vm85, %v3054, 0
    %3107 = vmatprep.subr.bf16.mxu0 0
    %3108 = vmatpush1.bf16.xpose.msra.mxu0 0
    %3109 = vmatprep.subr.bf16.mxu0 0
    %3110 = vmatpush1.bf16.xpose.msra.mxu0 0
    %3111 = vmatprep.subr.bf16.mxu0 0
    %3112 = vmatpush1.bf16.xpose.msra.mxu0 0
    %3113 = vmatprep.subr.bf16.mxu0 0
    %3114 = vmatpush1.bf16.xpose.msra.mxu0 0
    %3115 = vmatprep.subr.bf16.mxu0 0
    %3116 = vmatpush1.bf16.xpose.msra.mxu0 0
    %3117 = vmatprep.subr.bf16.mxu0 0
    %3118 = vmatpush1.bf16.xpose.msra.mxu0 0
    %3119 = vmatprep.subr.bf16.mxu0 0
    %3120 = vmatpush1.bf16.xpose.msra.mxu0 0
    %3121 = vmatprep.subr.bf16.mxu0 0
    %3122 = vmatpush1.bf16.xpose.msra.mxu0 %v3105
    %3123 = vmatprep.subr.bf16.mxu0 0
    %3124 = vmatpush2.bf16.xpose.msra.mxu0 0
    %3125 = vmatprep.subr.bf16.mxu0 0
    %3126 = vmatpush2.bf16.xpose.msra.mxu0 0
    %3127 = vmatprep.subr.bf16.mxu0 0
    %3128 = vmatpush2.bf16.xpose.msra.mxu0 0
    %3129 = vmatprep.subr.bf16.mxu0 0
    %3130 = vmatpush2.bf16.xpose.msra.mxu0 0
    %3131 = vmatprep.subr.bf16.mxu0 0
    %3132 = vmatpush2.bf16.xpose.msra.mxu0 0
    %3133 = vmatprep.subr.bf16.mxu0 0
    %3134 = vmatpush2.bf16.xpose.msra.mxu0 0
    %3135 = vmatprep.subr.bf16.mxu0 0
    %3136 = vmatpush2.bf16.xpose.msra.mxu0 0
    %3137 = vmatprep.subr.bf16.mxu0 0
    %3138 = vmatpush2.bf16.xpose.msra.mxu0 0
    %3139 = vmatprep.mubr.bf16.mxu0 0
    %3140 = vmatmul.mubr.bf16.gmra.mxu0 %v3102
    %v3141 = vpop.f32.mrf.mxu0
    %v3142 = vadd.f32 %v529, %v3141
    %v3143 = vpop.f32.mrf.mxu0
    %v3144 = vpop.f32.mrf.mxu0
    %v3145 = vpop.f32.mrf.mxu0
    %3146 = vdwg.mxu0
    %v3147 = vsel %vm85, %v3096, -inf
    %3148 = vmax.xlane.f32.xlu0 %v3147
    %v3149 = vpop.xlane.xlu0 %3148
    %v3150 = vsel %vm85, %v3142, -inf
    %3151 = vmax.xlane.f32.xlu0 %v3150
    %v3152 = vpop.xlane.xlu0 %3151
    %v3153 = vsub.f32 %v3096, %v3149
    %v3154 = vsub.f32 %v3142, %v3152
    %v3155 = vmul.f32 %v3153, 1.442695
    %v3156 = vpow.pop %v3155
    %v3157 = vmul.f32 %v3154, 1.442695
    %v3158 = vpow.pop %v3157
    %v3159 = vsel %vm85, %v3156, 0.0
    %3160 = vadd.xlane.f32.xlu0 %v3159
    %v3161 = vpop.xlane.xlu0 %3160
    %v3162 = vsel %vm85, %v3158, 0.0
    %3163 = vadd.xlane.f32.xlu0 %v3162
    %v3164 = vpop.xlane.xlu0 %3163
    %v3165 = vrcp.pop %v3161
    %v3166 = vrcp.pop %v3164
    %v3167 = vmul.f32 %v3156, %v3165
    %v3168 = vmul.f32 %v3158, %v3166
    %v3169 = vpack.c.bf16 %v3167, %v3167
    %v3170 = vpack.c.bf16 %v3168, %v3168
    %v3171 = vpack.c.bf16 %v3045, %v3045
    %v3172 = vpack.c.bf16 %v3048, %v3048
    %v3174 = vsel %vm85, %v3169, 0
    %v3177 = vsel %vm653, %v3171, 0
    %3179 = vmatprep.subr.bf16.mxu0 0
    %3180 = vmatpush1.bf16.msra.mxu0 0
    %3181 = vmatprep.subr.bf16.mxu0 0
    %3182 = vmatpush1.bf16.msra.mxu0 0
    %3183 = vmatprep.subr.bf16.mxu0 0
    %3184 = vmatpush1.bf16.msra.mxu0 0
    %3185 = vmatprep.subr.bf16.mxu0 0
    %3186 = vmatpush1.bf16.msra.mxu0 0
    %3187 = vmatprep.subr.bf16.mxu0 0
    %3188 = vmatpush1.bf16.msra.mxu0 0
    %3189 = vmatprep.subr.bf16.mxu0 0
    %3190 = vmatpush1.bf16.msra.mxu0 0
    %3191 = vmatprep.subr.bf16.mxu0 0
    %3192 = vmatpush1.bf16.msra.mxu0 0
    %3193 = vmatprep.subr.bf16.mxu0 0
    %3194 = vmatpush1.bf16.msra.mxu0 %v3177
    %3195 = vmatprep.subr.bf16.mxu0 0
    %3196 = vmatpush2.bf16.msra.mxu0 0
    %3197 = vmatprep.subr.bf16.mxu0 0
    %3198 = vmatpush2.bf16.msra.mxu0 0
    %3199 = vmatprep.subr.bf16.mxu0 0
    %3200 = vmatpush2.bf16.msra.mxu0 0
    %3201 = vmatprep.subr.bf16.mxu0 0
    %3202 = vmatpush2.bf16.msra.mxu0 0
    %3203 = vmatprep.subr.bf16.mxu0 0
    %3204 = vmatpush2.bf16.msra.mxu0 0
    %3205 = vmatprep.subr.bf16.mxu0 0
    %3206 = vmatpush2.bf16.msra.mxu0 0
    %3207 = vmatprep.subr.bf16.mxu0 0
    %3208 = vmatpush2.bf16.msra.mxu0 0
    %3209 = vmatprep.subr.bf16.mxu0 0
    %3210 = vmatpush2.bf16.msra.mxu0 0
    %3211 = vmatprep.mubr.bf16.mxu0 0
    %3212 = vmatmul.mubr.bf16.gmra.mxu0 %v3174
    %v3213 = vpop.f32.mrf.mxu0
    %v3214 = vadd.f32 0.0, %v3213
    %v3215 = vpop.f32.mrf.mxu0
    %v3216 = vpop.f32.mrf.mxu0
    %v3217 = vpop.f32.mrf.mxu0
    %3218 = vdwg.mxu0
    %v3220 = vsel %vm85, %v3170, 0
    %v3223 = vsel %vm653, %v3172, 0
    %3225 = vmatprep.subr.bf16.mxu0 0
    %3226 = vmatpush1.bf16.msra.mxu0 0
    %3227 = vmatprep.subr.bf16.mxu0 0
    %3228 = vmatpush1.bf16.msra.mxu0 0
    %3229 = vmatprep.subr.bf16.mxu0 0
    %3230 = vmatpush1.bf16.msra.mxu0 0
    %3231 = vmatprep.subr.bf16.mxu0 0
    %3232 = vmatpush1.bf16.msra.mxu0 0
    %3233 = vmatprep.subr.bf16.mxu0 0
    %3234 = vmatpush1.bf16.msra.mxu0 0
    %3235 = vmatprep.subr.bf16.mxu0 0
    %3236 = vmatpush1.bf16.msra.mxu0 0
    %3237 = vmatprep.subr.bf16.mxu0 0
    %3238 = vmatpush1.bf16.msra.mxu0 0
    %3239 = vmatprep.subr.bf16.mxu0 0
    %3240 = vmatpush1.bf16.msra.mxu0 %v3223
    %3241 = vmatprep.subr.bf16.mxu0 0
    %3242 = vmatpush2.bf16.msra.mxu0 0
    %3243 = vmatprep.subr.bf16.mxu0 0
    %3244 = vmatpush2.bf16.msra.mxu0 0
    %3245 = vmatprep.subr.bf16.mxu0 0
    %3246 = vmatpush2.bf16.msra.mxu0 0
    %3247 = vmatprep.subr.bf16.mxu0 0
    %3248 = vmatpush2.bf16.msra.mxu0 0
    %3249 = vmatprep.subr.bf16.mxu0 0
    %3250 = vmatpush2.bf16.msra.mxu0 0
    %3251 = vmatprep.subr.bf16.mxu0 0
    %3252 = vmatpush2.bf16.msra.mxu0 0
    %3253 = vmatprep.subr.bf16.mxu0 0
    %3254 = vmatpush2.bf16.msra.mxu0 0
    %3255 = vmatprep.subr.bf16.mxu0 0
    %3256 = vmatpush2.bf16.msra.mxu0 0
    %3257 = vmatprep.mubr.bf16.mxu0 0
    %3258 = vmatmul.mubr.bf16.gmra.mxu0 %v3220
    %v3259 = vpop.f32.mrf.mxu0
    %v3260 = vadd.f32 0.0, %v3259
    %v3261 = vpop.f32.mrf.mxu0
    %v3262 = vpop.f32.mrf.mxu0
    %v3263 = vpop.f32.mrf.mxu0
    %3264 = vdwg.mxu0
    %v3265 = vpack.c.bf16 %v3260, %v3214
    %s3266 = scalar_lea.vmem %s6, 20
    %v3267 = vld [vmem:[%s3266] sm:$0xf]
    %v3269 = vsel %vm85, %v3265, 0
    %v3272 = vsel %vm653, %v3267, 0
    %3274 = vmatprep.subr.bf16.mxu0 0
    %3275 = vmatpush1.bf16.msra.mxu0 0
    %3276 = vmatprep.subr.bf16.mxu0 0
    %3277 = vmatpush1.bf16.msra.mxu0 0
    %3278 = vmatprep.subr.bf16.mxu0 0
    %3279 = vmatpush1.bf16.msra.mxu0 0
    %3280 = vmatprep.subr.bf16.mxu0 0
    %3281 = vmatpush1.bf16.msra.mxu0 0
    %3282 = vmatprep.subr.bf16.mxu0 0
    %3283 = vmatpush1.bf16.msra.mxu0 0
    %3284 = vmatprep.subr.bf16.mxu0 0
    %3285 = vmatpush1.bf16.msra.mxu0 0
    %3286 = vmatprep.subr.bf16.mxu0 0
    %3287 = vmatpush1.bf16.msra.mxu0 0
    %3288 = vmatprep.subr.bf16.mxu0 0
    %3289 = vmatpush1.bf16.msra.mxu0 %v3272
    %3290 = vmatprep.subr.bf16.mxu0 0
    %3291 = vmatpush2.bf16.msra.mxu0 0
    %3292 = vmatprep.subr.bf16.mxu0 0
    %3293 = vmatpush2.bf16.msra.mxu0 0
    %3294 = vmatprep.subr.bf16.mxu0 0
    %3295 = vmatpush2.bf16.msra.mxu0 0
    %3296 = vmatprep.subr.bf16.mxu0 0
    %3297 = vmatpush2.bf16.msra.mxu0 0
    %3298 = vmatprep.subr.bf16.mxu0 0
    %3299 = vmatpush2.bf16.msra.mxu0 0
    %3300 = vmatprep.subr.bf16.mxu0 0
    %3301 = vmatpush2.bf16.msra.mxu0 0
    %3302 = vmatprep.subr.bf16.mxu0 0
    %3303 = vmatpush2.bf16.msra.mxu0 0
    %3304 = vmatprep.subr.bf16.mxu0 0
    %3305 = vmatpush2.bf16.msra.mxu0 0
    %3306 = vmatprep.mubr.bf16.mxu0 0
    %3307 = vmatmul.mubr.bf16.gmra.mxu0 %v3269
    %v3308 = vpop.f32.mrf.mxu0
    %v3309 = vadd.f32 0.0, %v3308
    %v3310 = vpop.f32.mrf.mxu0
    %v3311 = vpop.f32.mrf.mxu0
    %v3312 = vadd.f32 0.0, %v3311
    %v3313 = vpop.f32.mrf.mxu0
    %3314 = vdwg.mxu0
    %v3316 = vsel %vm85, %v2850, 0
    %v3319 = vsel %vm653, %v2852, 0
    %3321 = vmatprep.subr.bf16.mxu0 0
    %3322 = vmatpush1.bf16.msra.mxu0 0
    %3323 = vmatprep.subr.bf16.mxu0 0
    %3324 = vmatpush1.bf16.msra.mxu0 0
    %3325 = vmatprep.subr.bf16.mxu0 0
    %3326 = vmatpush1.bf16.msra.mxu0 0
    %3327 = vmatprep.subr.bf16.mxu0 0
    %3328 = vmatpush1.bf16.msra.mxu0 0
    %3329 = vmatprep.subr.bf16.mxu0 0
    %3330 = vmatpush1.bf16.msra.mxu0 0
    %3331 = vmatprep.subr.bf16.mxu0 0
    %3332 = vmatpush1.bf16.msra.mxu0 0
    %3333 = vmatprep.subr.bf16.mxu0 0
    %3334 = vmatpush1.bf16.msra.mxu0 0
    %3335 = vmatprep.subr.bf16.mxu0 0
    %3336 = vmatpush1.bf16.msra.mxu0 %v3319
    %3337 = vmatprep.subr.bf16.mxu0 0
    %3338 = vmatpush2.bf16.msra.mxu0 0
    %3339 = vmatprep.subr.bf16.mxu0 0
    %3340 = vmatpush2.bf16.msra.mxu0 0
    %3341 = vmatprep.subr.bf16.mxu0 0
    %3342 = vmatpush2.bf16.msra.mxu0 0
    %3343 = vmatprep.subr.bf16.mxu0 0
    %3344 = vmatpush2.bf16.msra.mxu0 0
    %3345 = vmatprep.subr.bf16.mxu0 0
    %3346 = vmatpush2.bf16.msra.mxu0 0
    %3347 = vmatprep.subr.bf16.mxu0 0
    %3348 = vmatpush2.bf16.msra.mxu0 0
    %3349 = vmatprep.subr.bf16.mxu0 0
    %3350 = vmatpush2.bf16.msra.mxu0 0
    %3351 = vmatprep.subr.bf16.mxu0 0
    %3352 = vmatpush2.bf16.msra.mxu0 0
    %3353 = vmatprep.mubr.bf16.mxu0 0
    %3354 = vmatmul.mubr.bf16.gmra.mxu0 %v3316
    %v3355 = vpop.f32.mrf.mxu0
    %v3356 = vadd.f32 %v3309, %v3355
    %v3357 = vpop.f32.mrf.mxu0
    %v3358 = vpop.f32.mrf.mxu0
    %v3359 = vadd.f32 %v3312, %v3358
    %v3360 = vpop.f32.mrf.mxu0
    %3361 = vdwg.mxu0
    %s3362 = scalar_lea.vmem %s4, 224
    %v3363 = vld [vmem:[%s3362] sm:$0xf]
    %v3364 = vld [vmem:[%s3362 + $0x4] sm:$0xf]
    %v3365 = vld [vmem:[%s3362 + $0x8] sm:$0xf]
    %v3366 = vld [vmem:[%s3362 + $0xc] sm:$0xf]
    %s3367 = scalar_lea.vmem %s5, 14
    %v3368 = vld [vmem:[%s3367] sm:$0x1]
    %v3370 = vlaneseq
    %v3371 = vshrl.u32 %v3370, 7
    %v3372 = vsub.s32 0, %v3371
    %v3373 = vrot.slane %v3368, %v3372
    %v3379 = vunpack.c.l.b16 %v3363
    %v3380 = vunpack.c.l.b16 %v3364
    %v3381 = vunpack.c.l.b16 %v3365
    %v3382 = vunpack.c.l.b16 %v3366
    %v3383 = vpack.c.b16 %v3380, %v3379
    %v3384 = vpack.c.b16 %v3382, %v3381
    %3387 = vmatprep.subr.bf16.mxu0 0
    %3388 = vmatpush1.bf16.msra.mxu0 0
    %3389 = vmatprep.subr.bf16.mxu0 0
    %3390 = vmatpush1.bf16.msra.mxu0 0
    %3391 = vmatprep.subr.bf16.mxu0 0
    %3392 = vmatpush1.bf16.msra.mxu0 0
    %3393 = vmatprep.subr.bf16.mxu0 0
    %3394 = vmatpush1.bf16.msra.mxu0 0
    %3395 = vmatprep.subr.bf16.mxu0 0
    %3396 = vmatpush1.bf16.msra.mxu0 0
    %3397 = vmatprep.subr.bf16.mxu0 0
    %3398 = vmatpush1.bf16.msra.mxu0 0
    %3399 = vmatprep.subr.bf16.mxu0 0
    %3400 = vmatpush1.bf16.msra.mxu0 %v3384
    %3401 = vmatprep.subr.bf16.mxu0 0
    %3402 = vmatpush1.bf16.msra.mxu0 %v3383
    %3403 = vmatprep.subr.bf16.mxu0 0
    %3404 = vmatpush2.bf16.msra.mxu0 0
    %3405 = vmatprep.subr.bf16.mxu0 0
    %3406 = vmatpush2.bf16.msra.mxu0 0
    %3407 = vmatprep.subr.bf16.mxu0 0
    %3408 = vmatpush2.bf16.msra.mxu0 0
    %3409 = vmatprep.subr.bf16.mxu0 0
    %3410 = vmatpush2.bf16.msra.mxu0 0
    %3411 = vmatprep.subr.bf16.mxu0 0
    %3412 = vmatpush2.bf16.msra.mxu0 0
    %3413 = vmatprep.subr.bf16.mxu0 0
    %3414 = vmatpush2.bf16.msra.mxu0 0
    %3415 = vmatprep.subr.bf16.mxu0 0
    %3416 = vmatpush2.bf16.msra.mxu0 0
    %3417 = vmatprep.subr.bf16.mxu0 0
    %3418 = vmatpush2.bf16.msra.mxu0 0
    %3419 = vmatprep.mubr.bf16.mxu0 0
    %3420 = vmatmul.mubr.bf16.gmra.mxu0 %v2461
    %v3421 = vpop.f32.mrf.mxu0
    %v3422 = vadd.f32 %v3373, %v3421
    %v3423 = vpop.f32.mrf.mxu0
    %v3424 = vpop.f32.mrf.mxu0
    %v3425 = vadd.f32 %v3373, %v3424
    %v3426 = vpop.f32.mrf.mxu0
    %3427 = vdwg.mxu0
    %s3428 = scalar_lea.vmem %s4, 288
    %v3429 = vld [vmem:[%s3428] sm:$0xf]
    %v3430 = vld [vmem:[%s3428 + $0x4] sm:$0xf]
    %v3431 = vld [vmem:[%s3428 + $0x8] sm:$0xf]
    %v3432 = vld [vmem:[%s3428 + $0xc] sm:$0xf]
    %s3433 = scalar_lea.vmem %s5, 18
    %v3434 = vld [vmem:[%s3433] sm:$0x1]
    %v3436 = vlaneseq
    %v3437 = vshrl.u32 %v3436, 7
    %v3438 = vsub.s32 0, %v3437
    %v3439 = vrot.slane %v3434, %v3438
    %v3445 = vunpack.c.l.b16 %v3429
    %v3446 = vunpack.c.l.b16 %v3430
    %v3447 = vunpack.c.l.b16 %v3431
    %v3448 = vunpack.c.l.b16 %v3432
    %v3449 = vpack.c.b16 %v3446, %v3445
    %v3450 = vpack.c.b16 %v3448, %v3447
    %3453 = vmatprep.subr.bf16.mxu0 0
    %3454 = vmatpush1.bf16.msra.mxu0 0
    %3455 = vmatprep.subr.bf16.mxu0 0
    %3456 = vmatpush1.bf16.msra.mxu0 0
    %3457 = vmatprep.subr.bf16.mxu0 0
    %3458 = vmatpush1.bf16.msra.mxu0 0
    %3459 = vmatprep.subr.bf16.mxu0 0
    %3460 = vmatpush1.bf16.msra.mxu0 0
    %3461 = vmatprep.subr.bf16.mxu0 0
    %3462 = vmatpush1.bf16.msra.mxu0 0
    %3463 = vmatprep.subr.bf16.mxu0 0
    %3464 = vmatpush1.bf16.msra.mxu0 0
    %3465 = vmatprep.subr.bf16.mxu0 0
    %3466 = vmatpush1.bf16.msra.mxu0 %v3450
    %3467 = vmatprep.subr.bf16.mxu0 0
    %3468 = vmatpush1.bf16.msra.mxu0 %v3449
    %3469 = vmatprep.subr.bf16.mxu0 0
    %3470 = vmatpush2.bf16.msra.mxu0 0
    %3471 = vmatprep.subr.bf16.mxu0 0
    %3472 = vmatpush2.bf16.msra.mxu0 0
    %3473 = vmatprep.subr.bf16.mxu0 0
    %3474 = vmatpush2.bf16.msra.mxu0 0
    %3475 = vmatprep.subr.bf16.mxu0 0
    %3476 = vmatpush2.bf16.msra.mxu0 0
    %3477 = vmatprep.subr.bf16.mxu0 0
    %3478 = vmatpush2.bf16.msra.mxu0 0
    %3479 = vmatprep.subr.bf16.mxu0 0
    %3480 = vmatpush2.bf16.msra.mxu0 0
    %3481 = vmatprep.subr.bf16.mxu0 0
    %3482 = vmatpush2.bf16.msra.mxu0 0
    %3483 = vmatprep.subr.bf16.mxu0 0
    %3484 = vmatpush2.bf16.msra.mxu0 0
    %3485 = vmatprep.mubr.bf16.mxu0 0
    %3486 = vmatmul.mubr.bf16.gmra.mxu0 %v2461
    %v3487 = vpop.f32.mrf.mxu0
    %v3488 = vadd.f32 %v3439, %v3487
    %v3489 = vpop.f32.mrf.mxu0
    %v3490 = vpop.f32.mrf.mxu0
    %v3491 = vadd.f32 %v3439, %v3490
    %v3492 = vpop.f32.mrf.mxu0
    %3493 = vdwg.mxu0
    %s3494 = scalar_lea.vmem %s4, 352
    %v3495 = vld [vmem:[%s3494] sm:$0xf]
    %v3496 = vld [vmem:[%s3494 + $0x4] sm:$0xf]
    %v3497 = vld [vmem:[%s3494 + $0x8] sm:$0xf]
    %v3498 = vld [vmem:[%s3494 + $0xc] sm:$0xf]
    %s3499 = scalar_lea.vmem %s5, 22
    %v3500 = vld [vmem:[%s3499] sm:$0x1]
    %v3502 = vlaneseq
    %v3503 = vshrl.u32 %v3502, 7
    %v3504 = vsub.s32 0, %v3503
    %v3505 = vrot.slane %v3500, %v3504
    %v3511 = vunpack.c.l.b16 %v3495
    %v3512 = vunpack.c.l.b16 %v3496
    %v3513 = vunpack.c.l.b16 %v3497
    %v3514 = vunpack.c.l.b16 %v3498
    %v3515 = vpack.c.b16 %v3512, %v3511
    %v3516 = vpack.c.b16 %v3514, %v3513
    %3519 = vmatprep.subr.bf16.mxu0 0
    %3520 = vmatpush1.bf16.msra.mxu0 0
    %3521 = vmatprep.subr.bf16.mxu0 0
    %3522 = vmatpush1.bf16.msra.mxu0 0
    %3523 = vmatprep.subr.bf16.mxu0 0
    %3524 = vmatpush1.bf16.msra.mxu0 0
    %3525 = vmatprep.subr.bf16.mxu0 0
    %3526 = vmatpush1.bf16.msra.mxu0 0
    %3527 = vmatprep.subr.bf16.mxu0 0
    %3528 = vmatpush1.bf16.msra.mxu0 0
    %3529 = vmatprep.subr.bf16.mxu0 0
    %3530 = vmatpush1.bf16.msra.mxu0 0
    %3531 = vmatprep.subr.bf16.mxu0 0
    %3532 = vmatpush1.bf16.msra.mxu0 %v3516
    %3533 = vmatprep.subr.bf16.mxu0 0
    %3534 = vmatpush1.bf16.msra.mxu0 %v3515
    %3535 = vmatprep.subr.bf16.mxu0 0
    %3536 = vmatpush2.bf16.msra.mxu0 0
    %3537 = vmatprep.subr.bf16.mxu0 0
    %3538 = vmatpush2.bf16.msra.mxu0 0
    %3539 = vmatprep.subr.bf16.mxu0 0
    %3540 = vmatpush2.bf16.msra.mxu0 0
    %3541 = vmatprep.subr.bf16.mxu0 0
    %3542 = vmatpush2.bf16.msra.mxu0 0
    %3543 = vmatprep.subr.bf16.mxu0 0
    %3544 = vmatpush2.bf16.msra.mxu0 0
    %3545 = vmatprep.subr.bf16.mxu0 0
    %3546 = vmatpush2.bf16.msra.mxu0 0
    %3547 = vmatprep.subr.bf16.mxu0 0
    %3548 = vmatpush2.bf16.msra.mxu0 0
    %3549 = vmatprep.subr.bf16.mxu0 0
    %3550 = vmatpush2.bf16.msra.mxu0 0
    %3551 = vmatprep.mubr.bf16.mxu0 0
    %3552 = vmatmul.mubr.bf16.gmra.mxu0 %v2461
    %v3553 = vpop.f32.mrf.mxu0
    %v3554 = vadd.f32 %v3505, %v3553
    %v3555 = vpop.f32.mrf.mxu0
    %v3556 = vpop.f32.mrf.mxu0
    %v3557 = vadd.f32 %v3505, %v3556
    %v3558 = vpop.f32.mrf.mxu0
    %3559 = vdwg.mxu0
    %v3560 = vpack.c.bf16 %v3422, %v3422
    %v3561 = vpack.c.bf16 %v3425, %v3425
    %v3562 = vpack.c.bf16 %v3488, %v3488
    %v3563 = vpack.c.bf16 %v3491, %v3491
    %v3565 = vsel %vm85, %v3560, 0
    %v3568 = vsel %vm85, %v3562, 0
    %3570 = vmatprep.subr.bf16.mxu0 0
    %3571 = vmatpush1.bf16.xpose.msra.mxu0 0
    %3572 = vmatprep.subr.bf16.mxu0 0
    %3573 = vmatpush1.bf16.xpose.msra.mxu0 0
    %3574 = vmatprep.subr.bf16.mxu0 0
    %3575 = vmatpush1.bf16.xpose.msra.mxu0 0
    %3576 = vmatprep.subr.bf16.mxu0 0
    %3577 = vmatpush1.bf16.xpose.msra.mxu0 0
    %3578 = vmatprep.subr.bf16.mxu0 0
    %3579 = vmatpush1.bf16.xpose.msra.mxu0 0
    %3580 = vmatprep.subr.bf16.mxu0 0
    %3581 = vmatpush1.bf16.xpose.msra.mxu0 0
    %3582 = vmatprep.subr.bf16.mxu0 0
    %3583 = vmatpush1.bf16.xpose.msra.mxu0 0
    %3584 = vmatprep.subr.bf16.mxu0 0
    %3585 = vmatpush1.bf16.xpose.msra.mxu0 %v3568
    %3586 = vmatprep.subr.bf16.mxu0 0
    %3587 = vmatpush2.bf16.xpose.msra.mxu0 0
    %3588 = vmatprep.subr.bf16.mxu0 0
    %3589 = vmatpush2.bf16.xpose.msra.mxu0 0
    %3590 = vmatprep.subr.bf16.mxu0 0
    %3591 = vmatpush2.bf16.xpose.msra.mxu0 0
    %3592 = vmatprep.subr.bf16.mxu0 0
    %3593 = vmatpush2.bf16.xpose.msra.mxu0 0
    %3594 = vmatprep.subr.bf16.mxu0 0
    %3595 = vmatpush2.bf16.xpose.msra.mxu0 0
    %3596 = vmatprep.subr.bf16.mxu0 0
    %3597 = vmatpush2.bf16.xpose.msra.mxu0 0
    %3598 = vmatprep.subr.bf16.mxu0 0
    %3599 = vmatpush2.bf16.xpose.msra.mxu0 0
    %3600 = vmatprep.subr.bf16.mxu0 0
    %3601 = vmatpush2.bf16.xpose.msra.mxu0 0
    %3602 = vmatprep.mubr.bf16.mxu0 0
    %3603 = vmatmul.mubr.bf16.gmra.mxu0 %v3565
    %v3604 = vpop.f32.mrf.mxu0
    %v3605 = vadd.f32 %v525, %v3604
    %v3606 = vpop.f32.mrf.mxu0
    %v3607 = vpop.f32.mrf.mxu0
    %v3608 = vpop.f32.mrf.mxu0
    %3609 = vdwg.mxu0
    %v3611 = vsel %vm85, %v3561, 0
    %v3614 = vsel %vm85, %v3563, 0
    %3616 = vmatprep.subr.bf16.mxu0 0
    %3617 = vmatpush1.bf16.xpose.msra.mxu0 0
    %3618 = vmatprep.subr.bf16.mxu0 0
    %3619 = vmatpush1.bf16.xpose.msra.mxu0 0
    %3620 = vmatprep.subr.bf16.mxu0 0
    %3621 = vmatpush1.bf16.xpose.msra.mxu0 0
    %3622 = vmatprep.subr.bf16.mxu0 0
    %3623 = vmatpush1.bf16.xpose.msra.mxu0 0
    %3624 = vmatprep.subr.bf16.mxu0 0
    %3625 = vmatpush1.bf16.xpose.msra.mxu0 0
    %3626 = vmatprep.subr.bf16.mxu0 0
    %3627 = vmatpush1.bf16.xpose.msra.mxu0 0
    %3628 = vmatprep.subr.bf16.mxu0 0
    %3629 = vmatpush1.bf16.xpose.msra.mxu0 0
    %3630 = vmatprep.subr.bf16.mxu0 0
    %3631 = vmatpush1.bf16.xpose.msra.mxu0 %v3614
    %3632 = vmatprep.subr.bf16.mxu0 0
    %3633 = vmatpush2.bf16.xpose.msra.mxu0 0
    %3634 = vmatprep.subr.bf16.mxu0 0
    %3635 = vmatpush2.bf16.xpose.msra.mxu0 0
    %3636 = vmatprep.subr.bf16.mxu0 0
    %3637 = vmatpush2.bf16.xpose.msra.mxu0 0
    %3638 = vmatprep.subr.bf16.mxu0 0
    %3639 = vmatpush2.bf16.xpose.msra.mxu0 0
    %3640 = vmatprep.subr.bf16.mxu0 0
    %3641 = vmatpush2.bf16.xpose.msra.mxu0 0
    %3642 = vmatprep.subr.bf16.mxu0 0
    %3643 = vmatpush2.bf16.xpose.msra.mxu0 0
    %3644 = vmatprep.subr.bf16.mxu0 0
    %3645 = vmatpush2.bf16.xpose.msra.mxu0 0
    %3646 = vmatprep.subr.bf16.mxu0 0
    %3647 = vmatpush2.bf16.xpose.msra.mxu0 0
    %3648 = vmatprep.mubr.bf16.mxu0 0
    %3649 = vmatmul.mubr.bf16.gmra.mxu0 %v3611
    %v3650 = vpop.f32.mrf.mxu0
    %v3651 = vadd.f32 %v529, %v3650
    %v3652 = vpop.f32.mrf.mxu0
    %v3653 = vpop.f32.mrf.mxu0
    %v3654 = vpop.f32.mrf.mxu0
    %3655 = vdwg.mxu0
    %v3656 = vsel %vm85, %v3605, -inf
    %3657 = vmax.xlane.f32.xlu0 %v3656
    %v3658 = vpop.xlane.xlu0 %3657
    %v3659 = vsel %vm85, %v3651, -inf
    %3660 = vmax.xlane.f32.xlu0 %v3659
    %v3661 = vpop.xlane.xlu0 %3660
    %v3662 = vsub.f32 %v3605, %v3658
    %v3663 = vsub.f32 %v3651, %v3661
    %v3664 = vmul.f32 %v3662, 1.442695
    %v3665 = vpow.pop %v3664
    %v3666 = vmul.f32 %v3663, 1.442695
    %v3667 = vpow.pop %v3666
    %v3668 = vsel %vm85, %v3665, 0.0
    %3669 = vadd.xlane.f32.xlu0 %v3668
    %v3670 = vpop.xlane.xlu0 %3669
    %v3671 = vsel %vm85, %v3667, 0.0
    %3672 = vadd.xlane.f32.xlu0 %v3671
    %v3673 = vpop.xlane.xlu0 %3672
    %v3674 = vrcp.pop %v3670
    %v3675 = vrcp.pop %v3673
    %v3676 = vmul.f32 %v3665, %v3674
    %v3677 = vmul.f32 %v3667, %v3675
    %v3678 = vpack.c.bf16 %v3676, %v3676
    %v3679 = vpack.c.bf16 %v3677, %v3677
    %v3680 = vpack.c.bf16 %v3554, %v3554
    %v3681 = vpack.c.bf16 %v3557, %v3557
    %v3683 = vsel %vm85, %v3678, 0
    %v3686 = vsel %vm653, %v3680, 0
    %3688 = vmatprep.subr.bf16.mxu0 0
    %3689 = vmatpush1.bf16.msra.mxu0 0
    %3690 = vmatprep.subr.bf16.mxu0 0
    %3691 = vmatpush1.bf16.msra.mxu0 0
    %3692 = vmatprep.subr.bf16.mxu0 0
    %3693 = vmatpush1.bf16.msra.mxu0 0
    %3694 = vmatprep.subr.bf16.mxu0 0
    %3695 = vmatpush1.bf16.msra.mxu0 0
    %3696 = vmatprep.subr.bf16.mxu0 0
    %3697 = vmatpush1.bf16.msra.mxu0 0
    %3698 = vmatprep.subr.bf16.mxu0 0
    %3699 = vmatpush1.bf16.msra.mxu0 0
    %3700 = vmatprep.subr.bf16.mxu0 0
    %3701 = vmatpush1.bf16.msra.mxu0 0
    %3702 = vmatprep.subr.bf16.mxu0 0
    %3703 = vmatpush1.bf16.msra.mxu0 %v3686
    %3704 = vmatprep.subr.bf16.mxu0 0
    %3705 = vmatpush2.bf16.msra.mxu0 0
    %3706 = vmatprep.subr.bf16.mxu0 0
    %3707 = vmatpush2.bf16.msra.mxu0 0
    %3708 = vmatprep.subr.bf16.mxu0 0
    %3709 = vmatpush2.bf16.msra.mxu0 0
    %3710 = vmatprep.subr.bf16.mxu0 0
    %3711 = vmatpush2.bf16.msra.mxu0 0
    %3712 = vmatprep.subr.bf16.mxu0 0
    %3713 = vmatpush2.bf16.msra.mxu0 0
    %3714 = vmatprep.subr.bf16.mxu0 0
    %3715 = vmatpush2.bf16.msra.mxu0 0
    %3716 = vmatprep.subr.bf16.mxu0 0
    %3717 = vmatpush2.bf16.msra.mxu0 0
    %3718 = vmatprep.subr.bf16.mxu0 0
    %3719 = vmatpush2.bf16.msra.mxu0 0
    %3720 = vmatprep.mubr.bf16.mxu0 0
    %3721 = vmatmul.mubr.bf16.gmra.mxu0 %v3683
    %v3722 = vpop.f32.mrf.mxu0
    %v3723 = vadd.f32 0.0, %v3722
    %v3724 = vpop.f32.mrf.mxu0
    %v3725 = vpop.f32.mrf.mxu0
    %v3726 = vpop.f32.mrf.mxu0
    %3727 = vdwg.mxu0
    %v3729 = vsel %vm85, %v3679, 0
    %v3732 = vsel %vm653, %v3681, 0
    %3734 = vmatprep.subr.bf16.mxu0 0
    %3735 = vmatpush1.bf16.msra.mxu0 0
    %3736 = vmatprep.subr.bf16.mxu0 0
    %3737 = vmatpush1.bf16.msra.mxu0 0
    %3738 = vmatprep.subr.bf16.mxu0 0
    %3739 = vmatpush1.bf16.msra.mxu0 0
    %3740 = vmatprep.subr.bf16.mxu0 0
    %3741 = vmatpush1.bf16.msra.mxu0 0
    %3742 = vmatprep.subr.bf16.mxu0 0
    %3743 = vmatpush1.bf16.msra.mxu0 0
    %3744 = vmatprep.subr.bf16.mxu0 0
    %3745 = vmatpush1.bf16.msra.mxu0 0
    %3746 = vmatprep.subr.bf16.mxu0 0
    %3747 = vmatpush1.bf16.msra.mxu0 0
    %3748 = vmatprep.subr.bf16.mxu0 0
    %3749 = vmatpush1.bf16.msra.mxu0 %v3732
    %3750 = vmatprep.subr.bf16.mxu0 0
    %3751 = vmatpush2.bf16.msra.mxu0 0
    %3752 = vmatprep.subr.bf16.mxu0 0
    %3753 = vmatpush2.bf16.msra.mxu0 0
    %3754 = vmatprep.subr.bf16.mxu0 0
    %3755 = vmatpush2.bf16.msra.mxu0 0
    %3756 = vmatprep.subr.bf16.mxu0 0
    %3757 = vmatpush2.bf16.msra.mxu0 0
    %3758 = vmatprep.subr.bf16.mxu0 0
    %3759 = vmatpush2.bf16.msra.mxu0 0
    %3760 = vmatprep.subr.bf16.mxu0 0
    %3761 = vmatpush2.bf16.msra.mxu0 0
    %3762 = vmatprep.subr.bf16.mxu0 0
    %3763 = vmatpush2.bf16.msra.mxu0 0
    %3764 = vmatprep.subr.bf16.mxu0 0
    %3765 = vmatpush2.bf16.msra.mxu0 0
    %3766 = vmatprep.mubr.bf16.mxu0 0
    %3767 = vmatmul.mubr.bf16.gmra.mxu0 %v3729
    %v3768 = vpop.f32.mrf.mxu0
    %v3769 = vadd.f32 0.0, %v3768
    %v3770 = vpop.f32.mrf.mxu0
    %v3771 = vpop.f32.mrf.mxu0
    %v3772 = vpop.f32.mrf.mxu0
    %3773 = vdwg.mxu0
    %v3774 = vpack.c.bf16 %v3769, %v3723
    %s3775 = scalar_lea.vmem %s6, 24
    %v3776 = vld [vmem:[%s3775] sm:$0xf]
    %v3778 = vsel %vm85, %v3774, 0
    %v3781 = vsel %vm653, %v3776, 0
    %3783 = vmatprep.subr.bf16.mxu0 0
    %3784 = vmatpush1.bf16.msra.mxu0 0
    %3785 = vmatprep.subr.bf16.mxu0 0
    %3786 = vmatpush1.bf16.msra.mxu0 0
    %3787 = vmatprep.subr.bf16.mxu0 0
    %3788 = vmatpush1.bf16.msra.mxu0 0
    %3789 = vmatprep.subr.bf16.mxu0 0
    %3790 = vmatpush1.bf16.msra.mxu0 0
    %3791 = vmatprep.subr.bf16.mxu0 0
    %3792 = vmatpush1.bf16.msra.mxu0 0
    %3793 = vmatprep.subr.bf16.mxu0 0
    %3794 = vmatpush1.bf16.msra.mxu0 0
    %3795 = vmatprep.subr.bf16.mxu0 0
    %3796 = vmatpush1.bf16.msra.mxu0 0
    %3797 = vmatprep.subr.bf16.mxu0 0
    %3798 = vmatpush1.bf16.msra.mxu0 %v3781
    %3799 = vmatprep.subr.bf16.mxu0 0
    %3800 = vmatpush2.bf16.msra.mxu0 0
    %3801 = vmatprep.subr.bf16.mxu0 0
    %3802 = vmatpush2.bf16.msra.mxu0 0
    %3803 = vmatprep.subr.bf16.mxu0 0
    %3804 = vmatpush2.bf16.msra.mxu0 0
    %3805 = vmatprep.subr.bf16.mxu0 0
    %3806 = vmatpush2.bf16.msra.mxu0 0
    %3807 = vmatprep.subr.bf16.mxu0 0
    %3808 = vmatpush2.bf16.msra.mxu0 0
    %3809 = vmatprep.subr.bf16.mxu0 0
    %3810 = vmatpush2.bf16.msra.mxu0 0
    %3811 = vmatprep.subr.bf16.mxu0 0
    %3812 = vmatpush2.bf16.msra.mxu0 0
    %3813 = vmatprep.subr.bf16.mxu0 0
    %3814 = vmatpush2.bf16.msra.mxu0 0
    %3815 = vmatprep.mubr.bf16.mxu0 0
    %3816 = vmatmul.mubr.bf16.gmra.mxu0 %v3778
    %v3817 = vpop.f32.mrf.mxu0
    %v3818 = vadd.f32 0.0, %v3817
    %v3819 = vpop.f32.mrf.mxu0
    %v3820 = vpop.f32.mrf.mxu0
    %v3821 = vadd.f32 0.0, %v3820
    %v3822 = vpop.f32.mrf.mxu0
    %3823 = vdwg.mxu0
    %v3824 = vadd.f32 %v3356, %v3818
    %v3825 = vadd.f32 %v3359, %v3821
    %s3826 = scalar_lea.vmem %s4, 240
    %v3827 = vld [vmem:[%s3826] sm:$0xf]
    %v3828 = vld [vmem:[%s3826 + $0x4] sm:$0xf]
    %v3829 = vld [vmem:[%s3826 + $0x8] sm:$0xf]
    %v3830 = vld [vmem:[%s3826 + $0xc] sm:$0xf]
    %s3831 = scalar_lea.vmem %s5, 15
    %v3832 = vld [vmem:[%s3831] sm:$0x1]
    %v3834 = vlaneseq
    %v3835 = vshrl.u32 %v3834, 7
    %v3836 = vsub.s32 0, %v3835
    %v3837 = vrot.slane %v3832, %v3836
    %v3843 = vunpack.c.l.b16 %v3827
    %v3844 = vunpack.c.l.b16 %v3828
    %v3845 = vunpack.c.l.b16 %v3829
    %v3846 = vunpack.c.l.b16 %v3830
    %v3847 = vpack.c.b16 %v3844, %v3843
    %v3848 = vpack.c.b16 %v3846, %v3845
    %3851 = vmatprep.subr.bf16.mxu0 0
    %3852 = vmatpush1.bf16.msra.mxu0 0
    %3853 = vmatprep.subr.bf16.mxu0 0
    %3854 = vmatpush1.bf16.msra.mxu0 0
    %3855 = vmatprep.subr.bf16.mxu0 0
    %3856 = vmatpush1.bf16.msra.mxu0 0
    %3857 = vmatprep.subr.bf16.mxu0 0
    %3858 = vmatpush1.bf16.msra.mxu0 0
    %3859 = vmatprep.subr.bf16.mxu0 0
    %3860 = vmatpush1.bf16.msra.mxu0 0
    %3861 = vmatprep.subr.bf16.mxu0 0
    %3862 = vmatpush1.bf16.msra.mxu0 0
    %3863 = vmatprep.subr.bf16.mxu0 0
    %3864 = vmatpush1.bf16.msra.mxu0 %v3848
    %3865 = vmatprep.subr.bf16.mxu0 0
    %3866 = vmatpush1.bf16.msra.mxu0 %v3847
    %3867 = vmatprep.subr.bf16.mxu0 0
    %3868 = vmatpush2.bf16.msra.mxu0 0
    %3869 = vmatprep.subr.bf16.mxu0 0
    %3870 = vmatpush2.bf16.msra.mxu0 0
    %3871 = vmatprep.subr.bf16.mxu0 0
    %3872 = vmatpush2.bf16.msra.mxu0 0
    %3873 = vmatprep.subr.bf16.mxu0 0
    %3874 = vmatpush2.bf16.msra.mxu0 0
    %3875 = vmatprep.subr.bf16.mxu0 0
    %3876 = vmatpush2.bf16.msra.mxu0 0
    %3877 = vmatprep.subr.bf16.mxu0 0
    %3878 = vmatpush2.bf16.msra.mxu0 0
    %3879 = vmatprep.subr.bf16.mxu0 0
    %3880 = vmatpush2.bf16.msra.mxu0 0
    %3881 = vmatprep.subr.bf16.mxu0 0
    %3882 = vmatpush2.bf16.msra.mxu0 0
    %3883 = vmatprep.mubr.bf16.mxu0 0
    %3884 = vmatmul.mubr.bf16.gmra.mxu0 %v2461
    %v3885 = vpop.f32.mrf.mxu0
    %v3886 = vadd.f32 %v3837, %v3885
    %v3887 = vpop.f32.mrf.mxu0
    %v3888 = vpop.f32.mrf.mxu0
    %v3889 = vadd.f32 %v3837, %v3888
    %v3890 = vpop.f32.mrf.mxu0
    %3891 = vdwg.mxu0
    %s3892 = scalar_lea.vmem %s4, 304
    %v3893 = vld [vmem:[%s3892] sm:$0xf]
    %v3894 = vld [vmem:[%s3892 + $0x4] sm:$0xf]
    %v3895 = vld [vmem:[%s3892 + $0x8] sm:$0xf]
    %v3896 = vld [vmem:[%s3892 + $0xc] sm:$0xf]
    %s3897 = scalar_lea.vmem %s5, 19
    %v3898 = vld [vmem:[%s3897] sm:$0x1]
    %v3900 = vlaneseq
    %v3901 = vshrl.u32 %v3900, 7
    %v3902 = vsub.s32 0, %v3901
    %v3903 = vrot.slane %v3898, %v3902
    %v3909 = vunpack.c.l.b16 %v3893
    %v3910 = vunpack.c.l.b16 %v3894
    %v3911 = vunpack.c.l.b16 %v3895
    %v3912 = vunpack.c.l.b16 %v3896
    %v3913 = vpack.c.b16 %v3910, %v3909
    %v3914 = vpack.c.b16 %v3912, %v3911
    %3917 = vmatprep.subr.bf16.mxu0 0
    %3918 = vmatpush1.bf16.msra.mxu0 0
    %3919 = vmatprep.subr.bf16.mxu0 0
    %3920 = vmatpush1.bf16.msra.mxu0 0
    %3921 = vmatprep.subr.bf16.mxu0 0
    %3922 = vmatpush1.bf16.msra.mxu0 0
    %3923 = vmatprep.subr.bf16.mxu0 0
    %3924 = vmatpush1.bf16.msra.mxu0 0
    %3925 = vmatprep.subr.bf16.mxu0 0
    %3926 = vmatpush1.bf16.msra.mxu0 0
    %3927 = vmatprep.subr.bf16.mxu0 0
    %3928 = vmatpush1.bf16.msra.mxu0 0
    %3929 = vmatprep.subr.bf16.mxu0 0
    %3930 = vmatpush1.bf16.msra.mxu0 %v3914
    %3931 = vmatprep.subr.bf16.mxu0 0
    %3932 = vmatpush1.bf16.msra.mxu0 %v3913
    %3933 = vmatprep.subr.bf16.mxu0 0
    %3934 = vmatpush2.bf16.msra.mxu0 0
    %3935 = vmatprep.subr.bf16.mxu0 0
    %3936 = vmatpush2.bf16.msra.mxu0 0
    %3937 = vmatprep.subr.bf16.mxu0 0
    %3938 = vmatpush2.bf16.msra.mxu0 0
    %3939 = vmatprep.subr.bf16.mxu0 0
    %3940 = vmatpush2.bf16.msra.mxu0 0
    %3941 = vmatprep.subr.bf16.mxu0 0
    %3942 = vmatpush2.bf16.msra.mxu0 0
    %3943 = vmatprep.subr.bf16.mxu0 0
    %3944 = vmatpush2.bf16.msra.mxu0 0
    %3945 = vmatprep.subr.bf16.mxu0 0
    %3946 = vmatpush2.bf16.msra.mxu0 0
    %3947 = vmatprep.subr.bf16.mxu0 0
    %3948 = vmatpush2.bf16.msra.mxu0 0
    %3949 = vmatprep.mubr.bf16.mxu0 0
    %3950 = vmatmul.mubr.bf16.gmra.mxu0 %v2461
    %v3951 = vpop.f32.mrf.mxu0
    %v3952 = vadd.f32 %v3903, %v3951
    %v3953 = vpop.f32.mrf.mxu0
    %v3954 = vpop.f32.mrf.mxu0
    %v3955 = vadd.f32 %v3903, %v3954
    %v3956 = vpop.f32.mrf.mxu0
    %3957 = vdwg.mxu0
    %s3958 = scalar_lea.vmem %s4, 368
    %v3959 = vld [vmem:[%s3958] sm:$0xf]
    %v3960 = vld [vmem:[%s3958 + $0x4] sm:$0xf]
    %v3961 = vld [vmem:[%s3958 + $0x8] sm:$0xf]
    %v3962 = vld [vmem:[%s3958 + $0xc] sm:$0xf]
    %s3963 = scalar_lea.vmem %s5, 23
    %v3964 = vld [vmem:[%s3963] sm:$0x1]
    %v3966 = vlaneseq
    %v3967 = vshrl.u32 %v3966, 7
    %v3968 = vsub.s32 0, %v3967
    %v3969 = vrot.slane %v3964, %v3968
    %v3975 = vunpack.c.l.b16 %v3959
    %v3976 = vunpack.c.l.b16 %v3960
    %v3977 = vunpack.c.l.b16 %v3961
    %v3978 = vunpack.c.l.b16 %v3962
    %v3979 = vpack.c.b16 %v3976, %v3975
    %v3980 = vpack.c.b16 %v3978, %v3977
    %3983 = vmatprep.subr.bf16.mxu0 0
    %3984 = vmatpush1.bf16.msra.mxu0 0
    %3985 = vmatprep.subr.bf16.mxu0 0
    %3986 = vmatpush1.bf16.msra.mxu0 0
    %3987 = vmatprep.subr.bf16.mxu0 0
    %3988 = vmatpush1.bf16.msra.mxu0 0
    %3989 = vmatprep.subr.bf16.mxu0 0
    %3990 = vmatpush1.bf16.msra.mxu0 0
    %3991 = vmatprep.subr.bf16.mxu0 0
    %3992 = vmatpush1.bf16.msra.mxu0 0
    %3993 = vmatprep.subr.bf16.mxu0 0
    %3994 = vmatpush1.bf16.msra.mxu0 0
    %3995 = vmatprep.subr.bf16.mxu0 0
    %3996 = vmatpush1.bf16.msra.mxu0 %v3980
    %3997 = vmatprep.subr.bf16.mxu0 0
    %3998 = vmatpush1.bf16.msra.mxu0 %v3979
    %3999 = vmatprep.subr.bf16.mxu0 0
    %4000 = vmatpush2.bf16.msra.mxu0 0
    %4001 = vmatprep.subr.bf16.mxu0 0
    %4002 = vmatpush2.bf16.msra.mxu0 0
    %4003 = vmatprep.subr.bf16.mxu0 0
    %4004 = vmatpush2.bf16.msra.mxu0 0
    %4005 = vmatprep.subr.bf16.mxu0 0
    %4006 = vmatpush2.bf16.msra.mxu0 0
    %4007 = vmatprep.subr.bf16.mxu0 0
    %4008 = vmatpush2.bf16.msra.mxu0 0
    %4009 = vmatprep.subr.bf16.mxu0 0
    %4010 = vmatpush2.bf16.msra.mxu0 0
    %4011 = vmatprep.subr.bf16.mxu0 0
    %4012 = vmatpush2.bf16.msra.mxu0 0
    %4013 = vmatprep.subr.bf16.mxu0 0
    %4014 = vmatpush2.bf16.msra.mxu0 0
    %4015 = vmatprep.mubr.bf16.mxu0 0
    %4016 = vmatmul.mubr.bf16.gmra.mxu0 %v2461
    %v4017 = vpop.f32.mrf.mxu0
    %v4018 = vadd.f32 %v3969, %v4017
    %v4019 = vpop.f32.mrf.mxu0
    %v4020 = vpop.f32.mrf.mxu0
    %v4021 = vadd.f32 %v3969, %v4020
    %v4022 = vpop.f32.mrf.mxu0
    %4023 = vdwg.mxu0
    %v4024 = vpack.c.bf16 %v3886, %v3886
    %v4025 = vpack.c.bf16 %v3889, %v3889
    %v4026 = vpack.c.bf16 %v3952, %v3952
    %v4027 = vpack.c.bf16 %v3955, %v3955
    %v4029 = vsel %vm85, %v4024, 0
    %v4032 = vsel %vm85, %v4026, 0
    %4034 = vmatprep.subr.bf16.mxu0 0
    %4035 = vmatpush1.bf16.xpose.msra.mxu0 0
    %4036 = vmatprep.subr.bf16.mxu0 0
    %4037 = vmatpush1.bf16.xpose.msra.mxu0 0
    %4038 = vmatprep.subr.bf16.mxu0 0
    %4039 = vmatpush1.bf16.xpose.msra.mxu0 0
    %4040 = vmatprep.subr.bf16.mxu0 0
    %4041 = vmatpush1.bf16.xpose.msra.mxu0 0
    %4042 = vmatprep.subr.bf16.mxu0 0
    %4043 = vmatpush1.bf16.xpose.msra.mxu0 0
    %4044 = vmatprep.subr.bf16.mxu0 0
    %4045 = vmatpush1.bf16.xpose.msra.mxu0 0
    %4046 = vmatprep.subr.bf16.mxu0 0
    %4047 = vmatpush1.bf16.xpose.msra.mxu0 0
    %4048 = vmatprep.subr.bf16.mxu0 0
    %4049 = vmatpush1.bf16.xpose.msra.mxu0 %v4032
    %4050 = vmatprep.subr.bf16.mxu0 0
    %4051 = vmatpush2.bf16.xpose.msra.mxu0 0
    %4052 = vmatprep.subr.bf16.mxu0 0
    %4053 = vmatpush2.bf16.xpose.msra.mxu0 0
    %4054 = vmatprep.subr.bf16.mxu0 0
    %4055 = vmatpush2.bf16.xpose.msra.mxu0 0
    %4056 = vmatprep.subr.bf16.mxu0 0
    %4057 = vmatpush2.bf16.xpose.msra.mxu0 0
    %4058 = vmatprep.subr.bf16.mxu0 0
    %4059 = vmatpush2.bf16.xpose.msra.mxu0 0
    %4060 = vmatprep.subr.bf16.mxu0 0
    %4061 = vmatpush2.bf16.xpose.msra.mxu0 0
    %4062 = vmatprep.subr.bf16.mxu0 0
    %4063 = vmatpush2.bf16.xpose.msra.mxu0 0
    %4064 = vmatprep.subr.bf16.mxu0 0
    %4065 = vmatpush2.bf16.xpose.msra.mxu0 0
    %4066 = vmatprep.mubr.bf16.mxu0 0
    %4067 = vmatmul.mubr.bf16.gmra.mxu0 %v4029
    %v4068 = vpop.f32.mrf.mxu0
    %v4069 = vadd.f32 %v525, %v4068
    %v4070 = vpop.f32.mrf.mxu0
    %v4071 = vpop.f32.mrf.mxu0
    %v4072 = vpop.f32.mrf.mxu0
    %4073 = vdwg.mxu0
    %v4075 = vsel %vm85, %v4025, 0
    %v4078 = vsel %vm85, %v4027, 0
    %4080 = vmatprep.subr.bf16.mxu0 0
    %4081 = vmatpush1.bf16.xpose.msra.mxu0 0
    %4082 = vmatprep.subr.bf16.mxu0 0
    %4083 = vmatpush1.bf16.xpose.msra.mxu0 0
    %4084 = vmatprep.subr.bf16.mxu0 0
    %4085 = vmatpush1.bf16.xpose.msra.mxu0 0
    %4086 = vmatprep.subr.bf16.mxu0 0
    %4087 = vmatpush1.bf16.xpose.msra.mxu0 0
    %4088 = vmatprep.subr.bf16.mxu0 0
    %4089 = vmatpush1.bf16.xpose.msra.mxu0 0
    %4090 = vmatprep.subr.bf16.mxu0 0
    %4091 = vmatpush1.bf16.xpose.msra.mxu0 0
    %4092 = vmatprep.subr.bf16.mxu0 0
    %4093 = vmatpush1.bf16.xpose.msra.mxu0 0
    %4094 = vmatprep.subr.bf16.mxu0 0
    %4095 = vmatpush1.bf16.xpose.msra.mxu0 %v4078
    %4096 = vmatprep.subr.bf16.mxu0 0
    %4097 = vmatpush2.bf16.xpose.msra.mxu0 0
    %4098 = vmatprep.subr.bf16.mxu0 0
    %4099 = vmatpush2.bf16.xpose.msra.mxu0 0
    %4100 = vmatprep.subr.bf16.mxu0 0
    %4101 = vmatpush2.bf16.xpose.msra.mxu0 0
    %4102 = vmatprep.subr.bf16.mxu0 0
    %4103 = vmatpush2.bf16.xpose.msra.mxu0 0
    %4104 = vmatprep.subr.bf16.mxu0 0
    %4105 = vmatpush2.bf16.xpose.msra.mxu0 0
    %4106 = vmatprep.subr.bf16.mxu0 0
    %4107 = vmatpush2.bf16.xpose.msra.mxu0 0
    %4108 = vmatprep.subr.bf16.mxu0 0
    %4109 = vmatpush2.bf16.xpose.msra.mxu0 0
    %4110 = vmatprep.subr.bf16.mxu0 0
    %4111 = vmatpush2.bf16.xpose.msra.mxu0 0
    %4112 = vmatprep.mubr.bf16.mxu0 0
    %4113 = vmatmul.mubr.bf16.gmra.mxu0 %v4075
    %v4114 = vpop.f32.mrf.mxu0
    %v4115 = vadd.f32 %v529, %v4114
    %v4116 = vpop.f32.mrf.mxu0
    %v4117 = vpop.f32.mrf.mxu0
    %v4118 = vpop.f32.mrf.mxu0
    %4119 = vdwg.mxu0
    %v4120 = vsel %vm85, %v4069, -inf
    %4121 = vmax.xlane.f32.xlu0 %v4120
    %v4122 = vpop.xlane.xlu0 %4121
    %v4123 = vsel %vm85, %v4115, -inf
    %4124 = vmax.xlane.f32.xlu0 %v4123
    %v4125 = vpop.xlane.xlu0 %4124
    %v4126 = vsub.f32 %v4069, %v4122
    %v4127 = vsub.f32 %v4115, %v4125
    %v4128 = vmul.f32 %v4126, 1.442695
    %v4129 = vpow.pop %v4128
    %v4130 = vmul.f32 %v4127, 1.442695
    %v4131 = vpow.pop %v4130
    %v4132 = vsel %vm85, %v4129, 0.0
    %4133 = vadd.xlane.f32.xlu0 %v4132
    %v4134 = vpop.xlane.xlu0 %4133
    %v4135 = vsel %vm85, %v4131, 0.0
    %4136 = vadd.xlane.f32.xlu0 %v4135
    %v4137 = vpop.xlane.xlu0 %4136
    %v4138 = vrcp.pop %v4134
    %v4139 = vrcp.pop %v4137
    %v4140 = vmul.f32 %v4129, %v4138
    %v4141 = vmul.f32 %v4131, %v4139
    %v4142 = vpack.c.bf16 %v4140, %v4140
    %v4143 = vpack.c.bf16 %v4141, %v4141
    %v4144 = vpack.c.bf16 %v4018, %v4018
    %v4145 = vpack.c.bf16 %v4021, %v4021
    %v4147 = vsel %vm85, %v4142, 0
    %v4150 = vsel %vm653, %v4144, 0
    %4152 = vmatprep.subr.bf16.mxu0 0
    %4153 = vmatpush1.bf16.msra.mxu0 0
    %4154 = vmatprep.subr.bf16.mxu0 0
    %4155 = vmatpush1.bf16.msra.mxu0 0
    %4156 = vmatprep.subr.bf16.mxu0 0
    %4157 = vmatpush1.bf16.msra.mxu0 0
    %4158 = vmatprep.subr.bf16.mxu0 0
    %4159 = vmatpush1.bf16.msra.mxu0 0
    %4160 = vmatprep.subr.bf16.mxu0 0
    %4161 = vmatpush1.bf16.msra.mxu0 0
    %4162 = vmatprep.subr.bf16.mxu0 0
    %4163 = vmatpush1.bf16.msra.mxu0 0
    %4164 = vmatprep.subr.bf16.mxu0 0
    %4165 = vmatpush1.bf16.msra.mxu0 0
    %4166 = vmatprep.subr.bf16.mxu0 0
    %4167 = vmatpush1.bf16.msra.mxu0 %v4150
    %4168 = vmatprep.subr.bf16.mxu0 0
    %4169 = vmatpush2.bf16.msra.mxu0 0
    %4170 = vmatprep.subr.bf16.mxu0 0
    %4171 = vmatpush2.bf16.msra.mxu0 0
    %4172 = vmatprep.subr.bf16.mxu0 0
    %4173 = vmatpush2.bf16.msra.mxu0 0
    %4174 = vmatprep.subr.bf16.mxu0 0
    %4175 = vmatpush2.bf16.msra.mxu0 0
    %4176 = vmatprep.subr.bf16.mxu0 0
    %4177 = vmatpush2.bf16.msra.mxu0 0
    %4178 = vmatprep.subr.bf16.mxu0 0
    %4179 = vmatpush2.bf16.msra.mxu0 0
    %4180 = vmatprep.subr.bf16.mxu0 0
    %4181 = vmatpush2.bf16.msra.mxu0 0
    %4182 = vmatprep.subr.bf16.mxu0 0
    %4183 = vmatpush2.bf16.msra.mxu0 0
    %4184 = vmatprep.mubr.bf16.mxu0 0
    %4185 = vmatmul.mubr.bf16.gmra.mxu0 %v4147
    %v4186 = vpop.f32.mrf.mxu0
    %v4187 = vadd.f32 0.0, %v4186
    %v4188 = vpop.f32.mrf.mxu0
    %v4189 = vpop.f32.mrf.mxu0
    %v4190 = vpop.f32.mrf.mxu0
    %4191 = vdwg.mxu0
    %v4193 = vsel %vm85, %v4143, 0
    %v4196 = vsel %vm653, %v4145, 0
    %4198 = vmatprep.subr.bf16.mxu0 0
    %4199 = vmatpush1.bf16.msra.mxu0 0
    %4200 = vmatprep.subr.bf16.mxu0 0
    %4201 = vmatpush1.bf16.msra.mxu0 0
    %4202 = vmatprep.subr.bf16.mxu0 0
    %4203 = vmatpush1.bf16.msra.mxu0 0
    %4204 = vmatprep.subr.bf16.mxu0 0
    %4205 = vmatpush1.bf16.msra.mxu0 0
    %4206 = vmatprep.subr.bf16.mxu0 0
    %4207 = vmatpush1.bf16.msra.mxu0 0
    %4208 = vmatprep.subr.bf16.mxu0 0
    %4209 = vmatpush1.bf16.msra.mxu0 0
    %4210 = vmatprep.subr.bf16.mxu0 0
    %4211 = vmatpush1.bf16.msra.mxu0 0
    %4212 = vmatprep.subr.bf16.mxu0 0
    %4213 = vmatpush1.bf16.msra.mxu0 %v4196
    %4214 = vmatprep.subr.bf16.mxu0 0
    %4215 = vmatpush2.bf16.msra.mxu0 0
    %4216 = vmatprep.subr.bf16.mxu0 0
    %4217 = vmatpush2.bf16.msra.mxu0 0
    %4218 = vmatprep.subr.bf16.mxu0 0
    %4219 = vmatpush2.bf16.msra.mxu0 0
    %4220 = vmatprep.subr.bf16.mxu0 0
    %4221 = vmatpush2.bf16.msra.mxu0 0
    %4222 = vmatprep.subr.bf16.mxu0 0
    %4223 = vmatpush2.bf16.msra.mxu0 0
    %4224 = vmatprep.subr.bf16.mxu0 0
    %4225 = vmatpush2.bf16.msra.mxu0 0
    %4226 = vmatprep.subr.bf16.mxu0 0
    %4227 = vmatpush2.bf16.msra.mxu0 0
    %4228 = vmatprep.subr.bf16.mxu0 0
    %4229 = vmatpush2.bf16.msra.mxu0 0
    %4230 = vmatprep.mubr.bf16.mxu0 0
    %4231 = vmatmul.mubr.bf16.gmra.mxu0 %v4193
    %v4232 = vpop.f32.mrf.mxu0
    %v4233 = vadd.f32 0.0, %v4232
    %v4234 = vpop.f32.mrf.mxu0
    %v4235 = vpop.f32.mrf.mxu0
    %v4236 = vpop.f32.mrf.mxu0
    %4237 = vdwg.mxu0
    %v4238 = vpack.c.bf16 %v4233, %v4187
    %s4239 = scalar_lea.vmem %s6, 28
    %v4240 = vld [vmem:[%s4239] sm:$0xf]
    %v4242 = vsel %vm85, %v4238, 0
    %v4245 = vsel %vm653, %v4240, 0
    %4247 = vmatprep.subr.bf16.mxu0 0
    %4248 = vmatpush1.bf16.msra.mxu0 0
    %4249 = vmatprep.subr.bf16.mxu0 0
    %4250 = vmatpush1.bf16.msra.mxu0 0
    %4251 = vmatprep.subr.bf16.mxu0 0
    %4252 = vmatpush1.bf16.msra.mxu0 0
    %4253 = vmatprep.subr.bf16.mxu0 0
    %4254 = vmatpush1.bf16.msra.mxu0 0
    %4255 = vmatprep.subr.bf16.mxu0 0
    %4256 = vmatpush1.bf16.msra.mxu0 0
    %4257 = vmatprep.subr.bf16.mxu0 0
    %4258 = vmatpush1.bf16.msra.mxu0 0
    %4259 = vmatprep.subr.bf16.mxu0 0
    %4260 = vmatpush1.bf16.msra.mxu0 0
    %4261 = vmatprep.subr.bf16.mxu0 0
    %4262 = vmatpush1.bf16.msra.mxu0 %v4245
    %4263 = vmatprep.subr.bf16.mxu0 0
    %4264 = vmatpush2.bf16.msra.mxu0 0
    %4265 = vmatprep.subr.bf16.mxu0 0
    %4266 = vmatpush2.bf16.msra.mxu0 0
    %4267 = vmatprep.subr.bf16.mxu0 0
    %4268 = vmatpush2.bf16.msra.mxu0 0
    %4269 = vmatprep.subr.bf16.mxu0 0
    %4270 = vmatpush2.bf16.msra.mxu0 0
    %4271 = vmatprep.subr.bf16.mxu0 0
    %4272 = vmatpush2.bf16.msra.mxu0 0
    %4273 = vmatprep.subr.bf16.mxu0 0
    %4274 = vmatpush2.bf16.msra.mxu0 0
    %4275 = vmatprep.subr.bf16.mxu0 0
    %4276 = vmatpush2.bf16.msra.mxu0 0
    %4277 = vmatprep.subr.bf16.mxu0 0
    %4278 = vmatpush2.bf16.msra.mxu0 0
    %4279 = vmatprep.mubr.bf16.mxu0 0
    %4280 = vmatmul.mubr.bf16.gmra.mxu0 %v4242
    %v4281 = vpop.f32.mrf.mxu0
    %v4282 = vadd.f32 0.0, %v4281
    %v4283 = vpop.f32.mrf.mxu0
    %v4284 = vpop.f32.mrf.mxu0
    %v4285 = vadd.f32 0.0, %v4284
    %v4286 = vpop.f32.mrf.mxu0
    %4287 = vdwg.mxu0
    %v4288 = vadd.f32 %v3824, %v4282
    %v4289 = vadd.f32 %v3825, %v4285
    %s4290 = scalar_lea.vmem %s7, 8
    %v4291 = vld [vmem:[%s4290] sm:$0x7f]
    %v4292 = vlaneseq
    %v4293 = vshrl.u32 %v4292, 7
    %v4294 = vsub.s32 0, %v4293
    %v4295 = vrot.slane %v4291, %v4294
    %v4296 = vadd.f32 %v4288, %v4295
    %v4297 = vadd.f32 %v4289, %v4295
    %v4298 = vadd.f32 %v4296, %v2432
    %v4299 = vadd.f32 %v4297, %v2433
    %v4300 = vsel %vm246, %v4298, 0.0
    %4301 = vadd.xlane.f32.xlu0 %v4300
    %v4302 = vpop.xlane.xlu0 %4301
    %v4303 = vsel %vm246, %v4299, 0.0
    %4304 = vadd.xlane.f32.xlu0 %v4303
    %v4305 = vpop.xlane.xlu0 %4304
    %v4306 = vmul.f32 %v4302, %v253
    %v4307 = vmul.f32 %v4305, %v253
    %v4308 = vsub.f32 %v4298, %v4306
    %v4309 = vsub.f32 %v4299, %v4307
    %v4310 = vmul.f32 %v4308, %v4308
    %v4311 = vmul.f32 %v4309, %v4309
    %v4312 = vsel %vm246, %v4310, 0.0
    %4313 = vadd.xlane.f32.xlu0 %v4312
    %v4314 = vpop.xlane.xlu0 %4313
    %v4315 = vsel %vm246, %v4311, 0.0
    %4316 = vadd.xlane.f32.xlu0 %v4315
    %v4317 = vpop.xlane.xlu0 %4316
    %v4318 = vmul.f32 %v4314, %v253
    %v4319 = vmul.f32 %v4317, %v253
    %v4320 = vadd.f32 %v4318, 1e-12
    %v4321 = vadd.f32 %v4319, 1e-12
    %v4322 = vrsqrt.pop %v4320
    %v4323 = vrsqrt.pop %v4321
    %v4324 = vmul.f32 %v4308, %v4322
    %v4325 = vmul.f32 %v4309, %v4323
    %v4326 = vlaneseq
    %v4327 = vshrl.u32 %v4326, 7
    %v4328 = vsub.s32 1, %v4327
    %v4329 = vrot.slane %v4291, %v4328
    %v4330 = vmul.f32 %v4324, %v4329
    %v4331 = vmul.f32 %v4325, %v4329
    %v4332 = vlaneseq
    %v4333 = vshrl.u32 %v4332, 7
    %v4334 = vsub.s32 2, %v4333
    %v4335 = vrot.slane %v4291, %v4334
    %v4336 = vadd.f32 %v4330, %v4335
    %v4337 = vadd.f32 %v4331, %v4335
    %v4338 = vpack.c.bf16 %v4337, %v4336
    %s4339 = scalar_lea.vmem %s8, 16
    %v4340 = vld [vmem:[%s4339] sm:$0xf]
    %v4341 = vld [vmem:[%s4339 + $0x4] sm:$0xf]
    %v4342 = vld [vmem:[%s4339 + $0x8] sm:$0xf]
    %v4343 = vld [vmem:[%s4339 + $0xc] sm:$0xf]
    %v4344 = vlaneseq
    %v4345 = vshrl.u32 %v4344, 7
    %v4346 = vsub.s32 3, %v4345
    %v4347 = vrot.slane %v4291, %v4346
    %v4352 = vunpack.c.l.b16 %v4340
    %v4353 = vunpack.c.l.b16 %v4341
    %v4354 = vunpack.c.l.b16 %v4342
    %v4355 = vunpack.c.l.b16 %v4343
    %v4356 = vpack.c.b16 %v4353, %v4352
    %v4357 = vpack.c.b16 %v4355, %v4354
    %v4361 = vsel %vm246, %v4338, 0
    %4363 = vmatprep.subr.bf16.mxu0 0
    %4364 = vmatpush1.bf16.msra.mxu0 0
    %4365 = vmatprep.subr.bf16.mxu0 0
    %4366 = vmatpush1.bf16.msra.mxu0 0
    %4367 = vmatprep.subr.bf16.mxu0 0
    %4368 = vmatpush1.bf16.msra.mxu0 0
    %4369 = vmatprep.subr.bf16.mxu0 0
    %4370 = vmatpush1.bf16.msra.mxu0 0
    %4371 = vmatprep.subr.bf16.mxu0 0
    %4372 = vmatpush1.bf16.msra.mxu0 0
    %4373 = vmatprep.subr.bf16.mxu0 0
    %4374 = vmatpush1.bf16.msra.mxu0 0
    %4375 = vmatprep.subr.bf16.mxu0 0
    %4376 = vmatpush1.bf16.msra.mxu0 %v4357
    %4377 = vmatprep.subr.bf16.mxu0 0
    %4378 = vmatpush1.bf16.msra.mxu0 %v4356
    %4379 = vmatprep.subr.bf16.mxu0 0
    %4380 = vmatpush2.bf16.msra.mxu0 0
    %4381 = vmatprep.subr.bf16.mxu0 0
    %4382 = vmatpush2.bf16.msra.mxu0 0
    %4383 = vmatprep.subr.bf16.mxu0 0
    %4384 = vmatpush2.bf16.msra.mxu0 0
    %4385 = vmatprep.subr.bf16.mxu0 0
    %4386 = vmatpush2.bf16.msra.mxu0 0
    %4387 = vmatprep.subr.bf16.mxu0 0
    %4388 = vmatpush2.bf16.msra.mxu0 0
    %4389 = vmatprep.subr.bf16.mxu0 0
    %4390 = vmatpush2.bf16.msra.mxu0 0
    %4391 = vmatprep.subr.bf16.mxu0 0
    %4392 = vmatpush2.bf16.msra.mxu0 0
    %4393 = vmatprep.subr.bf16.mxu0 0
    %4394 = vmatpush2.bf16.msra.mxu0 0
    %4395 = vmatprep.mubr.bf16.mxu0 0
    %4396 = vmatmul.mubr.bf16.gmra.mxu0 %v4361
    %v4397 = vpop.f32.mrf.mxu0
    %v4398 = vadd.f32 %v4347, %v4397
    %v4399 = vpop.f32.mrf.mxu0
    %v4400 = vpop.f32.mrf.mxu0
    %v4401 = vadd.f32 %v4347, %v4400
    %v4402 = vpop.f32.mrf.mxu0
    %4403 = vdwg.mxu0
    %v4404 = vmul.f32 %v4398, 0.5
    %v4405 = vmul.f32 %v4401, 0.5
    %v4406 = vmul.f32 %v4398, 0.044715
    %v4407 = vmul.f32 %v4401, 0.044715
    %v4408 = vmul.f32 %v4406, %v4398
    %v4409 = vmul.f32 %v4407, %v4401
    %v4410 = vmul.f32 %v4408, %v4398
    %v4411 = vmul.f32 %v4409, %v4401
    %v4412 = vadd.f32 %v4398, %v4410
    %v4413 = vadd.f32 %v4401, %v4411
    %v4414 = vmul.f32 %v4412, 0.7978846
    %v4415 = vmul.f32 %v4413, 0.7978846
    %v4416 = vtanh.pop %v4414
    %v4417 = vtanh.pop %v4415
    %v4418 = vadd.f32 %v4416, 1.0
    %v4419 = vadd.f32 %v4417, 1.0
    %v4420 = vmul.f32 %v4404, %v4418
    %v4421 = vmul.f32 %v4405, %v4419
    %v4422 = vpack.c.bf16 %v4421, %v4420
    %s4423 = scalar_lea.vmem %s9, 32
    %v4424 = vld [vmem:[%s4423] sm:$0xf]
    %v4425 = vld [vmem:[%s4423 + $0x4] sm:$0xf]
    %v4426 = vld [vmem:[%s4423 + $0x8] sm:$0xf]
    %v4427 = vld [vmem:[%s4423 + $0xc] sm:$0xf]
    %v4428 = vld [vmem:[%s4423 + $0x10] sm:$0xf]
    %v4429 = vld [vmem:[%s4423 + $0x14] sm:$0xf]
    %v4430 = vld [vmem:[%s4423 + $0x18] sm:$0xf]
    %v4431 = vld [vmem:[%s4423 + $0x1c] sm:$0xf]
    %v4432 = vlaneseq
    %v4433 = vshrl.u32 %v4432, 7
    %v4434 = vsub.s32 4, %v4433
    %v4435 = vrot.slane %v4291, %v4434
    %v4444 = vunpack.c.l.b16 %v4424
    %v4445 = vunpack.c.l.b16 %v4425
    %v4446 = vunpack.c.l.b16 %v4426
    %v4447 = vunpack.c.l.b16 %v4427
    %v4448 = vunpack.c.l.b16 %v4428
    %v4449 = vunpack.c.l.b16 %v4429
    %v4450 = vunpack.c.l.b16 %v4430
    %v4451 = vunpack.c.l.b16 %v4431
    %v4452 = vpack.c.b16 %v4445, %v4444
    %v4453 = vpack.c.b16 %v4447, %v4446
    %v4454 = vpack.c.b16 %v4449, %v4448
    %v4455 = vpack.c.b16 %v4451, %v4450
    %v4461 = vsel %vm2349, %v4422, 0
    %4463 = vmatprep.subr.bf16.mxu0 0
    %4464 = vmatpush1.bf16.msra.mxu0 0
    %4465 = vmatprep.subr.bf16.mxu0 0
    %4466 = vmatpush1.bf16.msra.mxu0 0
    %4467 = vmatprep.subr.bf16.mxu0 0
    %4468 = vmatpush1.bf16.msra.mxu0 0
    %4469 = vmatprep.subr.bf16.mxu0 0
    %4470 = vmatpush1.bf16.msra.mxu0 0
    %4471 = vmatprep.subr.bf16.mxu0 0
    %4472 = vmatpush1.bf16.msra.mxu0 %v4455
    %4473 = vmatprep.subr.bf16.mxu0 0
    %4474 = vmatpush1.bf16.msra.mxu0 %v4454
    %4475 = vmatprep.subr.bf16.mxu0 0
    %4476 = vmatpush1.bf16.msra.mxu0 %v4453
    %4477 = vmatprep.subr.bf16.mxu0 0
    %4478 = vmatpush1.bf16.msra.mxu0 %v4452
    %4479 = vmatprep.subr.bf16.mxu0 0
    %4480 = vmatpush2.bf16.msra.mxu0 0
    %4481 = vmatprep.subr.bf16.mxu0 0
    %4482 = vmatpush2.bf16.msra.mxu0 0
    %4483 = vmatprep.subr.bf16.mxu0 0
    %4484 = vmatpush2.bf16.msra.mxu0 0
    %4485 = vmatprep.subr.bf16.mxu0 0
    %4486 = vmatpush2.bf16.msra.mxu0 0
    %4487 = vmatprep.subr.bf16.mxu0 0
    %4488 = vmatpush2.bf16.msra.mxu0 0
    %4489 = vmatprep.subr.bf16.mxu0 0
    %4490 = vmatpush2.bf16.msra.mxu0 0
    %4491 = vmatprep.subr.bf16.mxu0 0
    %4492 = vmatpush2.bf16.msra.mxu0 0
    %4493 = vmatprep.subr.bf16.mxu0 0
    %4494 = vmatpush2.bf16.msra.mxu0 0
    %4495 = vmatprep.mubr.bf16.mxu0 0
    %4496 = vmatmul.mubr.bf16.gmra.mxu0 %v4461
    %v4497 = vpop.f32.mrf.mxu0
    %v4498 = vadd.f32 %v4435, %v4497
    %v4499 = vpop.f32.mrf.mxu0
    %v4500 = vpop.f32.mrf.mxu0
    %v4501 = vadd.f32 %v4435, %v4500
    %v4502 = vpop.f32.mrf.mxu0
    %4503 = vdwg.mxu0
    %v4504 = vadd.f32 %v4498, %v4336
    %v4505 = vadd.f32 %v4501, %v4337
    %v4506 = vsel %vm246, %v4504, 0.0
    %4507 = vadd.xlane.f32.xlu0 %v4506
    %v4508 = vpop.xlane.xlu0 %4507
    %v4509 = vsel %vm246, %v4505, 0.0
    %4510 = vadd.xlane.f32.xlu0 %v4509
    %v4511 = vpop.xlane.xlu0 %4510
    %v4512 = vmul.f32 %v4508, %v253
    %v4513 = vmul.f32 %v4511, %v253
    %v4514 = vsub.f32 %v4504, %v4512
    %v4515 = vsub.f32 %v4505, %v4513
    %v4516 = vmul.f32 %v4514, %v4514
    %v4517 = vmul.f32 %v4515, %v4515
    %v4518 = vsel %vm246, %v4516, 0.0
    %4519 = vadd.xlane.f32.xlu0 %v4518
    %v4520 = vpop.xlane.xlu0 %4519
    %v4521 = vsel %vm246, %v4517, 0.0
    %4522 = vadd.xlane.f32.xlu0 %v4521
    %v4523 = vpop.xlane.xlu0 %4522
    %v4524 = vmul.f32 %v4520, %v253
    %v4525 = vmul.f32 %v4523, %v253
    %v4526 = vadd.f32 %v4524, 1e-12
    %v4527 = vadd.f32 %v4525, 1e-12
    %v4528 = vrsqrt.pop %v4526
    %v4529 = vrsqrt.pop %v4527
    %v4530 = vmul.f32 %v4514, %v4528
    %v4531 = vmul.f32 %v4515, %v4529
    %v4532 = vlaneseq
    %v4533 = vshrl.u32 %v4532, 7
    %v4534 = vsub.s32 5, %v4533
    %v4535 = vrot.slane %v4291, %v4534
    %v4536 = vmul.f32 %v4530, %v4535
    %v4537 = vmul.f32 %v4531, %v4535
    %v4538 = vlaneseq
    %v4539 = vshrl.u32 %v4538, 7
    %v4540 = vsub.s32 6, %v4539
    %v4541 = vrot.slane %v4291, %v4540
    %v4542 = vadd.f32 %v4536, %v4541
    %v4543 = vadd.f32 %v4537, %v4541
    %v4544 = vpack.c.bf16 %v4542, %v4542
    %v4545 = vpack.c.bf16 %v4543, %v4543
    %v4546 = vld [vmem:[%s10] sm:$0xf]
    %v4547 = vld [vmem:[%s10 + $0x4] sm:$0xf]
    %v4548 = vld [vmem:[%s10 + $0x8] sm:$0xf]
    %v4549 = vld [vmem:[%s10 + $0xc] sm:$0xf]
    %v4550 = vlaneseq
    %v4551 = vshrl.u32 %v4550, 7
    %v4552 = vsub.s32 2, %v4551
    %v4553 = vrot.slane %v40, %v4552
    %v4556 = vunpack.c.l.b16 %v4544
    %v4557 = vunpack.c.l.b16 %v4545
    %v4558 = vrot.slane %v4557, 7
    %vm4559 = vcmask 1041409
    %v4560 = vsel %vm4559, %v4558, %v4556
    %v4561 = vpack.c.b16 %v4560, %v4560
    %v4566 = vunpack.c.l.b16 %v4546
    %v4567 = vunpack.c.l.b16 %v4547
    %v4568 = vunpack.c.l.b16 %v4548
    %v4569 = vunpack.c.l.b16 %v4549
    %v4570 = vpack.c.b16 %v4567, %v4566
    %v4571 = vpack.c.b16 %v4569, %v4568
    %v4575 = vsel %vm246, %v4561, 0
    %4577 = vmatprep.subr.bf16.mxu0 0
    %4578 = vmatpush1.bf16.msra.mxu0 0
    %4579 = vmatprep.subr.bf16.mxu0 0
    %4580 = vmatpush1.bf16.msra.mxu0 0
    %4581 = vmatprep.subr.bf16.mxu0 0
    %4582 = vmatpush1.bf16.msra.mxu0 0
    %4583 = vmatprep.subr.bf16.mxu0 0
    %4584 = vmatpush1.bf16.msra.mxu0 0
    %4585 = vmatprep.subr.bf16.mxu0 0
    %4586 = vmatpush1.bf16.msra.mxu0 0
    %4587 = vmatprep.subr.bf16.mxu0 0
    %4588 = vmatpush1.bf16.msra.mxu0 0
    %4589 = vmatprep.subr.bf16.mxu0 0
    %4590 = vmatpush1.bf16.msra.mxu0 %v4571
    %4591 = vmatprep.subr.bf16.mxu0 0
    %4592 = vmatpush1.bf16.msra.mxu0 %v4570
    %4593 = vmatprep.subr.bf16.mxu0 0
    %4594 = vmatpush2.bf16.msra.mxu0 0
    %4595 = vmatprep.subr.bf16.mxu0 0
    %4596 = vmatpush2.bf16.msra.mxu0 0
    %4597 = vmatprep.subr.bf16.mxu0 0
    %4598 = vmatpush2.bf16.msra.mxu0 0
    %4599 = vmatprep.subr.bf16.mxu0 0
    %4600 = vmatpush2.bf16.msra.mxu0 0
    %4601 = vmatprep.subr.bf16.mxu0 0
    %4602 = vmatpush2.bf16.msra.mxu0 0
    %4603 = vmatprep.subr.bf16.mxu0 0
    %4604 = vmatpush2.bf16.msra.mxu0 0
    %4605 = vmatprep.subr.bf16.mxu0 0
    %4606 = vmatpush2.bf16.msra.mxu0 0
    %4607 = vmatprep.subr.bf16.mxu0 0
    %4608 = vmatpush2.bf16.msra.mxu0 0
    %4609 = vmatprep.mubr.bf16.mxu0 0
    %4610 = vmatmul.mubr.bf16.gmra.mxu0 %v4575
    %v4611 = vpop.f32.mrf.mxu0
    %v4612 = vadd.f32 %v4553, %v4611
    %v4613 = vpop.f32.mrf.mxu0
    %v4614 = vpop.f32.mrf.mxu0
    %v4615 = vpop.f32.mrf.mxu0
    %4616 = vdwg.mxu0
    %v4617 = vtanh.pop %v4612
    %v4618 = vpack.c.bf16 %v4617, %v4617
    %s4619 = scalar_lea.vmem %s10, 16
    %v4620 = vld [vmem:[%s4619] sm:$0xf]
    %v4621 = vld [vmem:[%s4619 + $0x4] sm:$0xf]
    %v4622 = vld [vmem:[%s4619 + $0x8] sm:$0xf]
    %v4623 = vld [vmem:[%s4619 + $0xc] sm:$0xf]
    %v4624 = vlaneseq
    %v4625 = vshrl.u32 %v4624, 7
    %v4626 = vsub.s32 3, %v4625
    %v4627 = vrot.slane %v40, %v4626
    %v4632 = vunpack.c.l.b16 %v4620
    %v4633 = vunpack.c.l.b16 %v4621
    %v4634 = vunpack.c.l.b16 %v4622
    %v4635 = vunpack.c.l.b16 %v4623
    %v4636 = vpack.c.b16 %v4633, %v4632
    %v4637 = vpack.c.b16 %v4635, %v4634
    %v4641 = vsel %vm246, %v4618, 0
    %4643 = vmatprep.subr.bf16.mxu0 0
    %4644 = vmatpush1.bf16.msra.mxu0 0
    %4645 = vmatprep.subr.bf16.mxu0 0
    %4646 = vmatpush1.bf16.msra.mxu0 0
    %4647 = vmatprep.subr.bf16.mxu0 0
    %4648 = vmatpush1.bf16.msra.mxu0 0
    %4649 = vmatprep.subr.bf16.mxu0 0
    %4650 = vmatpush1.bf16.msra.mxu0 0
    %4651 = vmatprep.subr.bf16.mxu0 0
    %4652 = vmatpush1.bf16.msra.mxu0 0
    %4653 = vmatprep.subr.bf16.mxu0 0
    %4654 = vmatpush1.bf16.msra.mxu0 0
    %4655 = vmatprep.subr.bf16.mxu0 0
    %4656 = vmatpush1.bf16.msra.mxu0 %v4637
    %4657 = vmatprep.subr.bf16.mxu0 0
    %4658 = vmatpush1.bf16.msra.mxu0 %v4636
    %4659 = vmatprep.subr.bf16.mxu0 0
    %4660 = vmatpush2.bf16.msra.mxu0 0
    %4661 = vmatprep.subr.bf16.mxu0 0
    %4662 = vmatpush2.bf16.msra.mxu0 0
    %4663 = vmatprep.subr.bf16.mxu0 0
    %4664 = vmatpush2.bf16.msra.mxu0 0
    %4665 = vmatprep.subr.bf16.mxu0 0
    %4666 = vmatpush2.bf16.msra.mxu0 0
    %4667 = vmatprep.subr.bf16.mxu0 0
    %4668 = vmatpush2.bf16.msra.mxu0 0
    %4669 = vmatprep.subr.bf16.mxu0 0
    %4670 = vmatpush2.bf16.msra.mxu0 0
    %4671 = vmatprep.subr.bf16.mxu0 0
    %4672 = vmatpush2.bf16.msra.mxu0 0
    %4673 = vmatprep.subr.bf16.mxu0 0
    %4674 = vmatpush2.bf16.msra.mxu0 0
    %4675 = vmatprep.mubr.bf16.mxu0 0
    %4676 = vmatmul.mubr.bf16.gmra.mxu0 %v4641
    %v4677 = vpop.f32.mrf.mxu0
    %v4678 = vadd.f32 %v4627, %v4677
    %v4679 = vpop.f32.mrf.mxu0
    %v4680 = vpop.f32.mrf.mxu0
    %v4681 = vpop.f32.mrf.mxu0
    %4682 = vdwg.mxu0
    %v4683 = vsub.f32 0.0, %v4678
    %v4684 = vmul.f32 %v4683, 1.442695
    %v4685 = vpow.pop %v4684
    %v4686 = vadd.f32 %v4685, 1.0
    %v4687 = vrcp.pop %v4686
    %v4688 = vmul.f32 1.0, %v4687
    %vm4689 = vcmask 17408
    %4690 = vst.msk [vmem:[#allocation2] sm:$0x3] %vm4689, %v4688
    // Predicated region
    $region46: #{forward.1} parent=1 // pred_check
      _
    $region47: #{forward.1} parent=1 // pred_check_branch
      %4692 = sbr.rel (0) target = $region49
    $region48: #{forward.1} parent=1 // pred_region
      %s4694 = ssub.s32 32, 32
      %4695 = vsyncadd [#allocation3], %s4694
      %s4697 = sshll.u32 [#allocation2], 4
      %s4698 = int_to_ptr.vmem [resolvable:$true] %s4697
      %4700 = dma.vmem_to_hbm [thread:$0]  %s4698, 32, %s11, [#allocation3]
    $region49: #{forward.1} parent=1 // pred_fallthru
      _
    // Predicated region
    $region50: #{forward.1} parent=1 // pred_check
      _
    $region51: #{forward.1} parent=1 // pred_check_branch
      %4702 = sbr.rel (0) target = $region53
    $region52: #{forward.1} parent=1 // pred_region
      %4703 = dma.done [#allocation3], 32
    $region53: #{forward.1} parent=1 // pred_fallthru
      _
    %4704 = vsyncpa [#allocation3], 1

</llo_original>
